<compile_context>
chip_gen: v7x
topology: tpu7x:2x2x1
jax: 0.10.0
libtpu: 0.0.40
codegen_flags: <defaults>
</compile_context>

<pallas_src>
import jax
import jax.numpy as jnp
from jax.experimental import pallas as pl
from jax.experimental.pallas import tpu as pltpu

C_IN = 320        # fusion conv input channels (fixed by the module)
C_RED = 20        # SE reduction 320 // 16
C_FUSE = 512      # fusion conv output channels
C_UP = 128        # conv inside `up`
C_REC_IN = 32     # after second PixelShuffle(2)
C_REC_OUT = 3     # final RGB output
C_REC_PAD = 8     # MXU-side padding of the 3 output channels

VMEM_LIMIT = 32 * 1024 * 1024   # safe on v5e (128M), v6e (128M) and v7x (64M)


def _round_up(v, m):
    return ((v + m - 1) // m) * m


def _row_tile(h):
    # 8 output rows per band keeps every tile a few hundred KB at real
    # resolutions while M = 8 * padded_width stays >= 128 for the MXU.
    return 8 if h % 8 == 0 else h


def _m_tile(hw):
    for cand in (512, 256, 128, 64, 32, 16, 8):
        if hw % cand == 0:
            return cand
    return hw


# ------------------- kernel 1: (1+A)*x -> 1x1 fusion conv -> ReLU -------------
def _fusion_kernel(x_ref, s_ref, w_ref, o_ref):
    x = x_ref[0]                                   # (TM, 320) bf16
    s = s_ref[0]                                   # (1, 320)  f32  == 1 + A
    xr = (x * s).astype(jnp.bfloat16)              # A*x + x folded into one scale
    y = jnp.dot(xr, w_ref[...], preferred_element_type=jnp.float32)
    o_ref[0] = jnp.maximum(y, 0.0).astype(o_ref.dtype)


def fusion_matmul(x3, scale, w_fuse):
    N, HW, C = x3.shape
    TM = _m_tile(HW)
    return pl.pallas_call(
        _fusion_kernel,
        out_shape=jax.ShapeDtypeStruct((N, HW, C_FUSE), jnp.bfloat16),
        grid=(N, HW // TM),
        in_specs=[
            pl.BlockSpec((1, TM, C), lambda n, m: (n, m, 0)),
            pl.BlockSpec((1, 1, C), lambda n, m: (n, 0, 0)),
            pl.BlockSpec((C, C_FUSE), lambda n, m: (0, 0)),
        ],
        out_specs=pl.BlockSpec((1, TM, C_FUSE), lambda n, m: (n, m, 0)),
        compiler_params=pltpu.CompilerParams(
            dimension_semantics=("parallel", "parallel"),
            vmem_limit_bytes=VMEM_LIMIT),
    )(x3, scale, w_fuse)


# ------------- kernel 2: 3x3 conv 128->128 + PReLU (channels-last) ------------
def _make_up_kernel(Wp, M, Lcat, C):
    def kernel(x_ref, w_ref, b_ref, alpha_ref, o_ref, cat_ref, acc_ref):
        xb = x_ref[0, 0]                                   # (Lb, C) bf16 band
        # im2col over dx into VMEM scratch -> K = 3*C, only 3 shifted copies.
        for dx in range(3):
            cat_ref[:, dx * C:(dx + 1) * C] = xb[dx:dx + Lcat, :]
        # dy taps are 16-aligned row views of the scratch -> 3 wide matmuls.
        acc_ref[...] = jnp.dot(cat_ref[0:M, :], w_ref[0],
                               preferred_element_type=jnp.float32)
        for dy in (1, 2):
            acc_ref[...] += jnp.dot(cat_ref[dy * Wp:dy * Wp + M, :], w_ref[dy],
                                    preferred_element_type=jnp.float32)
        y = acc_ref[...] + b_ref[...]
        alpha = alpha_ref[0]
        y = jnp.where(y > 0, y, alpha * y)                 # PReLU
        o_ref[0] = y.astype(o_ref.dtype)
    return kernel


def conv3x3_up(u, w_cat, b, alpha):
    N, H2, W2, C = u.shape
    TH = _row_tile(H2)
    Wp = _round_up(W2 + 2, 16)          # padded width, sublane aligned for bf16
    nt = H2 // TH
    M = TH * Wp                         # rows per output tile (incl. garbage cols)
    Lcat = (TH + 2) * Wp
    Lb = Lcat + 16                      # input band rows (+ slack for dx taps)
    xp = jnp.pad(u, ((0, 0), (1, 1), (1, Wp - W2 - 1), (0, 0)))
    xf = jnp.pad(xp.reshape(N, (H2 + 2) * Wp, C), ((0, 0), (0, 16), (0, 0)))
    # Overlapping row bands (halo) so the grid tiles are disjoint BlockSpecs.
    bands = jnp.stack([xf[:, t * M:t * M + Lb] for t in range(nt)], axis=1)
    out = pl.pallas_call(
        _make_up_kernel(Wp, M, Lcat, C),
        out_shape=jax.ShapeDtypeStruct((N, H2 * Wp, C), jnp.bfloat16),
        grid=(N, nt),
        in_specs=[
            pl.BlockSpec((1, 1, Lb, C), lambda n, t: (n, t, 0, 0)),
            pl.BlockSpec((3, 3 * C, C), lambda n, t: (0, 0, 0)),
            pl.BlockSpec((1, C), lambda n, t: (0, 0)),
            pl.BlockSpec(memory_space=pltpu.MemorySpace.SMEM),   # PReLU alpha
        ],
        out_specs=pl.BlockSpec((1, M, C), lambda n, t: (n, t, 0)),
        scratch_shapes=[pltpu.VMEM((Lcat, 3 * C), jnp.bfloat16),
                        pltpu.VMEM((M, C), jnp.float32)],
        compiler_params=pltpu.CompilerParams(
            dimension_semantics=("parallel", "parallel"),
            vmem_limit_bytes=VMEM_LIMIT),
    )(bands, w_cat, b, alpha)
    return out.reshape(N, H2, Wp, C)[:, :, :W2, :]


# -------- kernel 3: 3x3 conv 32->3 + ReLU, channels-first, lane-dense out -----
def _make_rec_kernel(Wp, M, Ci):
    def kernel(x_ref, w_ref, b_ref, o_ref, cat_ref):
        xb = x_ref[0, 0]                                   # (Ci, Lb) bf16 band
        k = 0
        for dy in range(3):                                # full im2col: K = 9*Ci
            for dx in range(3):
                s = dy * Wp + dx
                cat_ref[k * Ci:(k + 1) * Ci, :] = xb[:, s:s + M]
                k += 1
        y = jnp.dot(w_ref[...], cat_ref[...],
                    preferred_element_type=jnp.float32)    # (8, M)
        y = jnp.maximum(y + b_ref[...], 0.0)
        # Only the 3 real channel planes are stored, lane-dense (last dim = M).
        o_ref[0] = y[0:C_REC_OUT, :].astype(o_ref.dtype)
    return kernel


def conv3x3_rec(x_cf, w_all, b):
    N, Ci, H4, W4 = x_cf.shape
    TH = _row_tile(H4)
    Wp = _round_up(W4 + 2, 16)
    nt = H4 // TH
    M = TH * Wp
    Lb = (TH + 2) * Wp + 16
    xp = jnp.pad(x_cf, ((0, 0), (0, 0), (1, 1), (1, Wp - W4 - 1)))
    xf = jnp.pad(xp.reshape(N, Ci, (H4 + 2) * Wp), ((0, 0), (0, 0), (0, 16)))
    bands = jnp.stack([xf[:, :, t * M:t * M + Lb] for t in range(nt)], axis=1)
    out = pl.pallas_call(
        _make_rec_kernel(Wp, M, Ci),
        out_shape=jax.ShapeDtypeStruct((N, C_REC_OUT, H4 * Wp), jnp.float32),
        grid=(N, nt),
        in_specs=[
            pl.BlockSpec((1, 1, Ci, Lb), lambda n, t: (n, t, 0, 0)),
            pl.BlockSpec((C_REC_PAD, 9 * Ci), lambda n, t: (0, 0)),
            pl.BlockSpec((C_REC_PAD, 1), lambda n, t: (0, 0)),
        ],
        out_specs=pl.BlockSpec((1, C_REC_OUT, M), lambda n, t: (n, 0, t)),
        scratch_shapes=[pltpu.VMEM((9 * Ci, M), jnp.bfloat16)],
        compiler_params=pltpu.CompilerParams(
            dimension_semantics=("parallel", "parallel"),
            vmem_limit_bytes=VMEM_LIMIT),
    )(bands, w_all, b)
    return out.reshape(N, C_REC_OUT, H4, Wp)[..., :W4]     # already NCHW


# --------------------------------- glue ---------------------------------------
def pixel_shuffle_nhwc(x, r):
    # torch.nn.PixelShuffle semantics (channel index = c*r*r + i*r + j)
    N, H, W, C = x.shape
    Co = C // (r * r)
    x = x.reshape(N, H, W, Co, r, r).transpose(0, 1, 4, 2, 5, 3)
    return x.reshape(N, H * r, W * r, Co)


def pixel_shuffle_nhwc_to_nchw(x, r):
    N, H, W, C = x.shape
    Co = C // (r * r)
    x = x.reshape(N, H, W, Co, r, r).transpose(0, 3, 1, 4, 2, 5)
    return x.reshape(N, Co, H * r, W * r)


def init_params(key):
    ks = jax.random.split(key, 10)
    p = {}
    p["w_ca1"] = jax.random.normal(ks[0], (C_IN, C_RED), jnp.float32) / (C_IN ** 0.5)
    p["b_ca1"] = jax.random.normal(ks[1], (C_RED,), jnp.float32) * 0.01
    p["w_ca2"] = jax.random.normal(ks[2], (C_RED, C_IN), jnp.float32) / (C_RED ** 0.5)
    p["b_ca2"] = jax.random.normal(ks[3], (C_IN,), jnp.float32) * 0.01
    p["w_fuse"] = jax.random.normal(ks[4], (C_IN, C_FUSE), jnp.float32) / (C_IN ** 0.5)
    p["w_up"] = jax.random.normal(ks[5], (3, 3, C_UP, C_UP), jnp.float32) / ((9 * C_UP) ** 0.5)
    p["b_up"] = jax.random.normal(ks[6], (C_UP,), jnp.float32) * 0.01
    p["w_rec"] = jax.random.normal(ks[7], (3, 3, C_REC_IN, C_REC_OUT), jnp.float32) / ((9 * C_REC_IN) ** 0.5)
    p["b_rec"] = jax.random.normal(ks[8], (C_REC_OUT,), jnp.float32) * 0.01
    p["alpha"] = jnp.array([0.25], jnp.float32)      # nn.PReLU() default init
    return p


@jax.jit
def reconstruction_forward(x_nchw, p):
    N, C, H, W = x_nchw.shape
    # ---- channel attention (SE): tiny, plain JAX (review item 1) ----
    mean = jnp.mean(x_nchw, axis=(2, 3))
    y = jax.nn.relu(mean @ p["w_ca1"] + p["b_ca1"])
    a = jax.nn.sigmoid(y @ p["w_ca2"] + p["b_ca2"])
    scale = (1.0 + a).reshape(N, 1, C)                    # A*x + x == (1+A)*x
    # ---- fusion: 1x1 conv 320->512 + ReLU (Pallas, HW tiled, bf16) ----
    x3 = x_nchw.transpose(0, 2, 3, 1).reshape(N, H * W, C).astype(jnp.bfloat16)
    f = fusion_matmul(x3, scale, p["w_fuse"].astype(jnp.bfloat16))
    u = pixel_shuffle_nhwc(f.reshape(N, H, W, C_FUSE), 2)          # (N,2H,2W,128)
    # ---- up: 3x3 conv 128->128 + PReLU (Pallas, row-band tiled) ----
    w_up_cat = p["w_up"].reshape(3, 3 * C_UP, C_UP).astype(jnp.bfloat16)
    c = conv3x3_up(u, w_up_cat, p["b_up"].reshape(1, C_UP), p["alpha"])
    # ---- reconstruction: 3x3 conv 32->3 + ReLU, lane-dense NCHW output ----
    u2 = pixel_shuffle_nhwc_to_nchw(c, 2)                          # (N,32,4H,4W)
    w_rec_all = jnp.pad(
        p["w_rec"].transpose(3, 0, 1, 2).reshape(C_REC_OUT, 9 * C_REC_IN),
        ((0, C_REC_PAD - C_REC_OUT), (0, 0))).astype(jnp.bfloat16)
    b_rec = jnp.pad(p["b_rec"], (0, C_REC_PAD - C_REC_OUT)).reshape(C_REC_PAD, 1)
    return conv3x3_rec(u2, w_rec_all, b_rec)                       # (N,3,4H,4W)


# ----------------------------- pure-JAX reference ------------------------------
# Mirrors the kernel's bf16 rounding points so only f32-accumulation order
# differs, which lets the tolerance stay tight.
@jax.jit
def reference_forward(x_nchw, p):
    N, C, H, W = x_nchw.shape
    mean = jnp.mean(x_nchw, axis=(2, 3))
    y = jax.nn.relu(mean @ p["w_ca1"] + p["b_ca1"])
    a = jax.nn.sigmoid(y @ p["w_ca2"] + p["b_ca2"])
    s = 1.0 + a
    xh = x_nchw.transpose(0, 2, 3, 1).astype(jnp.bfloat16)
    xr = (xh * s[:, None, None, :]).astype(jnp.bfloat16)
    f = jnp.einsum("nhwc,cd->nhwd", xr, p["w_fuse"].astype(jnp.bfloat16),
                   preferred_element_type=jnp.float32)
    f = jax.nn.relu(f).astype(jnp.bfloat16)
    u = pixel_shuffle_nhwc(f, 2)
    c = jax.lax.conv_general_dilated(
        u, p["w_up"].astype(jnp.bfloat16), (1, 1), ((1, 1), (1, 1)),
        dimension_numbers=("NHWC", "HWIO", "NHWC"),
        preferred_element_type=jnp.float32)
    c = c + p["b_up"][None, None, None, :]
    c = jnp.where(c > 0, c, p["alpha"][0] * c).astype(jnp.bfloat16)
    u2 = pixel_shuffle_nhwc(c, 2)
    r = jax.lax.conv_general_dilated(
        u2, p["w_rec"].astype(jnp.bfloat16), (1, 1), ((1, 1), (1, 1)),
        dimension_numbers=("NHWC", "HWIO", "NHWC"),
        preferred_element_type=jnp.float32)
    r = jax.nn.relu(r + p["b_rec"][None, None, None, :])
    return r.transpose(0, 3, 1, 2)


if __name__ == "__main__":
    key = jax.random.PRNGKey(0)
    kx, kp = jax.random.split(key)
    N, H, W = 2, 8, 8
    x = jax.random.normal(kx, (N, C_IN, H, W), jnp.float32)
    params = init_params(kp)

    out = jax.block_until_ready(reconstruction_forward(x, params))
    assert out.shape == (N, C_REC_OUT, 4 * H, 4 * W), out.shape

    ref = jax.block_until_ready(reference_forward(x, params))
    err = float(jnp.max(jnp.abs(out - ref)))
    if not (bool(jnp.all(jnp.isfinite(out))) and err < 2e-2):
        raise SystemExit(f"mismatch vs reference: max abs err = {err}")
    print("KERNEL_OK")
</pallas_src>

<mosaic_0001>
module attributes {stable_mosaic.version = 11 : i64} {
  func.func @_fusion_kernel(%arg0: i32, %arg1: i32, %arg2: memref<1x64x320xbf16, #tpu.memory_space<vmem>>, %arg3: memref<1x1x320xf32, #tpu.memory_space<vmem>>, %arg4: memref<320x512xbf16, #tpu.memory_space<vmem>>, %arg5: memref<1x64x512xbf16, #tpu.memory_space<vmem>>) attributes {dimension_semantics = [#tpu.dimension_semantics<parallel>, #tpu.dimension_semantics<parallel>], iteration_bounds = array<i64: 2, 1>, scalar_prefetch = 0 : i64, scratch_operands = 0 : i64, tpu.core_type = #tpu.core_type<tc>, window_params = [{transform_indices = @transform_0, window_bounds = array<i64: 1, 64, 320>}, {transform_indices = @transform_1, window_bounds = array<i64: 1, 1, 320>}, {pipeline_mode = #tpu.pipeline_mode<synchronous>, transform_indices = @transform_2, window_bounds = array<i64: 320, 512>}, {transform_indices = @transform_3, window_bounds = array<i64: 1, 64, 512>}]} {
    %c0 = arith.constant 0 : index
    %c0_0 = arith.constant 0 : index
    %c0_1 = arith.constant 0 : index
    %0 = vector.load %arg2[%c0, %c0_0, %c0_1] : memref<1x64x320xbf16, #tpu.memory_space<vmem>>, vector<1x64x320xbf16>
    %1 = vector.shape_cast %0 : vector<1x64x320xbf16> to vector<64x320xbf16>
    %c0_2 = arith.constant 0 : index
    %c0_3 = arith.constant 0 : index
    %c0_4 = arith.constant 0 : index
    %2 = vector.load %arg3[%c0_2, %c0_3, %c0_4] : memref<1x1x320xf32, #tpu.memory_space<vmem>>, vector<1x1x320xf32>
    %3 = vector.shape_cast %2 : vector<1x1x320xf32> to vector<1x320xf32>
    %4 = arith.extf %1 : vector<64x320xbf16> to vector<64x320xf32>
    %5 = vector.broadcast %3 : vector<1x320xf32> to vector<64x320xf32>
    %6 = arith.mulf %4, %5 : vector<64x320xf32>
    %7 = arith.truncf %6 : vector<64x320xf32> to vector<64x320xbf16>
    %c0_5 = arith.constant 0 : index
    %c0_6 = arith.constant 0 : index
    %8 = vector.load %arg4[%c0_5, %c0_6] : memref<320x512xbf16, #tpu.memory_space<vmem>>, vector<320x512xbf16>
    %cst = arith.constant dense<0.000000e+00> : vector<64x512xf32>
    %9 = tpu.matmul %7, %8, %cst {dimension_numbers = #tpu.dot_dimension_numbers<[1], [0], [0], [1], [0, 0, 1, 1], [], []>} : vector<64x320xbf16>, vector<320x512xbf16>, vector<64x512xf32> -> vector<64x512xf32>
    %cst_7 = arith.constant 0.000000e+00 : f32
    %10 = vector.broadcast %cst_7 : f32 to vector<64x512xf32>
    %11 = arith.maximumf %9, %10 : vector<64x512xf32>
    %12 = arith.truncf %11 : vector<64x512xf32> to vector<64x512xbf16>
    %c0_8 = arith.constant 0 : index
    %c0_9 = arith.constant 0 : index
    %c0_10 = arith.constant 0 : index
    %13 = vector.load %arg5[%c0_8, %c0_9, %c0_10] : memref<1x64x512xbf16, #tpu.memory_space<vmem>>, vector<1x64x512xbf16>
    %14 = vector.shape_cast %13 : vector<1x64x512xbf16> to vector<64x512xbf16>
    %15 = vector.shape_cast %12 : vector<64x512xbf16> to vector<1x64x512xbf16>
    tpu.vector_store %arg5[%c0_8, %c0_9, %c0_10], %15 {strides = array<i32>} : memref<1x64x512xbf16, #tpu.memory_space<vmem>>, vector<1x64x512xbf16>,
    return
  }
  func.func @transform_0(%arg0: i32, %arg1: i32) -> (i32, i32, i32) {
    %c0_i32 = arith.constant 0 : i32
    %c0_i32_0 = arith.constant 0 : i32
    return %arg0, %arg1, %c0_i32 : i32, i32, i32
  }
  func.func @transform_1(%arg0: i32, %arg1: i32) -> (i32, i32, i32) {
    %c0_i32 = arith.constant 0 : i32
    %c0_i32_0 = arith.constant 0 : i32
    %c0_i32_1 = arith.constant 0 : i32
    return %arg0, %c0_i32, %c0_i32_0 : i32, i32, i32
  }
  func.func @transform_2(%arg0: i32, %arg1: i32) -> (i32, i32) {
    %c0_i32 = arith.constant 0 : i32
    %c0_i32_0 = arith.constant 0 : i32
    %c0_i32_1 = arith.constant 0 : i32
    return %c0_i32, %c0_i32_0 : i32, i32
  }
  func.func @transform_3(%arg0: i32, %arg1: i32) -> (i32, i32, i32) {
    %c0_i32 = arith.constant 0 : i32
    %c0_i32_0 = arith.constant 0 : i32
    return %arg0, %arg1, %c0_i32 : i32, i32, i32
  }
}

module attributes {stable_mosaic.version = 11 : i64} {
  func.func @kernel(%arg0: i32, %arg1: i32, %arg2: memref<1x1x336x128xbf16, #tpu.memory_space<vmem>>, %arg3: memref<3x384x128xbf16, #tpu.memory_space<vmem>>, %arg4: memref<1x128xf32, #tpu.memory_space<vmem>>, %arg5: memref<1xf32, #tpu.memory_space<smem>>, %arg6: memref<1x256x128xbf16, #tpu.memory_space<vmem>>, %arg7: memref<320x384xbf16, #tpu.memory_space<vmem>>, %arg8: memref<256x128xf32, #tpu.memory_space<vmem>>) attributes {dimension_semantics = [#tpu.dimension_semantics<parallel>, #tpu.dimension_semantics<parallel>], iteration_bounds = array<i64: 2, 2>, scalar_prefetch = 0 : i64, scratch_operands = 2 : i64, tpu.core_type = #tpu.core_type<tc>, window_params = [{transform_indices = @transform_0, window_bounds = array<i64: 1, 1, 336, 128>}, {pipeline_mode = #tpu.pipeline_mode<synchronous>, transform_indices = @transform_1, window_bounds = array<i64: 3, 384, 128>}, {pipeline_mode = #tpu.pipeline_mode<synchronous>, transform_indices = @transform_2, window_bounds = array<i64: 1, 128>}, {transform_indices = @transform_3, window_bounds = array<i64: 1>}, {transform_indices = @transform_4, window_bounds = array<i64: 1, 256, 128>}]} {
    %c0 = arith.constant 0 : index
    %c0_0 = arith.constant 0 : index
    %c0_1 = arith.constant 0 : index
    %c0_2 = arith.constant 0 : index
    %0 = vector.load %arg2[%c0, %c0_0, %c0_1, %c0_2] : memref<1x1x336x128xbf16, #tpu.memory_space<vmem>>, vector<1x1x336x128xbf16>
    %1 = vector.shape_cast %0 : vector<1x1x336x128xbf16> to vector<336x128xbf16>
    %2 = vector.extract_strided_slice %1 {offsets = [0, 0], sizes = [320, 128], strides = [1, 1]} : vector<336x128xbf16> to vector<320x128xbf16>
    %c0_3 = arith.constant 0 : index
    %c0_4 = arith.constant 0 : index
    %3 = vector.load %arg7[%c0_3, %c0_4] : memref<320x384xbf16, #tpu.memory_space<vmem>>, vector<320x128xbf16>
    tpu.vector_store %arg7[%c0_3, %c0_4], %2 {strides = array<i32>} : memref<320x384xbf16, #tpu.memory_space<vmem>>, vector<320x128xbf16>,
    %4 = vector.extract_strided_slice %1 {offsets = [1, 0], sizes = [320, 128], strides = [1, 1]} : vector<336x128xbf16> to vector<320x128xbf16>
    %c0_5 = arith.constant 0 : index
    %c128 = arith.constant 128 : index
    %5 = vector.load %arg7[%c0_5, %c128] : memref<320x384xbf16, #tpu.memory_space<vmem>>, vector<320x128xbf16>
    tpu.vector_store %arg7[%c0_5, %c128], %4 {strides = array<i32>} : memref<320x384xbf16, #tpu.memory_space<vmem>>, vector<320x128xbf16>,
    %6 = vector.extract_strided_slice %1 {offsets = [2, 0], sizes = [320, 128], strides = [1, 1]} : vector<336x128xbf16> to vector<320x128xbf16>
    %c0_6 = arith.constant 0 : index
    %c256 = arith.constant 256 : index
    %7 = vector.load %arg7[%c0_6, %c256] : memref<320x384xbf16, #tpu.memory_space<vmem>>, vector<320x128xbf16>
    tpu.vector_store %arg7[%c0_6, %c256], %6 {strides = array<i32>} : memref<320x384xbf16, #tpu.memory_space<vmem>>, vector<320x128xbf16>,
    %c0_7 = arith.constant 0 : index
    %c0_8 = arith.constant 0 : index
    %8 = vector.load %arg7[%c0_7, %c0_8] : memref<320x384xbf16, #tpu.memory_space<vmem>>, vector<256x384xbf16>
    %c0_9 = arith.constant 0 : index
    %c0_10 = arith.constant 0 : index
    %c0_11 = arith.constant 0 : index
    %9 = vector.load %arg3[%c0_9, %c0_10, %c0_11] : memref<3x384x128xbf16, #tpu.memory_space<vmem>>, vector<1x384x128xbf16>
    %10 = vector.shape_cast %9 : vector<1x384x128xbf16> to vector<384x128xbf16>
    %cst = arith.constant dense<0.000000e+00> : vector<256x128xf32>
    %11 = tpu.matmul %8, %10, %cst {dimension_numbers = #tpu.dot_dimension_numbers<[1], [0], [0], [1], [0, 0, 1, 1], [], []>} : vector<256x384xbf16>, vector<384x128xbf16>, vector<256x128xf32> -> vector<256x128xf32>
    %c0_12 = arith.constant 0 : index
    %c0_13 = arith.constant 0 : index
    %12 = vector.load %arg8[%c0_12, %c0_13] : memref<256x128xf32, #tpu.memory_space<vmem>>, vector<256x128xf32>
    tpu.vector_store %arg8[%c0_12, %c0_13], %11 {strides = array<i32>} : memref<256x128xf32, #tpu.memory_space<vmem>>, vector<256x128xf32>,
    %c0_14 = arith.constant 0 : index
    %c0_15 = arith.constant 0 : index
    %13 = vector.load %arg8[%c0_14, %c0_15] : memref<256x128xf32, #tpu.memory_space<vmem>>, vector<256x128xf32>
    %c32 = arith.constant 32 : index
    %c0_16 = arith.constant 0 : index
    %14 = vector.load %arg7[%c32, %c0_16] : memref<320x384xbf16, #tpu.memory_space<vmem>>, vector<256x384xbf16>
    %c1 = arith.constant 1 : index
    %c0_17 = arith.constant 0 : index
    %c0_18 = arith.constant 0 : index
    %15 = vector.load %arg3[%c1, %c0_17, %c0_18] : memref<3x384x128xbf16, #tpu.memory_space<vmem>>, vector<1x384x128xbf16>
    %16 = vector.shape_cast %15 : vector<1x384x128xbf16> to vector<384x128xbf16>
    %cst_19 = arith.constant dense<0.000000e+00> : vector<256x128xf32>
    %17 = tpu.matmul %14, %16, %cst_19 {dimension_numbers = #tpu.dot_dimension_numbers<[1], [0], [0], [1], [0, 0, 1, 1], [], []>} : vector<256x384xbf16>, vector<384x128xbf16>, vector<256x128xf32> -> vector<256x128xf32>
    %18 = arith.addf %13, %17 : vector<256x128xf32>
    %c0_20 = arith.constant 0 : index
    %c0_21 = arith.constant 0 : index
    %19 = vector.load %arg8[%c0_20, %c0_21] : memref<256x128xf32, #tpu.memory_space<vmem>>, vector<256x128xf32>
    tpu.vector_store %arg8[%c0_20, %c0_21], %18 {strides = array<i32>} : memref<256x128xf32, #tpu.memory_space<vmem>>, vector<256x128xf32>,
    %c0_22 = arith.constant 0 : index
    %c0_23 = arith.constant 0 : index
    %20 = vector.load %arg8[%c0_22, %c0_23] : memref<256x128xf32, #tpu.memory_space<vmem>>, vector<256x128xf32>
    %c64 = arith.constant 64 : index
    %c0_24 = arith.constant 0 : index
    %21 = vector.load %arg7[%c64, %c0_24] : memref<320x384xbf16, #tpu.memory_space<vmem>>, vector<256x384xbf16>
    %c2 = arith.constant 2 : index
    %c0_25 = arith.constant 0 : index
    %c0_26 = arith.constant 0 : index
    %22 = vector.load %arg3[%c2, %c0_25, %c0_26] : memref<3x384x128xbf16, #tpu.memory_space<vmem>>, vector<1x384x128xbf16>
    %23 = vector.shape_cast %22 : vector<1x384x128xbf16> to vector<384x128xbf16>
    %cst_27 = arith.constant dense<0.000000e+00> : vector<256x128xf32>
    %24 = tpu.matmul %21, %23, %cst_27 {dimension_numbers = #tpu.dot_dimension_numbers<[1], [0], [0], [1], [0, 0, 1, 1], [], []>} : vector<256x384xbf16>, vector<384x128xbf16>, vector<256x128xf32> -> vector<256x128xf32>
    %25 = arith.addf %20, %24 : vector<256x128xf32>
    %c0_28 = arith.constant 0 : index
    %c0_29 = arith.constant 0 : index
    %26 = vector.load %arg8[%c0_28, %c0_29] : memref<256x128xf32, #tpu.memory_space<vmem>>, vector<256x128xf32>
    tpu.vector_store %arg8[%c0_28, %c0_29], %25 {strides = array<i32>} : memref<256x128xf32, #tpu.memory_space<vmem>>, vector<256x128xf32>,
    %c0_30 = arith.constant 0 : index
    %c0_31 = arith.constant 0 : index
    %27 = vector.load %arg8[%c0_30, %c0_31] : memref<256x128xf32, #tpu.memory_space<vmem>>, vector<256x128xf32>
    %c0_32 = arith.constant 0 : index
    %c0_33 = arith.constant 0 : index
    %28 = vector.load %arg4[%c0_32, %c0_33] : memref<1x128xf32, #tpu.memory_space<vmem>>, vector<1x128xf32>
    %29 = vector.broadcast %28 : vector<1x128xf32> to vector<256x128xf32>
    %30 = arith.addf %27, %29 : vector<256x128xf32>
    %c0_34 = arith.constant 0 : index
    %31 = memref.load %arg5[%c0_34] : memref<1xf32, #tpu.memory_space<smem>>
    %cst_35 = arith.constant 0.000000e+00 : f32
    %32 = vector.broadcast %cst_35 : f32 to vector<256x128xf32>
    %33 = arith.cmpf ogt, %30, %32 : vector<256x128xf32>
    %34 = vector.broadcast %31 : f32 to vector<256x128xf32>
    %35 = arith.mulf %34, %30 : vector<256x128xf32>
    %36 = arith.select %33, %30, %35 : vector<256x128xi1>, vector<256x128xf32>
    %37 = arith.truncf %36 : vector<256x128xf32> to vector<256x128xbf16>
    %c0_36 = arith.constant 0 : index
    %c0_37 = arith.constant 0 : index
    %c0_38 = arith.constant 0 : index
    %38 = vector.load %arg6[%c0_36, %c0_37, %c0_38] : memref<1x256x128xbf16, #tpu.memory_space<vmem>>, vector<1x256x128xbf16>
    %39 = vector.shape_cast %38 : vector<1x256x128xbf16> to vector<256x128xbf16>
    %40 = vector.shape_cast %37 : vector<256x128xbf16> to vector<1x256x128xbf16>
    tpu.vector_store %arg6[%c0_36, %c0_37, %c0_38], %40 {strides = array<i32>} : memref<1x256x128xbf16, #tpu.memory_space<vmem>>, vector<1x256x128xbf16>,
    return
  }
  func.func @transform_0(%arg0: i32, %arg1: i32) -> (i32, i32, i32, i32) {
    %c0_i32 = arith.constant 0 : i32
    %c0_i32_0 = arith.constant 0 : i32
    %c0_i32_1 = arith.constant 0 : i32
    return %arg0, %arg1, %c0_i32, %c0_i32_0 : i32, i32, i32, i32
  }
  func.func @transform_1(%arg0: i32, %arg1: i32) -> (i32, i32, i32) {
    %c0_i32 = arith.constant 0 : i32
    %c0_i32_0 = arith.constant 0 : i32
    %c0_i32_1 = arith.constant 0 : i32
    %c0_i32_2 = arith.constant 0 : i32
    return %c0_i32, %c0_i32_0, %c0_i32_1 : i32, i32, i32
  }
  func.func @transform_2(%arg0: i32, %arg1: i32) -> (i32, i32) {
    %c0_i32 = arith.constant 0 : i32
    %c0_i32_0 = arith.constant 0 : i32
    %c0_i32_1 = arith.constant 0 : i32
    return %c0_i32, %c0_i32_0 : i32, i32
  }
  func.func @transform_3(%arg0: i32, %arg1: i32) -> i32 {
    %c0_i32 = arith.constant 0 : i32
    %c0_i32_0 = arith.constant 0 : i32
    return %c0_i32 : i32
  }
  func.func @transform_4(%arg0: i32, %arg1: i32) -> (i32, i32, i32) {
    %c0_i32 = arith.constant 0 : i32
    %c0_i32_0 = arith.constant 0 : i32
    return %arg0, %arg1, %c0_i32 : i32, i32, i32
  }
}

module attributes {stable_mosaic.version = 11 : i64} {
  func.func @kernel(%arg0: i32, %arg1: i32, %arg2: memref<1x1x32x496xbf16, #tpu.memory_space<vmem>>, %arg3: memref<8x288xbf16, #tpu.memory_space<vmem>>, %arg4: memref<8x1xf32, #tpu.memory_space<vmem>>, %arg5: memref<1x3x384xf32, #tpu.memory_space<vmem>>, %arg6: memref<288x384xbf16, #tpu.memory_space<vmem>>) attributes {dimension_semantics = [#tpu.dimension_semantics<parallel>, #tpu.dimension_semantics<parallel>], iteration_bounds = array<i64: 2, 4>, scalar_prefetch = 0 : i64, scratch_operands = 1 : i64, tpu.core_type = #tpu.core_type<tc>, window_params = [{transform_indices = @transform_0, window_bounds = array<i64: 1, 1, 32, 496>}, {pipeline_mode = #tpu.pipeline_mode<synchronous>, transform_indices = @transform_1, window_bounds = array<i64: 8, 288>}, {pipeline_mode = #tpu.pipeline_mode<synchronous>, transform_indices = @transform_2, window_bounds = array<i64: 8, 1>}, {transform_indices = @transform_3, window_bounds = array<i64: 1, 3, 384>}]} {
    %c0 = arith.constant 0 : index
    %c0_0 = arith.constant 0 : index
    %c0_1 = arith.constant 0 : index
    %c0_2 = arith.constant 0 : index
    %0 = vector.load %arg2[%c0, %c0_0, %c0_1, %c0_2] : memref<1x1x32x496xbf16, #tpu.memory_space<vmem>>, vector<1x1x32x496xbf16>
    %1 = vector.shape_cast %0 : vector<1x1x32x496xbf16> to vector<32x496xbf16>
    %2 = vector.extract_strided_slice %1 {offsets = [0, 0], sizes = [32, 384], strides = [1, 1]} : vector<32x496xbf16> to vector<32x384xbf16>
    %c0_3 = arith.constant 0 : index
    %c0_4 = arith.constant 0 : index
    %3 = vector.load %arg6[%c0_3, %c0_4] : memref<288x384xbf16, #tpu.memory_space<vmem>>, vector<32x384xbf16>
    tpu.vector_store %arg6[%c0_3, %c0_4], %2 {strides = array<i32>} : memref<288x384xbf16, #tpu.memory_space<vmem>>, vector<32x384xbf16>,
    %4 = vector.extract_strided_slice %1 {offsets = [0, 1], sizes = [32, 384], strides = [1, 1]} : vector<32x496xbf16> to vector<32x384xbf16>
    %c32 = arith.constant 32 : index
    %c0_5 = arith.constant 0 : index
    %5 = vector.load %arg6[%c32, %c0_5] : memref<288x384xbf16, #tpu.memory_space<vmem>>, vector<32x384xbf16>
    tpu.vector_store %arg6[%c32, %c0_5], %4 {strides = array<i32>} : memref<288x384xbf16, #tpu.memory_space<vmem>>, vector<32x384xbf16>,
    %6 = vector.extract_strided_slice %1 {offsets = [0, 2], sizes = [32, 384], strides = [1, 1]} : vector<32x496xbf16> to vector<32x384xbf16>
    %c64 = arith.constant 64 : index
    %c0_6 = arith.constant 0 : index
    %7 = vector.load %arg6[%c64, %c0_6] : memref<288x384xbf16, #tpu.memory_space<vmem>>, vector<32x384xbf16>
    tpu.vector_store %arg6[%c64, %c0_6], %6 {strides = array<i32>} : memref<288x384xbf16, #tpu.memory_space<vmem>>, vector<32x384xbf16>,
    %8 = vector.extract_strided_slice %1 {offsets = [0, 48], sizes = [32, 384], strides = [1, 1]} : vector<32x496xbf16> to vector<32x384xbf16>
    %c96 = arith.constant 96 : index
    %c0_7 = arith.constant 0 : index
    %9 = vector.load %arg6[%c96, %c0_7] : memref<288x384xbf16, #tpu.memory_space<vmem>>, vector<32x384xbf16>
    tpu.vector_store %arg6[%c96, %c0_7], %8 {strides = array<i32>} : memref<288x384xbf16, #tpu.memory_space<vmem>>, vector<32x384xbf16>,
    %10 = vector.extract_strided_slice %1 {offsets = [0, 49], sizes = [32, 384], strides = [1, 1]} : vector<32x496xbf16> to vector<32x384xbf16>
    %c128 = arith.constant 128 : index
    %c0_8 = arith.constant 0 : index
    %11 = vector.load %arg6[%c128, %c0_8] : memref<288x384xbf16, #tpu.memory_space<vmem>>, vector<32x384xbf16>
    tpu.vector_store %arg6[%c128, %c0_8], %10 {strides = array<i32>} : memref<288x384xbf16, #tpu.memory_space<vmem>>, vector<32x384xbf16>,
    %12 = vector.extract_strided_slice %1 {offsets = [0, 50], sizes = [32, 384], strides = [1, 1]} : vector<32x496xbf16> to vector<32x384xbf16>
    %c160 = arith.constant 160 : index
    %c0_9 = arith.constant 0 : index
    %13 = vector.load %arg6[%c160, %c0_9] : memref<288x384xbf16, #tpu.memory_space<vmem>>, vector<32x384xbf16>
    tpu.vector_store %arg6[%c160, %c0_9], %12 {strides = array<i32>} : memref<288x384xbf16, #tpu.memory_space<vmem>>, vector<32x384xbf16>,
    %14 = vector.extract_strided_slice %1 {offsets = [0, 96], sizes = [32, 384], strides = [1, 1]} : vector<32x496xbf16> to vector<32x384xbf16>
    %c192 = arith.constant 192 : index
    %c0_10 = arith.constant 0 : index
    %15 = vector.load %arg6[%c192, %c0_10] : memref<288x384xbf16, #tpu.memory_space<vmem>>, vector<32x384xbf16>
    tpu.vector_store %arg6[%c192, %c0_10], %14 {strides = array<i32>} : memref<288x384xbf16, #tpu.memory_space<vmem>>, vector<32x384xbf16>,
    %16 = vector.extract_strided_slice %1 {offsets = [0, 97], sizes = [32, 384], strides = [1, 1]} : vector<32x496xbf16> to vector<32x384xbf16>
    %c224 = arith.constant 224 : index
    %c0_11 = arith.constant 0 : index
    %17 = vector.load %arg6[%c224, %c0_11] : memref<288x384xbf16, #tpu.memory_space<vmem>>, vector<32x384xbf16>
    tpu.vector_store %arg6[%c224, %c0_11], %16 {strides = array<i32>} : memref<288x384xbf16, #tpu.memory_space<vmem>>, vector<32x384xbf16>,
    %18 = vector.extract_strided_slice %1 {offsets = [0, 98], sizes = [32, 384], strides = [1, 1]} : vector<32x496xbf16> to vector<32x384xbf16>
    %c256 = arith.constant 256 : index
    %c0_12 = arith.constant 0 : index
    %19 = vector.load %arg6[%c256, %c0_12] : memref<288x384xbf16, #tpu.memory_space<vmem>>, vector<32x384xbf16>
    tpu.vector_store %arg6[%c256, %c0_12], %18 {strides = array<i32>} : memref<288x384xbf16, #tpu.memory_space<vmem>>, vector<32x384xbf16>,
    %c0_13 = arith.constant 0 : index
    %c0_14 = arith.constant 0 : index
    %20 = vector.load %arg3[%c0_13, %c0_14] : memref<8x288xbf16, #tpu.memory_space<vmem>>, vector<8x288xbf16>
    %c0_15 = arith.constant 0 : index
    %c0_16 = arith.constant 0 : index
    %21 = vector.load %arg6[%c0_15, %c0_16] : memref<288x384xbf16, #tpu.memory_space<vmem>>, vector<288x384xbf16>
    %cst = arith.constant dense<0.000000e+00> : vector<8x384xf32>
    %22 = tpu.matmul %20, %21, %cst {dimension_numbers = #tpu.dot_dimension_numbers<[1], [0], [0], [1], [0, 0, 1, 1], [], []>} : vector<8x288xbf16>, vector<288x384xbf16>, vector<8x384xf32> -> vector<8x384xf32>
    %c0_17 = arith.constant 0 : index
    %c0_18 = arith.constant 0 : index
    %23 = vector.load %arg4[%c0_17, %c0_18] : memref<8x1xf32, #tpu.memory_space<vmem>>, vector<8x1xf32>
    %24 = vector.broadcast %23 : vector<8x1xf32> to vector<8x384xf32>
    %25 = arith.addf %22, %24 : vector<8x384xf32>
    %cst_19 = arith.constant 0.000000e+00 : f32
    %26 = vector.broadcast %cst_19 : f32 to vector<8x384xf32>
    %27 = arith.maximumf %25, %26 : vector<8x384xf32>
    %28 = vector.extract_strided_slice %27 {offsets = [0, 0], sizes = [3, 384], strides = [1, 1]} : vector<8x384xf32> to vector<3x384xf32>
    %c0_20 = arith.constant 0 : index
    %c0_21 = arith.constant 0 : index
    %c0_22 = arith.constant 0 : index
    %29 = vector.load %arg5[%c0_20, %c0_21, %c0_22] : memref<1x3x384xf32, #tpu.memory_space<vmem>>, vector<1x3x384xf32>
    %30 = vector.shape_cast %29 : vector<1x3x384xf32> to vector<3x384xf32>
    %31 = vector.shape_cast %28 : vector<3x384xf32> to vector<1x3x384xf32>
    tpu.vector_store %arg5[%c0_20, %c0_21, %c0_22], %31 {strides = array<i32>} : memref<1x3x384xf32, #tpu.memory_space<vmem>>, vector<1x3x384xf32>,
    return
  }
  func.func @transform_0(%arg0: i32, %arg1: i32) -> (i32, i32, i32, i32) {
    %c0_i32 = arith.constant 0 : i32
    %c0_i32_0 = arith.constant 0 : i32
    %c0_i32_1 = arith.constant 0 : i32
    return %arg0, %arg1, %c0_i32, %c0_i32_0 : i32, i32, i32, i32
  }
  func.func @transform_1(%arg0: i32, %arg1: i32) -> (i32, i32) {
    %c0_i32 = arith.constant 0 : i32
    %c0_i32_0 = arith.constant 0 : i32
    %c0_i32_1 = arith.constant 0 : i32
    return %c0_i32, %c0_i32_0 : i32, i32
  }
  func.func @transform_2(%arg0: i32, %arg1: i32) -> (i32, i32) {
    %c0_i32 = arith.constant 0 : i32
    %c0_i32_0 = arith.constant 0 : i32
    %c0_i32_1 = arith.constant 0 : i32
    return %c0_i32, %c0_i32_0 : i32, i32
  }
  func.func @transform_3(%arg0: i32, %arg1: i32) -> (i32, i32, i32) {
    %c0_i32 = arith.constant 0 : i32
    %c0_i32_0 = arith.constant 0 : i32
    return %arg0, %c0_i32, %arg1 : i32, i32, i32
  }
}

</mosaic_0001>

<llo_original>
// kernel: reconstruction_forward.3
$region0: #{reconstruction_forward.3}
  #allocation0 [shape = 'u32[]', space=smem, size = 0x4, offset = 0x4, fixed_abs, tag = 'smem constant byte address 0x4 - core index']
  #allocation1 [shape = 'u32[144,128]{1,0:T(1,128)}', space=vmem, size = 0x12000, scoped, tag = 'internal scratch']
  %s0 = inlined_call_operand.vmem [shape: bf16[2,64,320], index: 0, kind: input, shape index: {}]
  %s1 = inlined_call_operand.vmem [shape: f32[2,1,320], index: 1, kind: input, shape index: {}]
  %s2 = inlined_call_operand.vmem [shape: bf16[320,512], index: 2, kind: input, shape index: {}]
  %s3 = inlined_call_operand.vmem [shape: bf16[2,64,512], index: 3, kind: output, shape index: {}]
  %s4 = sld [smem:[#allocation0]]
  $region45: #{reconstruction_forward.3} parent=0
    _
  %s6 = ssub.s32 1, %s4
  %s7 = scalar_select 0, %s6, %s4
  loop: start=0, step=1, limit=4
  $region2: #{reconstruction_forward.3} parent=0 // loop_pre_header
    _
  $region3: #{reconstruction_forward.3} parent=0 // loop_header
    %s9 = sphi 0, %s13
    %p10 = scmp.ge.s32.totalorder %s9, 4
    %s16 = sphi 0, %s28
    %s17 = sphi 0, %s24
    %s18 = sphi 0, %s16
    %s19 = sphi 0, %s17
    %s20 = sphi 0, %s18
    %s21 = sphi 0, %s19
    %s33 = sphi 0, %s35
    %s36 = sphi 0, %s33
    %s37 = sphi 0, %s36
    %s53 = sphi 0, %s37
    %s59 = sphi 0, %s61
    %s62 = sphi 0, %s59
    %s63 = sphi 0, %s62
    %s79 = sphi 0, %s63
    %s83 = sphi 0, %s83
    %s85 = sphi 0, %s83
    %s86 = sphi 0, %s85
    %s100 = sphi 0, %s86
    %s108 = sphi 0, %s110
    %s111 = sphi 0, %s108
    %s112 = sphi 0, %s111
    %s128 = sphi 0, %s112
  $region4: #{reconstruction_forward.3} parent=0 // loop_header_branch
    %12 = sbr.rel (%p10) target = $region8
  $region5: #{reconstruction_forward.3} parent=0 // loop_body
    %s14 = ssub.s32 %s9, 1
    %s15 = ssub.s32 %s9, 2
    %s22 = sadd.s32 1, %s17
    %p23 = scmp.ge.s32.totalorder %s22, 1
    %s24 = scalar_select %p23, 0, %s22
    %s25 = sadd.s32 1, %s16
    %s26 = scalar_select %p23, %s25, %s16
    %p27 = scmp.ge.s32.totalorder %s26, 2
    %s28 = scalar_select %p27, 0, %s26
    %s29 = ssub.s32 %s16, %s28
    %s30 = ssub.s32 %s17, %s24
    %s31 = sor.u32 %s29, %s30
    %p32 = scmp.eq.s32.totalorder %s31, 0
    %s34 = sadd.s32 %s33, 1
    %s35 = scalar_select %p32, %s33, %s34
    %p38 = pneg %p32
    %p39 = scmp.eq.s32.totalorder %s9, 1
    %p40 = por %p38, %p39
    %p41 = scmp.ne.s32.totalorder %s33, %s36
    %p42 = scmp.eq.s32.totalorder %s9, 0
    %p43 = por %p41, %p42
    %p44 = scmp.ne.s32.totalorder %s33, %s36
    %p45 = scmp.eq.s32.totalorder %s14, 1
    %p46 = por %p44, %p45
    %p47 = scmp.ne.s32.totalorder %s36, %s37
    %p48 = scmp.eq.s32.totalorder %s14, 0
    %p49 = por %p47, %p48
    %p50 = scmp.ne.s32.totalorder %s36, %s37
    %p51 = scmp.eq.s32.totalorder %s15, 1
    %p52 = por %p50, %p51
    %p54 = scmp.ne.s32.totalorder %s37, %s53
    %p55 = scmp.eq.s32.totalorder %s15, 0
    %p56 = por %p54, %p55
    %s57 = ssub.s32 %s16, %s28
    %p58 = scmp.eq.s32.totalorder %s57, 0
    %s60 = sadd.s32 %s59, 1
    %s61 = scalar_select %p58, %s59, %s60
    %p64 = pneg %p58
    %p65 = scmp.eq.s32.totalorder %s9, 1
    %p66 = por %p64, %p65
    %p67 = scmp.ne.s32.totalorder %s59, %s62
    %p68 = scmp.eq.s32.totalorder %s9, 0
    %p69 = por %p67, %p68
    %p70 = scmp.ne.s32.totalorder %s59, %s62
    %p71 = scmp.eq.s32.totalorder %s14, 1
    %p72 = por %p70, %p71
    %p73 = scmp.ne.s32.totalorder %s62, %s63
    %p74 = scmp.eq.s32.totalorder %s14, 0
    %p75 = por %p73, %p74
    %p76 = scmp.ne.s32.totalorder %s62, %s63
    %p77 = scmp.eq.s32.totalorder %s15, 1
    %p78 = por %p76, %p77
    %p80 = scmp.ne.s32.totalorder %s63, %s79
    %p81 = scmp.eq.s32.totalorder %s15, 0
    %p82 = por %p80, %p81
    %s84 = sadd.s32 %s83, 1
    %p87 = scmp.eq.s32.totalorder %s9, 1
    %p88 = scmp.ne.s32.totalorder %s83, %s85
    %p89 = scmp.eq.s32.totalorder %s9, 0
    %p90 = por %p88, %p89
    %p91 = scmp.ne.s32.totalorder %s83, %s85
    %p92 = scmp.eq.s32.totalorder %s14, 1
    %p93 = por %p91, %p92
    %p94 = scmp.ne.s32.totalorder %s85, %s86
    %p95 = scmp.eq.s32.totalorder %s14, 0
    %p96 = por %p94, %p95
    %p97 = scmp.ne.s32.totalorder %s85, %s86
    %p98 = scmp.eq.s32.totalorder %s15, 1
    %p99 = por %p97, %p98
    %p101 = scmp.ne.s32.totalorder %s86, %s100
    %p102 = scmp.eq.s32.totalorder %s15, 0
    %p103 = por %p101, %p102
    %s104 = ssub.s32 %s16, %s28
    %s105 = ssub.s32 %s17, %s24
    %s106 = sor.u32 %s104, %s105
    %p107 = scmp.eq.s32.totalorder %s106, 0
    %s109 = sadd.s32 %s108, 1
    %s110 = scalar_select %p107, %s108, %s109
    %p113 = pneg %p107
    %p114 = scmp.eq.s32.totalorder %s9, 1
    %p115 = por %p113, %p114
    %p116 = scmp.ne.s32.totalorder %s108, %s111
    %p117 = scmp.eq.s32.totalorder %s9, 0
    %p118 = por %p116, %p117
    %p119 = scmp.ne.s32.totalorder %s108, %s111
    %p120 = scmp.eq.s32.totalorder %s14, 1
    %p121 = por %p119, %p120
    %p122 = scmp.ne.s32.totalorder %s111, %s112
    %p123 = scmp.eq.s32.totalorder %s14, 0
    %p124 = por %p122, %p123
    %p125 = scmp.ne.s32.totalorder %s111, %s112
    %p126 = scmp.eq.s32.totalorder %s15, 1
    %p127 = por %p125, %p126
    %p129 = scmp.ne.s32.totalorder %s112, %s128
    %p130 = scmp.eq.s32.totalorder %s15, 0
    %p131 = por %p129, %p130
    %p132 = scmp.le.s32.totalorder 1, %s9
    %p133 = scmp.lt.s32.totalorder %s9, 3
    %p134 = pnand %p132, %p133
    %p135 = pneg %p134
    // Predicated region
    $region9: #{reconstruction_forward.3} parent=5 // pred_check
      _
    $region10: #{reconstruction_forward.3} parent=5 // pred_check_branch
      %137 = sbr.rel (%p134) target = $region12
    $region11: #{reconstruction_forward.3} parent=5 // pred_region
      %s138 = ssub.s32 %s9, 1
      // Predicated region
      $region13: #{reconstruction_forward.3} parent=11 // pred_check
        %p139 = pneg %p96
      $region14: #{reconstruction_forward.3} parent=11 // pred_check_branch
        %141 = sbr.rel (%p139) target = $region16
      $region15: #{reconstruction_forward.3} parent=11 // pred_region
        _
      $region16: #{reconstruction_forward.3} parent=11 // pred_fallthru
        _
    $region12: #{reconstruction_forward.3} parent=5 // pred_fallthru
      _
    %p142 = scmp.lt.s32.totalorder %s9, 2
    // Predicated region
    $region17: #{reconstruction_forward.3} parent=5 // pred_check
      %p143 = pneg %p142
    $region18: #{reconstruction_forward.3} parent=5 // pred_check_branch
      %145 = sbr.rel (%p143) target = $region20
    $region19: #{reconstruction_forward.3} parent=5 // pred_region
      // Predicated region
      $region21: #{reconstruction_forward.3} parent=19 // pred_check
        %p146 = pneg %p43
      $region22: #{reconstruction_forward.3} parent=19 // pred_check_branch
        %148 = sbr.rel (%p146) target = $region24
      $region23: #{reconstruction_forward.3} parent=19 // pred_region
        %s149 = smul.u32 8, %s17
        %p150 = scmp.lt.s32.totalorder %s16, 1
        %s151 = scalar_select %p150, %s16, 1
        %p152 = scmp.lt.s32.totalorder %s149, 7
        %s153 = scalar_select %p152, %s149, 7
        %s154 = smul.addr %s153, 3
        %s155 = smul.addr %s151, 24
        %s156 = sadd.s32 %s154, %s155
        %s157 = smul.addr %s156, 4
        %s158 = scalar_lea.vmem %s0, %s157
        %s159 = smul.u32 8, %s17
      $region24: #{reconstruction_forward.3} parent=19 // pred_fallthru
        _
      // Predicated region
      $region25: #{reconstruction_forward.3} parent=19 // pred_check
        %p160 = pneg %p69
      $region26: #{reconstruction_forward.3} parent=19 // pred_check_branch
        %162 = sbr.rel (%p160) target = $region28
      $region27: #{reconstruction_forward.3} parent=19 // pred_region
        %p163 = scmp.lt.s32.totalorder %s16, 1
        %s164 = scalar_select %p163, %s16, 1
        %s165 = smul.addr %s164, 3
        %s166 = scalar_lea.vmem %s1, %s165
      $region28: #{reconstruction_forward.3} parent=19 // pred_fallthru
        _
    $region20: #{reconstruction_forward.3} parent=5 // pred_fallthru
      _
    %p167 = scmp.le.s32.totalorder 1, %s9
    %p168 = scmp.lt.s32.totalorder %s9, 3
    %p169 = pnand %p167, %p168
    %p170 = pneg %p169
    // Predicated region
    $region29: #{reconstruction_forward.3} parent=5 // pred_check
      _
    $region30: #{reconstruction_forward.3} parent=5 // pred_check_branch
      %172 = sbr.rel (%p169) target = $region32
    $region31: #{reconstruction_forward.3} parent=5 // pred_region
      %s173 = ssub.s32 %s9, 1
      %s174 = smul.u32 8, %s19
      %p175 = scmp.lt.s32.totalorder %s18, 1
      %s176 = scalar_select %p175, %s18, 1
      %p177 = scmp.lt.s32.totalorder %s174, 7
      %s178 = scalar_select %p177, %s174, 7
      %s179 = smul.addr %s178, 3
      %s180 = smul.addr %s176, 24
      %s181 = sadd.s32 %s179, %s180
      %s182 = smul.addr %s181, 4
      %s183 = scalar_lea.vmem %s0, %s182
      %p184 = pneg %p49
      %p185 = pneg %p46
      %p186 = scmp.lt.s32.totalorder %s18, 1
      %s187 = scalar_select %p186, %s18, 1
      %s188 = smul.addr %s187, 3
      %s189 = scalar_lea.vmem %s1, %s188
      %p190 = pneg %p75
      %p191 = pneg %p72
      %p192 = pneg %p96
      %p193 = pneg %p93
      %p194 = pneg %p124
      %p195 = pneg %p121
      %s196 = smul.u32 8, %s19
      %p197 = scmp.lt.s32.totalorder %s18, 1
      %s198 = scalar_select %p197, %s18, 1
      %p199 = scmp.lt.s32.totalorder %s196, 7
      %s200 = scalar_select %p199, %s196, 7
      %s201 = smul.addr %s200, 4
      %s202 = smul.addr %s198, 32
      %s203 = sadd.s32 %s201, %s202
      %s204 = smul.addr %s203, 4
      %s205 = scalar_lea.vmem %s3, %s204
      %s206 = smul.u32 8, %s19
      %p207 = scmp.lt.s32.totalorder %s18, 1
      %s208 = scalar_select %p207, %s18, 1
      %p209 = scmp.lt.s32.totalorder %s206, 7
      %s210 = scalar_select %p209, %s206, 7
      %s211 = smul.addr %s210, 3
      %s212 = smul.addr %s208, 24
      %s213 = sadd.s32 %s211, %s212
      %s214 = smul.addr %s213, 4
      %s215 = scalar_lea.vmem %s0, %s214
      %s216 = smul.u32 8, %s19
      %p217 = scmp.lt.s32.totalorder %s18, 1
      %s218 = scalar_select %p217, %s18, 1
      %s219 = smul.addr %s218, 3
      %s220 = scalar_lea.vmem %s1, %s219
      %s221 = smul.u32 8, %s19
      %p222 = scmp.lt.s32.totalorder %s18, 1
      %s223 = scalar_select %p222, %s18, 1
      %p224 = scmp.lt.s32.totalorder %s221, 7
      %s225 = scalar_select %p224, %s221, 7
      %s226 = smul.addr %s225, 4
      %s227 = smul.addr %s223, 32
      %s228 = sadd.s32 %s226, %s227
      %s229 = smul.addr %s228, 4
      %s230 = scalar_lea.vmem %s3, %s229
      %s231 = smul.u32 8, %s19
      %v233 = vld [vmem:[%s215] sm:$0xff]
      %v234 = vld [vmem:[%s215 + $0x8] sm:$0xf]
      %v235 = vld [vmem:[%s215 + $0xc] sm:$0xff]
      %v236 = vld [vmem:[%s215 + $0x14] sm:$0xf]
      %v237 = vld [vmem:[%s215 + $0x18] sm:$0xff]
      %v238 = vld [vmem:[%s215 + $0x20] sm:$0xf]
      %v239 = vld [vmem:[%s215 + $0x24] sm:$0xff]
      %v240 = vld [vmem:[%s215 + $0x2c] sm:$0xf]
      %v241 = vld [vmem:[%s215 + $0x30] sm:$0xff]
      %v242 = vld [vmem:[%s215 + $0x38] sm:$0xf]
      %v243 = vld [vmem:[%s215 + $0x3c] sm:$0xff]
      %v244 = vld [vmem:[%s215 + $0x44] sm:$0xf]
      %v245 = vld [vmem:[%s215 + $0x48] sm:$0xff]
      %v246 = vld [vmem:[%s215 + $0x50] sm:$0xf]
      %v247 = vld [vmem:[%s215 + $0x54] sm:$0xff]
      %v248 = vld [vmem:[%s215 + $0x5c] sm:$0xf]
      %v249 = vld [vmem:[%s220] sm:$0x7]
      %v250 = vunpack.c.l.bf16 %v233
      %v251 = vunpack.c.h.bf16 %v233
      %v252 = vunpack.c.l.bf16 %v234
      %v253 = vunpack.c.l.bf16 %v235
      %v254 = vunpack.c.h.bf16 %v235
      %v255 = vunpack.c.l.bf16 %v236
      %v256 = vunpack.c.l.bf16 %v237
      %v257 = vunpack.c.h.bf16 %v237
      %v258 = vunpack.c.l.bf16 %v238
      %v259 = vunpack.c.l.bf16 %v239
      %v260 = vunpack.c.h.bf16 %v239
      %v261 = vunpack.c.l.bf16 %v240
      %v262 = vunpack.c.l.bf16 %v241
      %v263 = vunpack.c.h.bf16 %v241
      %v264 = vunpack.c.l.bf16 %v242
      %v265 = vunpack.c.l.bf16 %v243
      %v266 = vunpack.c.h.bf16 %v243
      %v267 = vunpack.c.l.bf16 %v244
      %v268 = vunpack.c.l.bf16 %v245
      %v269 = vunpack.c.h.bf16 %v245
      %v270 = vunpack.c.l.bf16 %v246
      %v271 = vunpack.c.l.bf16 %v247
      %v272 = vunpack.c.h.bf16 %v247
      %v273 = vunpack.c.l.bf16 %v248
      %v275 = vlaneseq
      %v276 = vshrl.u32 %v275, 7
      %v277 = vsub.s32 0, %v276
      %v278 = vrot.slane %v249, %v277
      %v279 = vlaneseq
      %v280 = vshrl.u32 %v279, 7
      %v281 = vsub.s32 1, %v280
      %v282 = vrot.slane %v249, %v281
      %v283 = vlaneseq
      %v284 = vshrl.u32 %v283, 7
      %v285 = vsub.s32 2, %v284
      %v286 = vrot.slane %v249, %v285
      %v290 = vmul.f32 %v250, %v278
      %v291 = vmul.f32 %v251, %v282
      %v292 = vmul.f32 %v252, %v286
      %v293 = vmul.f32 %v253, %v278
      %v294 = vmul.f32 %v254, %v282
      %v295 = vmul.f32 %v255, %v286
      %v296 = vmul.f32 %v256, %v278
      %v297 = vmul.f32 %v257, %v282
      %v298 = vmul.f32 %v258, %v286
      %v299 = vmul.f32 %v259, %v278
      %v300 = vmul.f32 %v260, %v282
      %v301 = vmul.f32 %v261, %v286
      %v302 = vmul.f32 %v262, %v278
      %v303 = vmul.f32 %v263, %v282
      %v304 = vmul.f32 %v264, %v286
      %v305 = vmul.f32 %v265, %v278
      %v306 = vmul.f32 %v266, %v282
      %v307 = vmul.f32 %v267, %v286
      %v308 = vmul.f32 %v268, %v278
      %v309 = vmul.f32 %v269, %v282
      %v310 = vmul.f32 %v270, %v286
      %v311 = vmul.f32 %v271, %v278
      %v312 = vmul.f32 %v272, %v282
      %v313 = vmul.f32 %v273, %v286
      %v314 = vpack.c.bf16 %v293, %v290
      %v315 = vpack.c.bf16 %v294, %v291
      %v316 = vpack.c.bf16 %v295, %v292
      %v317 = vpack.c.bf16 %v299, %v296
      %v318 = vpack.c.bf16 %v300, %v297
      %v319 = vpack.c.bf16 %v301, %v298
      %v320 = vpack.c.bf16 %v305, %v302
      %v321 = vpack.c.bf16 %v306, %v303
      %v322 = vpack.c.bf16 %v307, %v304
      %v323 = vpack.c.bf16 %v311, %v308
      %v324 = vpack.c.bf16 %v312, %v309
      %v325 = vpack.c.bf16 %v313, %v310
      %v326 = vld [vmem:[%s2] sm:$0xff]
      %v327 = vld [vmem:[%s2 + $0x8] sm:$0xff]
      %v328 = vld [vmem:[%s2 + $0x10] sm:$0xff]
      %v329 = vld [vmem:[%s2 + $0x18] sm:$0xff]
      %v330 = vld [vmem:[%s2 + $0x20] sm:$0xff]
      %v331 = vld [vmem:[%s2 + $0x28] sm:$0xff]
      %v332 = vld [vmem:[%s2 + $0x30] sm:$0xff]
      %v333 = vld [vmem:[%s2 + $0x38] sm:$0xff]
      %v334 = vld [vmem:[%s2 + $0x40] sm:$0xff]
      %v335 = vld [vmem:[%s2 + $0x48] sm:$0xff]
      %v336 = vld [vmem:[%s2 + $0x50] sm:$0xff]
      %v337 = vld [vmem:[%s2 + $0x58] sm:$0xff]
      %v338 = vld [vmem:[%s2 + $0x60] sm:$0xff]
      %v339 = vld [vmem:[%s2 + $0x68] sm:$0xff]
      %v340 = vld [vmem:[%s2 + $0x70] sm:$0xff]
      %v341 = vld [vmem:[%s2 + $0x78] sm:$0xff]
      %v342 = vld [vmem:[%s2 + $0x80] sm:$0xff]
      %v343 = vld [vmem:[%s2 + $0x88] sm:$0xff]
      %v344 = vld [vmem:[%s2 + $0x90] sm:$0xff]
      %v345 = vld [vmem:[%s2 + $0x98] sm:$0xff]
      %v346 = vld [vmem:[%s2 + $0xa0] sm:$0xff]
      %v347 = vld [vmem:[%s2 + $0xa8] sm:$0xff]
      %v348 = vld [vmem:[%s2 + $0xb0] sm:$0xff]
      %v349 = vld [vmem:[%s2 + $0xb8] sm:$0xff]
      %v350 = vld [vmem:[%s2 + $0xc0] sm:$0xff]
      %v351 = vld [vmem:[%s2 + $0xc8] sm:$0xff]
      %v352 = vld [vmem:[%s2 + $0xd0] sm:$0xff]
      %v353 = vld [vmem:[%s2 + $0xd8] sm:$0xff]
      %v354 = vld [vmem:[%s2 + $0xe0] sm:$0xff]
      %v355 = vld [vmem:[%s2 + $0xe8] sm:$0xff]
      %v356 = vld [vmem:[%s2 + $0xf0] sm:$0xff]
      %v357 = vld [vmem:[%s2 + $0xf8] sm:$0xff]
      %v358 = vld [vmem:[%s2 + $0x100] sm:$0xff]
      %v359 = vld [vmem:[%s2 + $0x108] sm:$0xff]
      %v360 = vld [vmem:[%s2 + $0x110] sm:$0xff]
      %v361 = vld [vmem:[%s2 + $0x118] sm:$0xff]
      %v362 = vld [vmem:[%s2 + $0x120] sm:$0xff]
      %v363 = vld [vmem:[%s2 + $0x128] sm:$0xff]
      %v364 = vld [vmem:[%s2 + $0x130] sm:$0xff]
      %v365 = vld [vmem:[%s2 + $0x138] sm:$0xff]
      %v366 = vld [vmem:[%s2 + $0x140] sm:$0xff]
      %v367 = vld [vmem:[%s2 + $0x148] sm:$0xff]
      %v368 = vld [vmem:[%s2 + $0x150] sm:$0xff]
      %v369 = vld [vmem:[%s2 + $0x158] sm:$0xff]
      %v370 = vld [vmem:[%s2 + $0x160] sm:$0xff]
      %v371 = vld [vmem:[%s2 + $0x168] sm:$0xff]
      %v372 = vld [vmem:[%s2 + $0x170] sm:$0xff]
      %v373 = vld [vmem:[%s2 + $0x178] sm:$0xff]
      %v374 = vld [vmem:[%s2 + $0x180] sm:$0xff]
      %v375 = vld [vmem:[%s2 + $0x188] sm:$0xff]
      %v376 = vld [vmem:[%s2 + $0x190] sm:$0xff]
      %v377 = vld [vmem:[%s2 + $0x198] sm:$0xff]
      %v378 = vld [vmem:[%s2 + $0x1a0] sm:$0xff]
      %v379 = vld [vmem:[%s2 + $0x1a8] sm:$0xff]
      %v380 = vld [vmem:[%s2 + $0x1b0] sm:$0xff]
      %v381 = vld [vmem:[%s2 + $0x1b8] sm:$0xff]
      %v382 = vld [vmem:[%s2 + $0x1c0] sm:$0xff]
      %v383 = vld [vmem:[%s2 + $0x1c8] sm:$0xff]
      %v384 = vld [vmem:[%s2 + $0x1d0] sm:$0xff]
      %v385 = vld [vmem:[%s2 + $0x1d8] sm:$0xff]
      %v386 = vld [vmem:[%s2 + $0x1e0] sm:$0xff]
      %v387 = vld [vmem:[%s2 + $0x1e8] sm:$0xff]
      %v388 = vld [vmem:[%s2 + $0x1f0] sm:$0xff]
      %v389 = vld [vmem:[%s2 + $0x1f8] sm:$0xff]
      %v390 = vld [vmem:[%s2 + $0x200] sm:$0xff]
      %v391 = vld [vmem:[%s2 + $0x208] sm:$0xff]
      %v392 = vld [vmem:[%s2 + $0x210] sm:$0xff]
      %v393 = vld [vmem:[%s2 + $0x218] sm:$0xff]
      %v394 = vld [vmem:[%s2 + $0x220] sm:$0xff]
      %v395 = vld [vmem:[%s2 + $0x228] sm:$0xff]
      %v396 = vld [vmem:[%s2 + $0x230] sm:$0xff]
      %v397 = vld [vmem:[%s2 + $0x238] sm:$0xff]
      %v398 = vld [vmem:[%s2 + $0x240] sm:$0xff]
      %v399 = vld [vmem:[%s2 + $0x248] sm:$0xff]
      %v400 = vld [vmem:[%s2 + $0x250] sm:$0xff]
      %v401 = vld [vmem:[%s2 + $0x258] sm:$0xff]
      %v402 = vld [vmem:[%s2 + $0x260] sm:$0xff]
      %v403 = vld [vmem:[%s2 + $0x268] sm:$0xff]
      %v404 = vld [vmem:[%s2 + $0x270] sm:$0xff]
      %v405 = vld [vmem:[%s2 + $0x278] sm:$0xff]
      %v486 = vunpack.c.l.b16 %v326
      %v487 = vunpack.c.h.b16 %v326
      %v488 = vunpack.c.l.b16 %v327
      %v489 = vunpack.c.h.b16 %v327
      %v490 = vunpack.c.l.b16 %v328
      %v491 = vunpack.c.h.b16 %v328
      %v492 = vunpack.c.l.b16 %v329
      %v493 = vunpack.c.h.b16 %v329
      %v494 = vunpack.c.l.b16 %v330
      %v495 = vunpack.c.h.b16 %v330
      %v496 = vunpack.c.l.b16 %v331
      %v497 = vunpack.c.h.b16 %v331
      %v498 = vunpack.c.l.b16 %v332
      %v499 = vunpack.c.h.b16 %v332
      %v500 = vunpack.c.l.b16 %v333
      %v501 = vunpack.c.h.b16 %v333
      %v502 = vunpack.c.l.b16 %v334
      %v503 = vunpack.c.h.b16 %v334
      %v504 = vunpack.c.l.b16 %v335
      %v505 = vunpack.c.h.b16 %v335
      %v506 = vunpack.c.l.b16 %v336
      %v507 = vunpack.c.h.b16 %v336
      %v508 = vunpack.c.l.b16 %v337
      %v509 = vunpack.c.h.b16 %v337
      %v510 = vunpack.c.l.b16 %v338
      %v511 = vunpack.c.h.b16 %v338
      %v512 = vunpack.c.l.b16 %v339
      %v513 = vunpack.c.h.b16 %v339
      %v514 = vunpack.c.l.b16 %v340
      %v515 = vunpack.c.h.b16 %v340
      %v516 = vunpack.c.l.b16 %v341
      %v517 = vunpack.c.h.b16 %v341
      %v518 = vunpack.c.l.b16 %v342
      %v519 = vunpack.c.h.b16 %v342
      %v520 = vunpack.c.l.b16 %v343
      %v521 = vunpack.c.h.b16 %v343
      %v522 = vunpack.c.l.b16 %v344
      %v523 = vunpack.c.h.b16 %v344
      %v524 = vunpack.c.l.b16 %v345
      %v525 = vunpack.c.h.b16 %v345
      %v526 = vunpack.c.l.b16 %v346
      %v527 = vunpack.c.h.b16 %v346
      %v528 = vunpack.c.l.b16 %v347
      %v529 = vunpack.c.h.b16 %v347
      %v530 = vunpack.c.l.b16 %v348
      %v531 = vunpack.c.h.b16 %v348
      %v532 = vunpack.c.l.b16 %v349
      %v533 = vunpack.c.h.b16 %v349
      %v534 = vunpack.c.l.b16 %v350
      %v535 = vunpack.c.h.b16 %v350
      %v536 = vunpack.c.l.b16 %v351
      %v537 = vunpack.c.h.b16 %v351
      %v538 = vunpack.c.l.b16 %v352
      %v539 = vunpack.c.h.b16 %v352
      %v540 = vunpack.c.l.b16 %v353
      %v541 = vunpack.c.h.b16 %v353
      %v542 = vunpack.c.l.b16 %v354
      %v543 = vunpack.c.h.b16 %v354
      %v544 = vunpack.c.l.b16 %v355
      %v545 = vunpack.c.h.b16 %v355
      %v546 = vunpack.c.l.b16 %v356
      %v547 = vunpack.c.h.b16 %v356
      %v548 = vunpack.c.l.b16 %v357
      %v549 = vunpack.c.h.b16 %v357
      %v550 = vunpack.c.l.b16 %v358
      %v551 = vunpack.c.h.b16 %v358
      %v552 = vunpack.c.l.b16 %v359
      %v553 = vunpack.c.h.b16 %v359
      %v554 = vunpack.c.l.b16 %v360
      %v555 = vunpack.c.h.b16 %v360
      %v556 = vunpack.c.l.b16 %v361
      %v557 = vunpack.c.h.b16 %v361
      %v558 = vunpack.c.l.b16 %v362
      %v559 = vunpack.c.h.b16 %v362
      %v560 = vunpack.c.l.b16 %v363
      %v561 = vunpack.c.h.b16 %v363
      %v562 = vunpack.c.l.b16 %v364
      %v563 = vunpack.c.h.b16 %v364
      %v564 = vunpack.c.l.b16 %v365
      %v565 = vunpack.c.h.b16 %v365
      %v566 = vunpack.c.l.b16 %v366
      %v567 = vunpack.c.h.b16 %v366
      %v568 = vunpack.c.l.b16 %v367
      %v569 = vunpack.c.h.b16 %v367
      %v570 = vunpack.c.l.b16 %v368
      %v571 = vunpack.c.h.b16 %v368
      %v572 = vunpack.c.l.b16 %v369
      %v573 = vunpack.c.h.b16 %v369
      %v574 = vunpack.c.l.b16 %v370
      %v575 = vunpack.c.h.b16 %v370
      %v576 = vunpack.c.l.b16 %v371
      %v577 = vunpack.c.h.b16 %v371
      %v578 = vunpack.c.l.b16 %v372
      %v579 = vunpack.c.h.b16 %v372
      %v580 = vunpack.c.l.b16 %v373
      %v581 = vunpack.c.h.b16 %v373
      %v582 = vunpack.c.l.b16 %v374
      %v583 = vunpack.c.h.b16 %v374
      %v584 = vunpack.c.l.b16 %v375
      %v585 = vunpack.c.h.b16 %v375
      %v586 = vunpack.c.l.b16 %v376
      %v587 = vunpack.c.h.b16 %v376
      %v588 = vunpack.c.l.b16 %v377
      %v589 = vunpack.c.h.b16 %v377
      %v590 = vunpack.c.l.b16 %v378
      %v591 = vunpack.c.h.b16 %v378
      %v592 = vunpack.c.l.b16 %v379
      %v593 = vunpack.c.h.b16 %v379
      %v594 = vunpack.c.l.b16 %v380
      %v595 = vunpack.c.h.b16 %v380
      %v596 = vunpack.c.l.b16 %v381
      %v597 = vunpack.c.h.b16 %v381
      %v598 = vunpack.c.l.b16 %v382
      %v599 = vunpack.c.h.b16 %v382
      %v600 = vunpack.c.l.b16 %v383
      %v601 = vunpack.c.h.b16 %v383
      %v602 = vunpack.c.l.b16 %v384
      %v603 = vunpack.c.h.b16 %v384
      %v604 = vunpack.c.l.b16 %v385
      %v605 = vunpack.c.h.b16 %v385
      %v606 = vunpack.c.l.b16 %v386
      %v607 = vunpack.c.h.b16 %v386
      %v608 = vunpack.c.l.b16 %v387
      %v609 = vunpack.c.h.b16 %v387
      %v610 = vunpack.c.l.b16 %v388
      %v611 = vunpack.c.h.b16 %v388
      %v612 = vunpack.c.l.b16 %v389
      %v613 = vunpack.c.h.b16 %v389
      %v614 = vunpack.c.l.b16 %v390
      %v615 = vunpack.c.h.b16 %v390
      %v616 = vunpack.c.l.b16 %v391
      %v617 = vunpack.c.h.b16 %v391
      %v618 = vunpack.c.l.b16 %v392
      %v619 = vunpack.c.h.b16 %v392
      %v620 = vunpack.c.l.b16 %v393
      %v621 = vunpack.c.h.b16 %v393
      %v622 = vunpack.c.l.b16 %v394
      %v623 = vunpack.c.h.b16 %v394
      %v624 = vunpack.c.l.b16 %v395
      %v625 = vunpack.c.h.b16 %v395
      %v626 = vunpack.c.l.b16 %v396
      %v627 = vunpack.c.h.b16 %v396
      %v628 = vunpack.c.l.b16 %v397
      %v629 = vunpack.c.h.b16 %v397
      %v630 = vunpack.c.l.b16 %v398
      %v631 = vunpack.c.h.b16 %v398
      %v632 = vunpack.c.l.b16 %v399
      %v633 = vunpack.c.h.b16 %v399
      %v634 = vunpack.c.l.b16 %v400
      %v635 = vunpack.c.h.b16 %v400
      %v636 = vunpack.c.l.b16 %v401
      %v637 = vunpack.c.h.b16 %v401
      %v638 = vunpack.c.l.b16 %v402
      %v639 = vunpack.c.h.b16 %v402
      %v640 = vunpack.c.l.b16 %v403
      %v641 = vunpack.c.h.b16 %v403
      %v642 = vunpack.c.l.b16 %v404
      %v643 = vunpack.c.h.b16 %v404
      %v644 = vunpack.c.l.b16 %v405
      %v645 = vunpack.c.h.b16 %v405
      %v646 = vpack.c.b16 %v490, %v486
      %v647 = vpack.c.b16 %v491, %v487
      %v648 = vpack.c.b16 %v492, %v488
      %v649 = vpack.c.b16 %v493, %v489
      %v650 = vpack.c.b16 %v498, %v494
      %v651 = vpack.c.b16 %v499, %v495
      %v652 = vpack.c.b16 %v500, %v496
      %v653 = vpack.c.b16 %v501, %v497
      %v654 = vpack.c.b16 %v506, %v502
      %v655 = vpack.c.b16 %v507, %v503
      %v656 = vpack.c.b16 %v508, %v504
      %v657 = vpack.c.b16 %v509, %v505
      %v658 = vpack.c.b16 %v514, %v510
      %v659 = vpack.c.b16 %v515, %v511
      %v660 = vpack.c.b16 %v516, %v512
      %v661 = vpack.c.b16 %v517, %v513
      %v662 = vpack.c.b16 %v522, %v518
      %v663 = vpack.c.b16 %v523, %v519
      %v664 = vpack.c.b16 %v524, %v520
      %v665 = vpack.c.b16 %v525, %v521
      %v666 = vpack.c.b16 %v530, %v526
      %v667 = vpack.c.b16 %v531, %v527
      %v668 = vpack.c.b16 %v532, %v528
      %v669 = vpack.c.b16 %v533, %v529
      %v670 = vpack.c.b16 %v538, %v534
      %v671 = vpack.c.b16 %v539, %v535
      %v672 = vpack.c.b16 %v540, %v536
      %v673 = vpack.c.b16 %v541, %v537
      %v674 = vpack.c.b16 %v546, %v542
      %v675 = vpack.c.b16 %v547, %v543
      %v676 = vpack.c.b16 %v548, %v544
      %v677 = vpack.c.b16 %v549, %v545
      %v678 = vpack.c.b16 %v554, %v550
      %v679 = vpack.c.b16 %v555, %v551
      %v680 = vpack.c.b16 %v556, %v552
      %v681 = vpack.c.b16 %v557, %v553
      %v682 = vpack.c.b16 %v562, %v558
      %v683 = vpack.c.b16 %v563, %v559
      %v684 = vpack.c.b16 %v564, %v560
      %v685 = vpack.c.b16 %v565, %v561
      %v686 = vpack.c.b16 %v570, %v566
      %v687 = vpack.c.b16 %v571, %v567
      %v688 = vpack.c.b16 %v572, %v568
      %v689 = vpack.c.b16 %v573, %v569
      %v690 = vpack.c.b16 %v578, %v574
      %v691 = vpack.c.b16 %v579, %v575
      %v692 = vpack.c.b16 %v580, %v576
      %v693 = vpack.c.b16 %v581, %v577
      %v694 = vpack.c.b16 %v586, %v582
      %v695 = vpack.c.b16 %v587, %v583
      %v696 = vpack.c.b16 %v588, %v584
      %v697 = vpack.c.b16 %v589, %v585
      %v698 = vpack.c.b16 %v594, %v590
      %v699 = vpack.c.b16 %v595, %v591
      %v700 = vpack.c.b16 %v596, %v592
      %v701 = vpack.c.b16 %v597, %v593
      %v702 = vpack.c.b16 %v602, %v598
      %v703 = vpack.c.b16 %v603, %v599
      %v704 = vpack.c.b16 %v604, %v600
      %v705 = vpack.c.b16 %v605, %v601
      %v706 = vpack.c.b16 %v610, %v606
      %v707 = vpack.c.b16 %v611, %v607
      %v708 = vpack.c.b16 %v612, %v608
      %v709 = vpack.c.b16 %v613, %v609
      %v710 = vpack.c.b16 %v618, %v614
      %v711 = vpack.c.b16 %v619, %v615
      %v712 = vpack.c.b16 %v620, %v616
      %v713 = vpack.c.b16 %v621, %v617
      %v714 = vpack.c.b16 %v626, %v622
      %v715 = vpack.c.b16 %v627, %v623
      %v716 = vpack.c.b16 %v628, %v624
      %v717 = vpack.c.b16 %v629, %v625
      %v718 = vpack.c.b16 %v634, %v630
      %v719 = vpack.c.b16 %v635, %v631
      %v720 = vpack.c.b16 %v636, %v632
      %v721 = vpack.c.b16 %v637, %v633
      %v722 = vpack.c.b16 %v642, %v638
      %v723 = vpack.c.b16 %v643, %v639
      %v724 = vpack.c.b16 %v644, %v640
      %v725 = vpack.c.b16 %v645, %v641
      %vm806 = vcmask 523264
      %v808 = vsel %vm806, %v316, 0
      %v811 = vsel %vm806, %v319, 0
      %v814 = vsel %vm806, %v322, 0
      %v817 = vsel %vm806, %v325, 0
      %819 = vmatprep.subr.bf16.mxu0 %v647
      %820 = vmatpush1.bf16.msra.mxu0 %v646
      %821 = vmatprep.subr.bf16.mxu0 %v651
      %822 = vmatpush1.bf16.msra.mxu0 %v650
      %823 = vmatprep.subr.bf16.mxu0 %v655
      %824 = vmatpush1.bf16.msra.mxu0 %v654
      %825 = vmatprep.subr.bf16.mxu0 %v659
      %826 = vmatpush1.bf16.msra.mxu0 %v658
      %827 = vmatprep.subr.bf16.mxu0 %v663
      %828 = vmatpush1.bf16.msra.mxu0 %v662
      %829 = vmatprep.subr.bf16.mxu0 %v667
      %830 = vmatpush1.bf16.msra.mxu0 %v666
      %831 = vmatprep.subr.bf16.mxu0 %v671
      %832 = vmatpush1.bf16.msra.mxu0 %v670
      %833 = vmatprep.subr.bf16.mxu0 %v675
      %834 = vmatpush1.bf16.msra.mxu0 %v674
      %835 = vmatprep.subr.bf16.mxu0 %v679
      %836 = vmatpush1.bf16.msra.mxu0 %v678
      %837 = vmatprep.subr.bf16.mxu0 %v683
      %838 = vmatpush1.bf16.msra.mxu0 %v682
      %839 = vmatprep.subr.bf16.mxu0 %v687
      %840 = vmatpush1.bf16.msra.mxu0 %v686
      %841 = vmatprep.subr.bf16.mxu0 %v691
      %842 = vmatpush1.bf16.msra.mxu0 %v690
      %843 = vmatprep.subr.bf16.mxu0 %v695
      %844 = vmatpush1.bf16.msra.mxu0 %v694
      %845 = vmatprep.subr.bf16.mxu0 %v699
      %846 = vmatpush1.bf16.msra.mxu0 %v698
      %847 = vmatprep.subr.bf16.mxu0 %v703
      %848 = vmatpush1.bf16.msra.mxu0 %v702
      %849 = vmatprep.subr.bf16.mxu0 %v707
      %850 = vmatpush1.bf16.msra.mxu0 %v706
      %851 = vmatprep.mubr.bf16.mxu0 %v315
      %852 = vmatmul.mubr.bf16.gmra.mrb[0].mxu0 %v314
      %v853 = vpop.f32.mrb[0].mxu0
      %v854 = vadd.f32 0.0, %v853
      %v855 = vpop.f32.mrb[0].mxu0
      %v856 = vadd.f32 0.0, %v855
      %v857 = vpop.f32.mrb[0].mxu0
      %v858 = vadd.f32 0.0, %v857
      %v859 = vpop.f32.mrb[0].mxu0
      %v860 = vadd.f32 0.0, %v859
      %861 = vmatprep.mubr.bf16.mxu0 %v318
      %862 = vmatmul.mubr.bf16.gmra.mrb[0].mxu0 %v317
      %v863 = vpop.f32.mrb[0].mxu0
      %v864 = vadd.f32 0.0, %v863
      %v865 = vpop.f32.mrb[0].mxu0
      %v866 = vadd.f32 0.0, %v865
      %v867 = vpop.f32.mrb[0].mxu0
      %v868 = vadd.f32 0.0, %v867
      %v869 = vpop.f32.mrb[0].mxu0
      %v870 = vadd.f32 0.0, %v869
      %871 = vmatprep.mubr.bf16.mxu0 %v321
      %872 = vmatmul.mubr.bf16.gmra.mrb[0].mxu0 %v320
      %v873 = vpop.f32.mrb[0].mxu0
      %v874 = vadd.f32 0.0, %v873
      %v875 = vpop.f32.mrb[0].mxu0
      %v876 = vadd.f32 0.0, %v875
      %v877 = vpop.f32.mrb[0].mxu0
      %v878 = vadd.f32 0.0, %v877
      %v879 = vpop.f32.mrb[0].mxu0
      %v880 = vadd.f32 0.0, %v879
      %881 = vmatprep.mubr.bf16.mxu0 %v324
      %882 = vmatmul.mubr.bf16.gmra.mrb[0].mxu0 %v323
      %v883 = vpop.f32.mrb[0].mxu0
      %v884 = vadd.f32 0.0, %v883
      %v885 = vpop.f32.mrb[0].mxu0
      %v886 = vadd.f32 0.0, %v885
      %v887 = vpop.f32.mrb[0].mxu0
      %v888 = vadd.f32 0.0, %v887
      %v889 = vpop.f32.mrb[0].mxu0
      %v890 = vadd.f32 0.0, %v889
      %891 = vdwg.mxu0
      %892 = vmatprep.subr.bf16.mxu0 %v711
      %893 = vmatpush1.bf16.msra.mxu0 %v710
      %894 = vmatprep.subr.bf16.mxu0 %v715
      %895 = vmatpush1.bf16.msra.mxu0 %v714
      %896 = vmatprep.subr.bf16.mxu0 %v719
      %897 = vmatpush1.bf16.msra.mxu0 %v718
      %898 = vmatprep.subr.bf16.mxu0 %v723
      %899 = vmatpush1.bf16.msra.mxu0 %v722
      %900 = vmatprep.subr.bf16.mxu0 0
      %901 = vmatpush1.bf16.msra.mxu0 0
      %902 = vmatprep.subr.bf16.mxu0 0
      %903 = vmatpush1.bf16.msra.mxu0 0
      %904 = vmatprep.subr.bf16.mxu0 0
      %905 = vmatpush1.bf16.msra.mxu0 0
      %906 = vmatprep.subr.bf16.mxu0 0
      %907 = vmatpush1.bf16.msra.mxu0 0
      %908 = vmatprep.subr.bf16.mxu0 0
      %909 = vmatpush1.bf16.msra.mxu0 0
      %910 = vmatprep.subr.bf16.mxu0 0
      %911 = vmatpush1.bf16.msra.mxu0 0
      %912 = vmatprep.subr.bf16.mxu0 0
      %913 = vmatpush1.bf16.msra.mxu0 0
      %914 = vmatprep.subr.bf16.mxu0 0
      %915 = vmatpush1.bf16.msra.mxu0 0
      %916 = vmatprep.subr.bf16.mxu0 0
      %917 = vmatpush1.bf16.msra.mxu0 0
      %918 = vmatprep.subr.bf16.mxu0 0
      %919 = vmatpush1.bf16.msra.mxu0 0
      %920 = vmatprep.subr.bf16.mxu0 0
      %921 = vmatpush1.bf16.msra.mxu0 0
      %922 = vmatprep.subr.bf16.mxu0 0
      %923 = vmatpush1.bf16.msra.mxu0 0
      %924 = vmatprep.mubr.bf16.mxu0 0
      %925 = vmatmul.mubr.bf16.gmra.mrb[0].mxu0 %v808
      %v926 = vpop.f32.mrb[0].mxu0
      %v927 = vadd.f32 %v854, %v926
      %v928 = vpop.f32.mrb[0].mxu0
      %v929 = vadd.f32 %v856, %v928
      %v930 = vpop.f32.mrb[0].mxu0
      %v931 = vadd.f32 %v858, %v930
      %v932 = vpop.f32.mrb[0].mxu0
      %v933 = vadd.f32 %v860, %v932
      %934 = vmatprep.mubr.bf16.mxu0 0
      %935 = vmatmul.mubr.bf16.gmra.mrb[0].mxu0 %v811
      %v936 = vpop.f32.mrb[0].mxu0
      %v937 = vadd.f32 %v864, %v936
      %v938 = vpop.f32.mrb[0].mxu0
      %v939 = vadd.f32 %v866, %v938
      %v940 = vpop.f32.mrb[0].mxu0
      %v941 = vadd.f32 %v868, %v940
      %v942 = vpop.f32.mrb[0].mxu0
      %v943 = vadd.f32 %v870, %v942
      %944 = vmatprep.mubr.bf16.mxu0 0
      %945 = vmatmul.mubr.bf16.gmra.mrb[0].mxu0 %v814
      %v946 = vpop.f32.mrb[0].mxu0
      %v947 = vadd.f32 %v874, %v946
      %v948 = vpop.f32.mrb[0].mxu0
      %v949 = vadd.f32 %v876, %v948
      %v950 = vpop.f32.mrb[0].mxu0
      %v951 = vadd.f32 %v878, %v950
      %v952 = vpop.f32.mrb[0].mxu0
      %v953 = vadd.f32 %v880, %v952
      %954 = vmatprep.mubr.bf16.mxu0 0
      %955 = vmatmul.mubr.bf16.gmra.mrb[0].mxu0 %v817
      %v956 = vpop.f32.mrb[0].mxu0
      %v957 = vadd.f32 %v884, %v956
      %v958 = vpop.f32.mrb[0].mxu0
      %v959 = vadd.f32 %v886, %v958
      %v960 = vpop.f32.mrb[0].mxu0
      %v961 = vadd.f32 %v888, %v960
      %v962 = vpop.f32.mrb[0].mxu0
      %v963 = vadd.f32 %v890, %v962
      %964 = vdwg.mxu0
      %965 = vmatprep.subr.bf16.mxu0 %v649
      %966 = vmatpush1.bf16.msra.mxu0 %v648
      %967 = vmatprep.subr.bf16.mxu0 %v653
      %968 = vmatpush1.bf16.msra.mxu0 %v652
      %969 = vmatprep.subr.bf16.mxu0 %v657
      %970 = vmatpush1.bf16.msra.mxu0 %v656
      %971 = vmatprep.subr.bf16.mxu0 %v661
      %972 = vmatpush1.bf16.msra.mxu0 %v660
      %973 = vmatprep.subr.bf16.mxu0 %v665
      %974 = vmatpush1.bf16.msra.mxu0 %v664
      %975 = vmatprep.subr.bf16.mxu0 %v669
      %976 = vmatpush1.bf16.msra.mxu0 %v668
      %977 = vmatprep.subr.bf16.mxu0 %v673
      %978 = vmatpush1.bf16.msra.mxu0 %v672
      %979 = vmatprep.subr.bf16.mxu0 %v677
      %980 = vmatpush1.bf16.msra.mxu0 %v676
      %981 = vmatprep.subr.bf16.mxu0 %v681
      %982 = vmatpush1.bf16.msra.mxu0 %v680
      %983 = vmatprep.subr.bf16.mxu0 %v685
      %984 = vmatpush1.bf16.msra.mxu0 %v684
      %985 = vmatprep.subr.bf16.mxu0 %v689
      %986 = vmatpush1.bf16.msra.mxu0 %v688
      %987 = vmatprep.subr.bf16.mxu0 %v693
      %988 = vmatpush1.bf16.msra.mxu0 %v692
      %989 = vmatprep.subr.bf16.mxu0 %v697
      %990 = vmatpush1.bf16.msra.mxu0 %v696
      %991 = vmatprep.subr.bf16.mxu0 %v701
      %992 = vmatpush1.bf16.msra.mxu0 %v700
      %993 = vmatprep.subr.bf16.mxu0 %v705
      %994 = vmatpush1.bf16.msra.mxu0 %v704
      %995 = vmatprep.subr.bf16.mxu0 %v709
      %996 = vmatpush1.bf16.msra.mxu0 %v708
      %997 = vmatprep.mubr.bf16.mxu0 %v315
      %998 = vmatmul.mubr.bf16.gmra.mrb[0].mxu0 %v314
      %v999 = vpop.f32.mrb[0].mxu0
      %v1000 = vadd.f32 0.0, %v999
      %v1001 = vpop.f32.mrb[0].mxu0
      %v1002 = vadd.f32 0.0, %v1001
      %v1003 = vpop.f32.mrb[0].mxu0
      %v1004 = vadd.f32 0.0, %v1003
      %v1005 = vpop.f32.mrb[0].mxu0
      %v1006 = vadd.f32 0.0, %v1005
      %1007 = vmatprep.mubr.bf16.mxu0 %v318
      %1008 = vmatmul.mubr.bf16.gmra.mrb[0].mxu0 %v317
      %v1009 = vpop.f32.mrb[0].mxu0
      %v1010 = vadd.f32 0.0, %v1009
      %v1011 = vpop.f32.mrb[0].mxu0
      %v1012 = vadd.f32 0.0, %v1011
      %v1013 = vpop.f32.mrb[0].mxu0
      %v1014 = vadd.f32 0.0, %v1013
      %v1015 = vpop.f32.mrb[0].mxu0
      %v1016 = vadd.f32 0.0, %v1015
      %1017 = vmatprep.mubr.bf16.mxu0 %v321
      %1018 = vmatmul.mubr.bf16.gmra.mrb[0].mxu0 %v320
      %v1019 = vpop.f32.mrb[0].mxu0
      %v1020 = vadd.f32 0.0, %v1019
      %v1021 = vpop.f32.mrb[0].mxu0
      %v1022 = vadd.f32 0.0, %v1021
      %v1023 = vpop.f32.mrb[0].mxu0
      %v1024 = vadd.f32 0.0, %v1023
      %v1025 = vpop.f32.mrb[0].mxu0
      %v1026 = vadd.f32 0.0, %v1025
      %1027 = vmatprep.mubr.bf16.mxu0 %v324
      %1028 = vmatmul.mubr.bf16.gmra.mrb[0].mxu0 %v323
      %v1029 = vpop.f32.mrb[0].mxu0
      %v1030 = vadd.f32 0.0, %v1029
      %v1031 = vpop.f32.mrb[0].mxu0
      %v1032 = vadd.f32 0.0, %v1031
      %v1033 = vpop.f32.mrb[0].mxu0
      %v1034 = vadd.f32 0.0, %v1033
      %v1035 = vpop.f32.mrb[0].mxu0
      %v1036 = vadd.f32 0.0, %v1035
      %1037 = vdwg.mxu0
      %1038 = vmatprep.subr.bf16.mxu0 %v713
      %1039 = vmatpush1.bf16.msra.mxu0 %v712
      %1040 = vmatprep.subr.bf16.mxu0 %v717
      %1041 = vmatpush1.bf16.msra.mxu0 %v716
      %1042 = vmatprep.subr.bf16.mxu0 %v721
      %1043 = vmatpush1.bf16.msra.mxu0 %v720
      %1044 = vmatprep.subr.bf16.mxu0 %v725
      %1045 = vmatpush1.bf16.msra.mxu0 %v724
      %1046 = vmatprep.subr.bf16.mxu0 0
      %1047 = vmatpush1.bf16.msra.mxu0 0
      %1048 = vmatprep.subr.bf16.mxu0 0
      %1049 = vmatpush1.bf16.msra.mxu0 0
      %1050 = vmatprep.subr.bf16.mxu0 0
      %1051 = vmatpush1.bf16.msra.mxu0 0
      %1052 = vmatprep.subr.bf16.mxu0 0
      %1053 = vmatpush1.bf16.msra.mxu0 0
      %1054 = vmatprep.subr.bf16.mxu0 0
      %1055 = vmatpush1.bf16.msra.mxu0 0
      %1056 = vmatprep.subr.bf16.mxu0 0
      %1057 = vmatpush1.bf16.msra.mxu0 0
      %1058 = vmatprep.subr.bf16.mxu0 0
      %1059 = vmatpush1.bf16.msra.mxu0 0
      %1060 = vmatprep.subr.bf16.mxu0 0
      %1061 = vmatpush1.bf16.msra.mxu0 0
      %1062 = vmatprep.subr.bf16.mxu0 0
      %1063 = vmatpush1.bf16.msra.mxu0 0
      %1064 = vmatprep.subr.bf16.mxu0 0
      %1065 = vmatpush1.bf16.msra.mxu0 0
      %1066 = vmatprep.subr.bf16.mxu0 0
      %1067 = vmatpush1.bf16.msra.mxu0 0
      %1068 = vmatprep.subr.bf16.mxu0 0
      %1069 = vmatpush1.bf16.msra.mxu0 0
      %1070 = vmatprep.mubr.bf16.mxu0 0
      %1071 = vmatmul.mubr.bf16.gmra.mrb[0].mxu0 %v808
      %v1072 = vpop.f32.mrb[0].mxu0
      %v1073 = vadd.f32 %v1000, %v1072
      %v1074 = vpop.f32.mrb[0].mxu0
      %v1075 = vadd.f32 %v1002, %v1074
      %v1076 = vpop.f32.mrb[0].mxu0
      %v1077 = vadd.f32 %v1004, %v1076
      %v1078 = vpop.f32.mrb[0].mxu0
      %v1079 = vadd.f32 %v1006, %v1078
      %1080 = vmatprep.mubr.bf16.mxu0 0
      %1081 = vmatmul.mubr.bf16.gmra.mrb[0].mxu0 %v811
      %v1082 = vpop.f32.mrb[0].mxu0
      %v1083 = vadd.f32 %v1010, %v1082
      %v1084 = vpop.f32.mrb[0].mxu0
      %v1085 = vadd.f32 %v1012, %v1084
      %v1086 = vpop.f32.mrb[0].mxu0
      %v1087 = vadd.f32 %v1014, %v1086
      %v1088 = vpop.f32.mrb[0].mxu0
      %v1089 = vadd.f32 %v1016, %v1088
      %1090 = vmatprep.mubr.bf16.mxu0 0
      %1091 = vmatmul.mubr.bf16.gmra.mrb[0].mxu0 %v814
      %v1092 = vpop.f32.mrb[0].mxu0
      %v1093 = vadd.f32 %v1020, %v1092
      %v1094 = vpop.f32.mrb[0].mxu0
      %v1095 = vadd.f32 %v1022, %v1094
      %v1096 = vpop.f32.mrb[0].mxu0
      %v1097 = vadd.f32 %v1024, %v1096
      %v1098 = vpop.f32.mrb[0].mxu0
      %v1099 = vadd.f32 %v1026, %v1098
      %1100 = vmatprep.mubr.bf16.mxu0 0
      %1101 = vmatmul.mubr.bf16.gmra.mrb[0].mxu0 %v817
      %v1102 = vpop.f32.mrb[0].mxu0
      %v1103 = vadd.f32 %v1030, %v1102
      %v1104 = vpop.f32.mrb[0].mxu0
      %v1105 = vadd.f32 %v1032, %v1104
      %v1106 = vpop.f32.mrb[0].mxu0
      %v1107 = vadd.f32 %v1034, %v1106
      %v1108 = vpop.f32.mrb[0].mxu0
      %v1109 = vadd.f32 %v1036, %v1108
      %1110 = vdwg.mxu0
      %v1111 = vmax.f32 %v927, 0.0
      %v1112 = vmax.f32 %v929, 0.0
      %v1113 = vmax.f32 %v1073, 0.0
      %v1114 = vmax.f32 %v1075, 0.0
      %v1115 = vmax.f32 %v931, 0.0
      %v1116 = vmax.f32 %v933, 0.0
      %v1117 = vmax.f32 %v1077, 0.0
      %v1118 = vmax.f32 %v1079, 0.0
      %v1119 = vmax.f32 %v937, 0.0
      %v1120 = vmax.f32 %v939, 0.0
      %v1121 = vmax.f32 %v1083, 0.0
      %v1122 = vmax.f32 %v1085, 0.0
      %v1123 = vmax.f32 %v941, 0.0
      %v1124 = vmax.f32 %v943, 0.0
      %v1125 = vmax.f32 %v1087, 0.0
      %v1126 = vmax.f32 %v1089, 0.0
      %v1127 = vmax.f32 %v947, 0.0
      %v1128 = vmax.f32 %v949, 0.0
      %v1129 = vmax.f32 %v1093, 0.0
      %v1130 = vmax.f32 %v1095, 0.0
      %v1131 = vmax.f32 %v951, 0.0
      %v1132 = vmax.f32 %v953, 0.0
      %v1133 = vmax.f32 %v1097, 0.0
      %v1134 = vmax.f32 %v1099, 0.0
      %v1135 = vmax.f32 %v957, 0.0
      %v1136 = vmax.f32 %v959, 0.0
      %v1137 = vmax.f32 %v1103, 0.0
      %v1138 = vmax.f32 %v1105, 0.0
      %v1139 = vmax.f32 %v961, 0.0
      %v1140 = vmax.f32 %v963, 0.0
      %v1141 = vmax.f32 %v1107, 0.0
      %v1142 = vmax.f32 %v1109, 0.0
      %v1143 = vpack.c.bf16 %v1115, %v1111
      %v1144 = vpack.c.bf16 %v1116, %v1112
      %v1145 = vpack.c.bf16 %v1117, %v1113
      %v1146 = vpack.c.bf16 %v1118, %v1114
      %v1147 = vpack.c.bf16 %v1123, %v1119
      %v1148 = vpack.c.bf16 %v1124, %v1120
      %v1149 = vpack.c.bf16 %v1125, %v1121
      %v1150 = vpack.c.bf16 %v1126, %v1122
      %v1151 = vpack.c.bf16 %v1131, %v1127
      %v1152 = vpack.c.bf16 %v1132, %v1128
      %v1153 = vpack.c.bf16 %v1133, %v1129
      %v1154 = vpack.c.bf16 %v1134, %v1130
      %v1155 = vpack.c.bf16 %v1139, %v1135
      %v1156 = vpack.c.bf16 %v1140, %v1136
      %v1157 = vpack.c.bf16 %v1141, %v1137
      %v1158 = vpack.c.bf16 %v1142, %v1138
      %v1175 = vunpack.c.l.b16 %v1143
      %v1176 = vunpack.c.l.b16 %v1144
      %v1177 = vunpack.c.l.b16 %v1145
      %v1178 = vunpack.c.l.b16 %v1146
      %v1179 = vunpack.c.h.b16 %v1143
      %v1180 = vunpack.c.h.b16 %v1144
      %v1181 = vunpack.c.h.b16 %v1145
      %v1182 = vunpack.c.h.b16 %v1146
      %v1183 = vunpack.c.l.b16 %v1147
      %v1184 = vunpack.c.l.b16 %v1148
      %v1185 = vunpack.c.l.b16 %v1149
      %v1186 = vunpack.c.l.b16 %v1150
      %v1187 = vunpack.c.h.b16 %v1147
      %v1188 = vunpack.c.h.b16 %v1148
      %v1189 = vunpack.c.h.b16 %v1149
      %v1190 = vunpack.c.h.b16 %v1150
      %v1191 = vunpack.c.l.b16 %v1151
      %v1192 = vunpack.c.l.b16 %v1152
      %v1193 = vunpack.c.l.b16 %v1153
      %v1194 = vunpack.c.l.b16 %v1154
      %v1195 = vunpack.c.h.b16 %v1151
      %v1196 = vunpack.c.h.b16 %v1152
      %v1197 = vunpack.c.h.b16 %v1153
      %v1198 = vunpack.c.h.b16 %v1154
      %v1199 = vunpack.c.l.b16 %v1155
      %v1200 = vunpack.c.l.b16 %v1156
      %v1201 = vunpack.c.l.b16 %v1157
      %v1202 = vunpack.c.l.b16 %v1158
      %v1203 = vunpack.c.h.b16 %v1155
      %v1204 = vunpack.c.h.b16 %v1156
      %v1205 = vunpack.c.h.b16 %v1157
      %v1206 = vunpack.c.h.b16 %v1158
      %v1207 = vpack.c.b16 %v1176, %v1175
      %v1208 = vpack.c.b16 %v1178, %v1177
      %v1209 = vpack.c.b16 %v1180, %v1179
      %v1210 = vpack.c.b16 %v1182, %v1181
      %v1211 = vpack.c.b16 %v1184, %v1183
      %v1212 = vpack.c.b16 %v1186, %v1185
      %v1213 = vpack.c.b16 %v1188, %v1187
      %v1214 = vpack.c.b16 %v1190, %v1189
      %v1215 = vpack.c.b16 %v1192, %v1191
      %v1216 = vpack.c.b16 %v1194, %v1193
      %v1217 = vpack.c.b16 %v1196, %v1195
      %v1218 = vpack.c.b16 %v1198, %v1197
      %v1219 = vpack.c.b16 %v1200, %v1199
      %v1220 = vpack.c.b16 %v1202, %v1201
      %v1221 = vpack.c.b16 %v1204, %v1203
      %v1222 = vpack.c.b16 %v1206, %v1205
      %1239 = vst [vmem:[%s230] sm:$0xff] %v1207
      %1240 = vst [vmem:[%s230 + $0x8] sm:$0xff] %v1208
      %1241 = vst [vmem:[%s230 + $0x10] sm:$0xff] %v1209
      %1242 = vst [vmem:[%s230 + $0x18] sm:$0xff] %v1210
      %1243 = vst [vmem:[%s230 + $0x20] sm:$0xff] %v1211
      %1244 = vst [vmem:[%s230 + $0x28] sm:$0xff] %v1212
      %1245 = vst [vmem:[%s230 + $0x30] sm:$0xff] %v1213
      %1246 = vst [vmem:[%s230 + $0x38] sm:$0xff] %v1214
      %1247 = vst [vmem:[%s230 + $0x40] sm:$0xff] %v1215
      %1248 = vst [vmem:[%s230 + $0x48] sm:$0xff] %v1216
      %1249 = vst [vmem:[%s230 + $0x50] sm:$0xff] %v1217
      %1250 = vst [vmem:[%s230 + $0x58] sm:$0xff] %v1218
      %1251 = vst [vmem:[%s230 + $0x60] sm:$0xff] %v1219
      %1252 = vst [vmem:[%s230 + $0x68] sm:$0xff] %v1220
      %1253 = vst [vmem:[%s230 + $0x70] sm:$0xff] %v1221
      %1254 = vst [vmem:[%s230 + $0x78] sm:$0xff] %v1222
      %s1255 = smul.u32 8, %s19
      %p1256 = scmp.lt.s32.totalorder %s18, 1
      %s1257 = scalar_select %p1256, %s18, 1
      %p1258 = scmp.lt.s32.totalorder %s1255, 7
      %s1259 = scalar_select %p1258, %s1255, 7
      %s1260 = smul.addr %s1259, 4
      %s1261 = smul.addr %s1257, 32
      %s1262 = sadd.s32 %s1260, %s1261
      %s1263 = smul.addr %s1262, 4
      %s1264 = scalar_lea.vmem %s3, %s1263
      // Predicated region
      $region33: #{reconstruction_forward.3} parent=31 // pred_check
        %p1265 = pneg %p121
      $region34: #{reconstruction_forward.3} parent=31 // pred_check_branch
        %1267 = sbr.rel (%p1265) target = $region36
      $region35: #{reconstruction_forward.3} parent=31 // pred_region
        %s1268 = smul.u32 8, %s19
      $region36: #{reconstruction_forward.3} parent=31 // pred_fallthru
        _
    $region32: #{reconstruction_forward.3} parent=5 // pred_fallthru
      _
    %p1269 = scmp.le.s32.totalorder 2, %s9
    // Predicated region
    $region37: #{reconstruction_forward.3} parent=5 // pred_check
      %p1270 = pneg %p1269
    $region38: #{reconstruction_forward.3} parent=5 // pred_check_branch
      %1272 = sbr.rel (%p1270) target = $region40
    $region39: #{reconstruction_forward.3} parent=5 // pred_region
      %s1273 = ssub.s32 %s9, 2
      // Predicated region
      $region41: #{reconstruction_forward.3} parent=39 // pred_check
        %p1274 = pneg %p127
      $region42: #{reconstruction_forward.3} parent=39 // pred_check_branch
        %1276 = sbr.rel (%p1274) target = $region44
      $region43: #{reconstruction_forward.3} parent=39 // pred_region
        %s1277 = smul.u32 8, %s21
        %p1278 = scmp.lt.s32.totalorder %s20, 1
        %s1279 = scalar_select %p1278, %s20, 1
        %p1280 = scmp.lt.s32.totalorder %s1277, 7
        %s1281 = scalar_select %p1280, %s1277, 7
        %s1282 = smul.addr %s1281, 4
        %s1283 = smul.addr %s1279, 32
        %s1284 = sadd.s32 %s1282, %s1283
        %s1285 = smul.addr %s1284, 4
        %s1286 = scalar_lea.vmem %s3, %s1285
      $region44: #{reconstruction_forward.3} parent=39 // pred_fallthru
        _
    $region40: #{reconstruction_forward.3} parent=5 // pred_fallthru
      _
  $region6: #{reconstruction_forward.3} parent=0 // loop_footer
    %s13 = sadd.s32 1, %s9
  $region7: #{reconstruction_forward.3} parent=0 // loop_footer_branch
    %8 = sbr.rel target = $region3
  $region8: #{reconstruction_forward.3} parent=0 // loop_exit
    _

// kernel: reconstruction_forward.4
$region0: #{reconstruction_forward.4}
  #allocation0 [shape = 'u32[]', space=smem, size = 0x4, offset = 0x4, fixed_abs, tag = 'smem constant byte address 0x4 - core index']
  #allocation1 [shape = 'u32[144,128]{1,0:T(1,128)}', space=vmem, size = 0x12000, scoped, tag = 'internal scratch']
  #allocation2 [shape = 'bf16[320,384]{1,0:T(16,128)(2,1)}', space=vmem, size = 0x3c000, scoped, tag = 'scratch operand']
  #allocation3 [shape = 'f32[256,128]{1,0:T(8,128)}', space=vmem, size = 0x20000, scoped, tag = 'scratch operand']
  #allocation4 [shape = 'f32[1]{0:T(128)S(6)}', space=smem, size = 0x200, scoped, tag = 'scoped memory for reconstruction_forward.4']
  %s0 = inlined_call_operand.vmem [shape: bf16[2,2,336,128], index: 0, kind: input, shape index: {}]
  %s1 = inlined_call_operand.vmem [shape: bf16[3,384,128], index: 1, kind: input, shape index: {}]
  %s2 = inlined_call_operand.vmem [shape: f32[1,128], index: 2, kind: input, shape index: {}]
  %s3 = inlined_call_operand.<no memory space> [shape: f32[1], index: 3, kind: input, shape index: {}]
  %s4 = inlined_call_operand.vmem [shape: bf16[2,512,128], index: 4, kind: output, shape index: {}]
  %s5 = sld [smem:[#allocation0]]
  $region49: #{reconstruction_forward.4} parent=0
    _
  %s7 = ssub.s32 1, %s5
  %s8 = scalar_select 0, %s7, %s5
  %9 = sst [smem:[#allocation4]] %s3
  loop: start=0, step=1, limit=6
  $region2: #{reconstruction_forward.4} parent=0 // loop_pre_header
    _
  $region3: #{reconstruction_forward.4} parent=0 // loop_header
    %s11 = sphi 0, %s15
    %p12 = scmp.ge.s32.totalorder %s11, 6
    %s18 = sphi 0, %s30
    %s19 = sphi 0, %s26
    %s20 = sphi 0, %s18
    %s21 = sphi 0, %s19
    %s22 = sphi 0, %s20
    %s23 = sphi 0, %s21
    %s35 = sphi 0, %s37
    %s38 = sphi 0, %s35
    %s39 = sphi 0, %s38
    %s55 = sphi 0, %s39
    %s59 = sphi 0, %s59
    %s61 = sphi 0, %s59
    %s62 = sphi 0, %s61
    %s76 = sphi 0, %s62
    %s80 = sphi 0, %s80
    %s82 = sphi 0, %s80
    %s83 = sphi 0, %s82
    %s97 = sphi 0, %s83
    %s101 = sphi 0, %s101
    %s103 = sphi 0, %s101
    %s104 = sphi 0, %s103
    %s118 = sphi 0, %s104
    %s126 = sphi 0, %s128
    %s129 = sphi 0, %s126
    %s130 = sphi 0, %s129
    %s146 = sphi 0, %s130
  $region4: #{reconstruction_forward.4} parent=0 // loop_header_branch
    %14 = sbr.rel (%p12) target = $region8
  $region5: #{reconstruction_forward.4} parent=0 // loop_body
    %s16 = ssub.s32 %s11, 1
    %s17 = ssub.s32 %s11, 2
    %s24 = sadd.s32 1, %s19
    %p25 = scmp.ge.s32.totalorder %s24, 2
    %s26 = scalar_select %p25, 0, %s24
    %s27 = sadd.s32 1, %s18
    %s28 = scalar_select %p25, %s27, %s18
    %p29 = scmp.ge.s32.totalorder %s28, 2
    %s30 = scalar_select %p29, 0, %s28
    %s31 = ssub.s32 %s18, %s30
    %s32 = ssub.s32 %s19, %s26
    %s33 = sor.u32 %s31, %s32
    %p34 = scmp.eq.s32.totalorder %s33, 0
    %s36 = sadd.s32 %s35, 1
    %s37 = scalar_select %p34, %s35, %s36
    %p40 = pneg %p34
    %p41 = scmp.eq.s32.totalorder %s11, 3
    %p42 = por %p40, %p41
    %p43 = scmp.ne.s32.totalorder %s35, %s38
    %p44 = scmp.eq.s32.totalorder %s11, 0
    %p45 = por %p43, %p44
    %p46 = scmp.ne.s32.totalorder %s35, %s38
    %p47 = scmp.eq.s32.totalorder %s16, 3
    %p48 = por %p46, %p47
    %p49 = scmp.ne.s32.totalorder %s38, %s39
    %p50 = scmp.eq.s32.totalorder %s16, 0
    %p51 = por %p49, %p50
    %p52 = scmp.ne.s32.totalorder %s38, %s39
    %p53 = scmp.eq.s32.totalorder %s17, 3
    %p54 = por %p52, %p53
    %p56 = scmp.ne.s32.totalorder %s39, %s55
    %p57 = scmp.eq.s32.totalorder %s17, 0
    %p58 = por %p56, %p57
    %s60 = sadd.s32 %s59, 1
    %p63 = scmp.eq.s32.totalorder %s11, 3
    %p64 = scmp.ne.s32.totalorder %s59, %s61
    %p65 = scmp.eq.s32.totalorder %s11, 0
    %p66 = por %p64, %p65
    %p67 = scmp.ne.s32.totalorder %s59, %s61
    %p68 = scmp.eq.s32.totalorder %s16, 3
    %p69 = por %p67, %p68
    %p70 = scmp.ne.s32.totalorder %s61, %s62
    %p71 = scmp.eq.s32.totalorder %s16, 0
    %p72 = por %p70, %p71
    %p73 = scmp.ne.s32.totalorder %s61, %s62
    %p74 = scmp.eq.s32.totalorder %s17, 3
    %p75 = por %p73, %p74
    %p77 = scmp.ne.s32.totalorder %s62, %s76
    %p78 = scmp.eq.s32.totalorder %s17, 0
    %p79 = por %p77, %p78
    %s81 = sadd.s32 %s80, 1
    %p84 = scmp.eq.s32.totalorder %s11, 3
    %p85 = scmp.ne.s32.totalorder %s80, %s82
    %p86 = scmp.eq.s32.totalorder %s11, 0
    %p87 = por %p85, %p86
    %p88 = scmp.ne.s32.totalorder %s80, %s82
    %p89 = scmp.eq.s32.totalorder %s16, 3
    %p90 = por %p88, %p89
    %p91 = scmp.ne.s32.totalorder %s82, %s83
    %p92 = scmp.eq.s32.totalorder %s16, 0
    %p93 = por %p91, %p92
    %p94 = scmp.ne.s32.totalorder %s82, %s83
    %p95 = scmp.eq.s32.totalorder %s17, 3
    %p96 = por %p94, %p95
    %p98 = scmp.ne.s32.totalorder %s83, %s97
    %p99 = scmp.eq.s32.totalorder %s17, 0
    %p100 = por %p98, %p99
    %s102 = sadd.s32 %s101, 1
    %p105 = scmp.eq.s32.totalorder %s11, 3
    %p106 = scmp.ne.s32.totalorder %s101, %s103
    %p107 = scmp.eq.s32.totalorder %s11, 0
    %p108 = por %p106, %p107
    %p109 = scmp.ne.s32.totalorder %s101, %s103
    %p110 = scmp.eq.s32.totalorder %s16, 3
    %p111 = por %p109, %p110
    %p112 = scmp.ne.s32.totalorder %s103, %s104
    %p113 = scmp.eq.s32.totalorder %s16, 0
    %p114 = por %p112, %p113
    %p115 = scmp.ne.s32.totalorder %s103, %s104
    %p116 = scmp.eq.s32.totalorder %s17, 3
    %p117 = por %p115, %p116
    %p119 = scmp.ne.s32.totalorder %s104, %s118
    %p120 = scmp.eq.s32.totalorder %s17, 0
    %p121 = por %p119, %p120
    %s122 = ssub.s32 %s18, %s30
    %s123 = ssub.s32 %s19, %s26
    %s124 = sor.u32 %s122, %s123
    %p125 = scmp.eq.s32.totalorder %s124, 0
    %s127 = sadd.s32 %s126, 1
    %s128 = scalar_select %p125, %s126, %s127
    %p131 = pneg %p125
    %p132 = scmp.eq.s32.totalorder %s11, 3
    %p133 = por %p131, %p132
    %p134 = scmp.ne.s32.totalorder %s126, %s129
    %p135 = scmp.eq.s32.totalorder %s11, 0
    %p136 = por %p134, %p135
    %p137 = scmp.ne.s32.totalorder %s126, %s129
    %p138 = scmp.eq.s32.totalorder %s16, 3
    %p139 = por %p137, %p138
    %p140 = scmp.ne.s32.totalorder %s129, %s130
    %p141 = scmp.eq.s32.totalorder %s16, 0
    %p142 = por %p140, %p141
    %p143 = scmp.ne.s32.totalorder %s129, %s130
    %p144 = scmp.eq.s32.totalorder %s17, 3
    %p145 = por %p143, %p144
    %p147 = scmp.ne.s32.totalorder %s130, %s146
    %p148 = scmp.eq.s32.totalorder %s17, 0
    %p149 = por %p147, %p148
    %p150 = scmp.le.s32.totalorder 1, %s11
    %p151 = scmp.lt.s32.totalorder %s11, 5
    %p152 = pnand %p150, %p151
    %p153 = pneg %p152
    // Predicated region
    $region9: #{reconstruction_forward.4} parent=5 // pred_check
      _
    $region10: #{reconstruction_forward.4} parent=5 // pred_check_branch
      %155 = sbr.rel (%p152) target = $region12
    $region11: #{reconstruction_forward.4} parent=5 // pred_region
      %s156 = ssub.s32 %s11, 1
      // Predicated region
      $region13: #{reconstruction_forward.4} parent=11 // pred_check
        %p157 = pneg %p72
      $region14: #{reconstruction_forward.4} parent=11 // pred_check_branch
        %159 = sbr.rel (%p157) target = $region16
      $region15: #{reconstruction_forward.4} parent=11 // pred_region
        _
      $region16: #{reconstruction_forward.4} parent=11 // pred_fallthru
        _
      // Predicated region
      $region17: #{reconstruction_forward.4} parent=11 // pred_check
        %p160 = pneg %p93
      $region18: #{reconstruction_forward.4} parent=11 // pred_check_branch
        %162 = sbr.rel (%p160) target = $region20
      $region19: #{reconstruction_forward.4} parent=11 // pred_region
        _
      $region20: #{reconstruction_forward.4} parent=11 // pred_fallthru
        _
      // Predicated region
      $region21: #{reconstruction_forward.4} parent=11 // pred_check
        %p163 = pneg %p114
      $region22: #{reconstruction_forward.4} parent=11 // pred_check_branch
        %165 = sbr.rel (%p163) target = $region24
      $region23: #{reconstruction_forward.4} parent=11 // pred_region
        _
      $region24: #{reconstruction_forward.4} parent=11 // pred_fallthru
        _
    $region12: #{reconstruction_forward.4} parent=5 // pred_fallthru
      _
    %p166 = scmp.lt.s32.totalorder %s11, 4
    // Predicated region
    $region25: #{reconstruction_forward.4} parent=5 // pred_check
      %p167 = pneg %p166
    $region26: #{reconstruction_forward.4} parent=5 // pred_check_branch
      %169 = sbr.rel (%p167) target = $region28
    $region27: #{reconstruction_forward.4} parent=5 // pred_region
      // Predicated region
      $region29: #{reconstruction_forward.4} parent=27 // pred_check
        %p170 = pneg %p45
      $region30: #{reconstruction_forward.4} parent=27 // pred_check_branch
        %172 = sbr.rel (%p170) target = $region32
      $region31: #{reconstruction_forward.4} parent=27 // pred_region
        %p173 = scmp.lt.s32.totalorder %s18, 1
        %s174 = scalar_select %p173, %s18, 1
        %p175 = scmp.lt.s32.totalorder %s19, 1
        %s176 = scalar_select %p175, %s19, 1
        %s177 = smul.addr %s176, 42
        %s178 = smul.addr %s174, 84
        %s179 = sadd.s32 %s177, %s178
        %s180 = smul.addr %s179, 4
        %s181 = scalar_lea.vmem %s0, %s180
      $region32: #{reconstruction_forward.4} parent=27 // pred_fallthru
        _
    $region28: #{reconstruction_forward.4} parent=5 // pred_fallthru
      _
    %p182 = scmp.le.s32.totalorder 1, %s11
    %p183 = scmp.lt.s32.totalorder %s11, 5
    %p184 = pnand %p182, %p183
    %p185 = pneg %p184
    // Predicated region
    $region33: #{reconstruction_forward.4} parent=5 // pred_check
      _
    $region34: #{reconstruction_forward.4} parent=5 // pred_check_branch
      %187 = sbr.rel (%p184) target = $region36
    $region35: #{reconstruction_forward.4} parent=5 // pred_region
      %s188 = ssub.s32 %s11, 1
      %p189 = scmp.lt.s32.totalorder %s20, 1
      %s190 = scalar_select %p189, %s20, 1
      %p191 = scmp.lt.s32.totalorder %s21, 1
      %s192 = scalar_select %p191, %s21, 1
      %s193 = smul.addr %s192, 42
      %s194 = smul.addr %s190, 84
      %s195 = sadd.s32 %s193, %s194
      %s196 = smul.addr %s195, 4
      %s197 = scalar_lea.vmem %s0, %s196
      %p198 = pneg %p51
      %p199 = pneg %p48
      %p200 = pneg %p72
      %p201 = pneg %p69
      %p202 = pneg %p93
      %p203 = pneg %p90
      %p204 = pneg %p114
      %p205 = pneg %p111
      %p206 = pneg %p142
      %p207 = pneg %p139
      %s208 = smul.u32 32, %s21
      %p209 = scmp.lt.s32.totalorder %s20, 1
      %s210 = scalar_select %p209, %s20, 1
      %p211 = scmp.lt.s32.totalorder %s208, 63
      %s212 = scalar_select %p211, %s208, 63
      %s213 = smul.addr %s210, 64
      %s214 = sadd.s32 %s212, %s213
      %s215 = smul.addr %s214, 4
      %s216 = scalar_lea.vmem %s4, %s215
      %p217 = scmp.lt.s32.totalorder %s20, 1
      %s218 = scalar_select %p217, %s20, 1
      %p219 = scmp.lt.s32.totalorder %s21, 1
      %s220 = scalar_select %p219, %s21, 1
      %s221 = smul.addr %s220, 42
      %s222 = smul.addr %s218, 84
      %s223 = sadd.s32 %s221, %s222
      %s224 = smul.addr %s223, 4
      %s225 = scalar_lea.vmem %s0, %s224
      %s226 = smul.u32 32, %s21
      %p227 = scmp.lt.s32.totalorder %s20, 1
      %s228 = scalar_select %p227, %s20, 1
      %p229 = scmp.lt.s32.totalorder %s226, 63
      %s230 = scalar_select %p229, %s226, 63
      %s231 = smul.addr %s228, 64
      %s232 = sadd.s32 %s230, %s231
      %s233 = smul.addr %s232, 4
      %s234 = scalar_lea.vmem %s4, %s233
      %s235 = smul.u32 32, %s21
      %v237 = vld [vmem:[%s225] sm:$0xf]
      %v238 = vld [vmem:[%s225 + $0x4] sm:$0xf]
      %v239 = vld [vmem:[%s225 + $0x8] sm:$0xf]
      %v240 = vld [vmem:[%s225 + $0xc] sm:$0xf]
      %v241 = vld [vmem:[%s225 + $0x10] sm:$0xf]
      %v242 = vld [vmem:[%s225 + $0x14] sm:$0xf]
      %v243 = vld [vmem:[%s225 + $0x18] sm:$0xf]
      %v244 = vld [vmem:[%s225 + $0x1c] sm:$0xf]
      %v245 = vld [vmem:[%s225 + $0x20] sm:$0xf]
      %v246 = vld [vmem:[%s225 + $0x24] sm:$0xf]
      %v247 = vld [vmem:[%s225 + $0x28] sm:$0xf]
      %v248 = vld [vmem:[%s225 + $0x2c] sm:$0xf]
      %v249 = vld [vmem:[%s225 + $0x30] sm:$0xf]
      %v250 = vld [vmem:[%s225 + $0x34] sm:$0xf]
      %v251 = vld [vmem:[%s225 + $0x38] sm:$0xf]
      %v252 = vld [vmem:[%s225 + $0x3c] sm:$0xf]
      %v253 = vld [vmem:[%s225 + $0x40] sm:$0xf]
      %v254 = vld [vmem:[%s225 + $0x44] sm:$0xf]
      %v255 = vld [vmem:[%s225 + $0x48] sm:$0xf]
      %v256 = vld [vmem:[%s225 + $0x4c] sm:$0xf]
      %v257 = vld [vmem:[%s225 + $0x50] sm:$0xf]
      %v258 = vld [vmem:[%s225 + $0x54] sm:$0xf]
      %v259 = vld [vmem:[%s225 + $0x58] sm:$0xf]
      %v260 = vld [vmem:[%s225 + $0x5c] sm:$0xf]
      %v261 = vld [vmem:[%s225 + $0x60] sm:$0xf]
      %v262 = vld [vmem:[%s225 + $0x64] sm:$0xf]
      %v263 = vld [vmem:[%s225 + $0x68] sm:$0xf]
      %v264 = vld [vmem:[%s225 + $0x6c] sm:$0xf]
      %v265 = vld [vmem:[%s225 + $0x70] sm:$0xf]
      %v266 = vld [vmem:[%s225 + $0x74] sm:$0xf]
      %v267 = vld [vmem:[%s225 + $0x78] sm:$0xf]
      %v268 = vld [vmem:[%s225 + $0x7c] sm:$0xf]
      %v269 = vld [vmem:[%s225 + $0x80] sm:$0xf]
      %v270 = vld [vmem:[%s225 + $0x84] sm:$0xf]
      %v271 = vld [vmem:[%s225 + $0x88] sm:$0xf]
      %v272 = vld [vmem:[%s225 + $0x8c] sm:$0xf]
      %v273 = vld [vmem:[%s225 + $0x90] sm:$0xf]
      %v274 = vld [vmem:[%s225 + $0x94] sm:$0xf]
      %v275 = vld [vmem:[%s225 + $0x98] sm:$0xf]
      %v276 = vld [vmem:[%s225 + $0x9c] sm:$0xf]
      %v277 = vld [vmem:[%s225 + $0xa0] sm:$0xf]
      %v318 = vunpack.c.l.b16 %v237
      %v319 = vunpack.c.l.b16 %v238
      %v320 = vunpack.c.l.b16 %v239
      %v321 = vunpack.c.l.b16 %v240
      %v322 = vunpack.c.l.b16 %v241
      %v323 = vunpack.c.l.b16 %v242
      %v324 = vunpack.c.l.b16 %v243
      %v325 = vunpack.c.l.b16 %v244
      %v326 = vunpack.c.l.b16 %v245
      %v327 = vunpack.c.l.b16 %v246
      %v328 = vunpack.c.l.b16 %v247
      %v329 = vunpack.c.l.b16 %v248
      %v330 = vunpack.c.l.b16 %v249
      %v331 = vunpack.c.l.b16 %v250
      %v332 = vunpack.c.l.b16 %v251
      %v333 = vunpack.c.l.b16 %v252
      %v334 = vunpack.c.l.b16 %v253
      %v335 = vunpack.c.l.b16 %v254
      %v336 = vunpack.c.l.b16 %v255
      %v337 = vunpack.c.l.b16 %v256
      %v338 = vunpack.c.l.b16 %v257
      %v339 = vunpack.c.l.b16 %v258
      %v340 = vunpack.c.l.b16 %v259
      %v341 = vunpack.c.l.b16 %v260
      %v342 = vunpack.c.l.b16 %v261
      %v343 = vunpack.c.l.b16 %v262
      %v344 = vunpack.c.l.b16 %v263
      %v345 = vunpack.c.l.b16 %v264
      %v346 = vunpack.c.l.b16 %v265
      %v347 = vunpack.c.l.b16 %v266
      %v348 = vunpack.c.l.b16 %v267
      %v349 = vunpack.c.l.b16 %v268
      %v350 = vunpack.c.l.b16 %v269
      %v351 = vunpack.c.l.b16 %v270
      %v352 = vunpack.c.l.b16 %v271
      %v353 = vunpack.c.l.b16 %v272
      %v354 = vunpack.c.l.b16 %v273
      %v355 = vunpack.c.l.b16 %v274
      %v356 = vunpack.c.l.b16 %v275
      %v357 = vunpack.c.l.b16 %v276
      %v358 = vpack.c.b16 %v319, %v318
      %v359 = vpack.c.b16 %v321, %v320
      %v360 = vpack.c.b16 %v323, %v322
      %v361 = vpack.c.b16 %v325, %v324
      %v362 = vpack.c.b16 %v327, %v326
      %v363 = vpack.c.b16 %v329, %v328
      %v364 = vpack.c.b16 %v331, %v330
      %v365 = vpack.c.b16 %v333, %v332
      %v366 = vpack.c.b16 %v335, %v334
      %v367 = vpack.c.b16 %v337, %v336
      %v368 = vpack.c.b16 %v339, %v338
      %v369 = vpack.c.b16 %v341, %v340
      %v370 = vpack.c.b16 %v343, %v342
      %v371 = vpack.c.b16 %v345, %v344
      %v372 = vpack.c.b16 %v347, %v346
      %v373 = vpack.c.b16 %v349, %v348
      %v374 = vpack.c.b16 %v351, %v350
      %v375 = vpack.c.b16 %v353, %v352
      %v376 = vpack.c.b16 %v355, %v354
      %v377 = vpack.c.b16 %v357, %v356
      %398 = vst [vmem:[#allocation2] sm:$0xff] %v358
      %399 = vst [vmem:[#allocation2 + $0x18] sm:$0xff] %v359
      %400 = vst [vmem:[#allocation2 + $0x30] sm:$0xff] %v360
      %401 = vst [vmem:[#allocation2 + $0x48] sm:$0xff] %v361
      %402 = vst [vmem:[#allocation2 + $0x60] sm:$0xff] %v362
      %403 = vst [vmem:[#allocation2 + $0x78] sm:$0xff] %v363
      %404 = vst [vmem:[#allocation2 + $0x90] sm:$0xff] %v364
      %405 = vst [vmem:[#allocation2 + $0xa8] sm:$0xff] %v365
      %406 = vst [vmem:[#allocation2 + $0xc0] sm:$0xff] %v366
      %407 = vst [vmem:[#allocation2 + $0xd8] sm:$0xff] %v367
      %408 = vst [vmem:[#allocation2 + $0xf0] sm:$0xff] %v368
      %409 = vst [vmem:[#allocation2 + $0x108] sm:$0xff] %v369
      %410 = vst [vmem:[#allocation2 + $0x120] sm:$0xff] %v370
      %411 = vst [vmem:[#allocation2 + $0x138] sm:$0xff] %v371
      %412 = vst [vmem:[#allocation2 + $0x150] sm:$0xff] %v372
      %413 = vst [vmem:[#allocation2 + $0x168] sm:$0xff] %v373
      %414 = vst [vmem:[#allocation2 + $0x180] sm:$0xff] %v374
      %415 = vst [vmem:[#allocation2 + $0x198] sm:$0xff] %v375
      %416 = vst [vmem:[#allocation2 + $0x1b0] sm:$0xff] %v376
      %417 = vst [vmem:[#allocation2 + $0x1c8] sm:$0xff] %v377
      %v419 = vunpack.c.l.b16 %v277
      %v420 = vpack.c.b16 %v419, %v419
      %vm421 = vsmask.f32 7424
      %v423 = vshrl.u32 %v358, 16
      %v425 = vshll.u32 %v358, 16
      %v427 = vrot.slane %v425, 1
      %v428 = vor.u32 %v423, %v427
      %v430 = vshll.u32 %v359, 16
      %v432 = vrot.slane %v430, 1
      %v433 = vsel %vm421, %v428, %v432
      %v434 = vshrl.u32 %v359, 16
      %v436 = vor.u32 %v434, %v432
      %v438 = vshll.u32 %v360, 16
      %v440 = vrot.slane %v438, 1
      %v441 = vsel %vm421, %v436, %v440
      %v442 = vshrl.u32 %v360, 16
      %v444 = vor.u32 %v442, %v440
      %v446 = vshll.u32 %v361, 16
      %v448 = vrot.slane %v446, 1
      %v449 = vsel %vm421, %v444, %v448
      %v450 = vshrl.u32 %v361, 16
      %v452 = vor.u32 %v450, %v448
      %v454 = vshll.u32 %v362, 16
      %v456 = vrot.slane %v454, 1
      %v457 = vsel %vm421, %v452, %v456
      %v458 = vshrl.u32 %v362, 16
      %v460 = vor.u32 %v458, %v456
      %v462 = vshll.u32 %v363, 16
      %v464 = vrot.slane %v462, 1
      %v465 = vsel %vm421, %v460, %v464
      %v466 = vshrl.u32 %v363, 16
      %v468 = vor.u32 %v466, %v464
      %v470 = vshll.u32 %v364, 16
      %v472 = vrot.slane %v470, 1
      %v473 = vsel %vm421, %v468, %v472
      %v474 = vshrl.u32 %v364, 16
      %v476 = vor.u32 %v474, %v472
      %v478 = vshll.u32 %v365, 16
      %v480 = vrot.slane %v478, 1
      %v481 = vsel %vm421, %v476, %v480
      %v482 = vshrl.u32 %v365, 16
      %v484 = vor.u32 %v482, %v480
      %v486 = vshll.u32 %v366, 16
      %v488 = vrot.slane %v486, 1
      %v489 = vsel %vm421, %v484, %v488
      %v490 = vshrl.u32 %v366, 16
      %v492 = vor.u32 %v490, %v488
      %v494 = vshll.u32 %v367, 16
      %v496 = vrot.slane %v494, 1
      %v497 = vsel %vm421, %v492, %v496
      %v498 = vshrl.u32 %v367, 16
      %v500 = vor.u32 %v498, %v496
      %v502 = vshll.u32 %v368, 16
      %v504 = vrot.slane %v502, 1
      %v505 = vsel %vm421, %v500, %v504
      %v506 = vshrl.u32 %v368, 16
      %v508 = vor.u32 %v506, %v504
      %v510 = vshll.u32 %v369, 16
      %v512 = vrot.slane %v510, 1
      %v513 = vsel %vm421, %v508, %v512
      %v514 = vshrl.u32 %v369, 16
      %v516 = vor.u32 %v514, %v512
      %v518 = vshll.u32 %v370, 16
      %v520 = vrot.slane %v518, 1
      %v521 = vsel %vm421, %v516, %v520
      %v522 = vshrl.u32 %v370, 16
      %v524 = vor.u32 %v522, %v520
      %v526 = vshll.u32 %v371, 16
      %v528 = vrot.slane %v526, 1
      %v529 = vsel %vm421, %v524, %v528
      %v530 = vshrl.u32 %v371, 16
      %v532 = vor.u32 %v530, %v528
      %v534 = vshll.u32 %v372, 16
      %v536 = vrot.slane %v534, 1
      %v537 = vsel %vm421, %v532, %v536
      %v538 = vshrl.u32 %v372, 16
      %v540 = vor.u32 %v538, %v536
      %v542 = vshll.u32 %v373, 16
      %v544 = vrot.slane %v542, 1
      %v545 = vsel %vm421, %v540, %v544
      %v546 = vshrl.u32 %v373, 16
      %v548 = vor.u32 %v546, %v544
      %v550 = vshll.u32 %v374, 16
      %v552 = vrot.slane %v550, 1
      %v553 = vsel %vm421, %v548, %v552
      %v554 = vshrl.u32 %v374, 16
      %v556 = vor.u32 %v554, %v552
      %v558 = vshll.u32 %v375, 16
      %v560 = vrot.slane %v558, 1
      %v561 = vsel %vm421, %v556, %v560
      %v562 = vshrl.u32 %v375, 16
      %v564 = vor.u32 %v562, %v560
      %v566 = vshll.u32 %v376, 16
      %v568 = vrot.slane %v566, 1
      %v569 = vsel %vm421, %v564, %v568
      %v570 = vshrl.u32 %v376, 16
      %v572 = vor.u32 %v570, %v568
      %v574 = vshll.u32 %v377, 16
      %v576 = vrot.slane %v574, 1
      %v577 = vsel %vm421, %v572, %v576
      %v578 = vshrl.u32 %v377, 16
      %v580 = vor.u32 %v578, %v576
      %v582 = vshll.u32 %v420, 16
      %v584 = vrot.slane %v582, 1
      %v585 = vsel %vm421, %v580, %v584
      %606 = vst [vmem:[#allocation2 + $0x8] sm:$0xff] %v433
      %607 = vst [vmem:[#allocation2 + $0x20] sm:$0xff] %v441
      %608 = vst [vmem:[#allocation2 + $0x38] sm:$0xff] %v449
      %609 = vst [vmem:[#allocation2 + $0x50] sm:$0xff] %v457
      %610 = vst [vmem:[#allocation2 + $0x68] sm:$0xff] %v465
      %611 = vst [vmem:[#allocation2 + $0x80] sm:$0xff] %v473
      %612 = vst [vmem:[#allocation2 + $0x98] sm:$0xff] %v481
      %613 = vst [vmem:[#allocation2 + $0xb0] sm:$0xff] %v489
      %614 = vst [vmem:[#allocation2 + $0xc8] sm:$0xff] %v497
      %615 = vst [vmem:[#allocation2 + $0xe0] sm:$0xff] %v505
      %616 = vst [vmem:[#allocation2 + $0xf8] sm:$0xff] %v513
      %617 = vst [vmem:[#allocation2 + $0x110] sm:$0xff] %v521
      %618 = vst [vmem:[#allocation2 + $0x128] sm:$0xff] %v529
      %619 = vst [vmem:[#allocation2 + $0x140] sm:$0xff] %v537
      %620 = vst [vmem:[#allocation2 + $0x158] sm:$0xff] %v545
      %621 = vst [vmem:[#allocation2 + $0x170] sm:$0xff] %v553
      %622 = vst [vmem:[#allocation2 + $0x188] sm:$0xff] %v561
      %623 = vst [vmem:[#allocation2 + $0x1a0] sm:$0xff] %v569
      %624 = vst [vmem:[#allocation2 + $0x1b8] sm:$0xff] %v577
      %625 = vst [vmem:[#allocation2 + $0x1d0] sm:$0xff] %v585
      %vm626 = vcmask 1046528
      %v627 = vrot.slane %v358, 1
      %v628 = vrot.slane %v359, 1
      %v629 = vsel %vm626, %v627, %v628
      %v630 = vrot.slane %v360, 1
      %v631 = vsel %vm626, %v628, %v630
      %v632 = vrot.slane %v361, 1
      %v633 = vsel %vm626, %v630, %v632
      %v634 = vrot.slane %v362, 1
      %v635 = vsel %vm626, %v632, %v634
      %v636 = vrot.slane %v363, 1
      %v637 = vsel %vm626, %v634, %v636
      %v638 = vrot.slane %v364, 1
      %v639 = vsel %vm626, %v636, %v638
      %v640 = vrot.slane %v365, 1
      %v641 = vsel %vm626, %v638, %v640
      %v642 = vrot.slane %v366, 1
      %v643 = vsel %vm626, %v640, %v642
      %v644 = vrot.slane %v367, 1
      %v645 = vsel %vm626, %v642, %v644
      %v646 = vrot.slane %v368, 1
      %v647 = vsel %vm626, %v644, %v646
      %v648 = vrot.slane %v369, 1
      %v649 = vsel %vm626, %v646, %v648
      %v650 = vrot.slane %v370, 1
      %v651 = vsel %vm626, %v648, %v650
      %v652 = vrot.slane %v371, 1
      %v653 = vsel %vm626, %v650, %v652
      %v654 = vrot.slane %v372, 1
      %v655 = vsel %vm626, %v652, %v654
      %v656 = vrot.slane %v373, 1
      %v657 = vsel %vm626, %v654, %v656
      %v658 = vrot.slane %v374, 1
      %v659 = vsel %vm626, %v656, %v658
      %v660 = vrot.slane %v375, 1
      %v661 = vsel %vm626, %v658, %v660
      %v662 = vrot.slane %v376, 1
      %v663 = vsel %vm626, %v660, %v662
      %v664 = vrot.slane %v377, 1
      %v665 = vsel %vm626, %v662, %v664
      %v666 = vrot.slane %v420, 1
      %v667 = vsel %vm626, %v664, %v666
      %688 = vst [vmem:[#allocation2 + $0x10] sm:$0xff] %v629
      %689 = vst [vmem:[#allocation2 + $0x28] sm:$0xff] %v631
      %690 = vst [vmem:[#allocation2 + $0x40] sm:$0xff] %v633
      %691 = vst [vmem:[#allocation2 + $0x58] sm:$0xff] %v635
      %692 = vst [vmem:[#allocation2 + $0x70] sm:$0xff] %v637
      %693 = vst [vmem:[#allocation2 + $0x88] sm:$0xff] %v639
      %694 = vst [vmem:[#allocation2 + $0xa0] sm:$0xff] %v641
      %695 = vst [vmem:[#allocation2 + $0xb8] sm:$0xff] %v643
      %696 = vst [vmem:[#allocation2 + $0xd0] sm:$0xff] %v645
      %697 = vst [vmem:[#allocation2 + $0xe8] sm:$0xff] %v647
      %698 = vst [vmem:[#allocation2 + $0x100] sm:$0xff] %v649
      %699 = vst [vmem:[#allocation2 + $0x118] sm:$0xff] %v651
      %700 = vst [vmem:[#allocation2 + $0x130] sm:$0xff] %v653
      %701 = vst [vmem:[#allocation2 + $0x148] sm:$0xff] %v655
      %702 = vst [vmem:[#allocation2 + $0x160] sm:$0xff] %v657
      %703 = vst [vmem:[#allocation2 + $0x178] sm:$0xff] %v659
      %704 = vst [vmem:[#allocation2 + $0x190] sm:$0xff] %v661
      %705 = vst [vmem:[#allocation2 + $0x1a8] sm:$0xff] %v663
      %706 = vst [vmem:[#allocation2 + $0x1c0] sm:$0xff] %v665
      %707 = vst [vmem:[#allocation2 + $0x1d8] sm:$0xff] %v667
      %v708 = vld [vmem:[#allocation2] sm:$0xff]
      %v709 = vld [vmem:[#allocation2 + $0x8] sm:$0xff]
      %v710 = vld [vmem:[#allocation2 + $0x10] sm:$0xff]
      %v711 = vld [vmem:[#allocation2 + $0x18] sm:$0xff]
      %v712 = vld [vmem:[#allocation2 + $0x20] sm:$0xff]
      %v713 = vld [vmem:[#allocation2 + $0x28] sm:$0xff]
      %v714 = vld [vmem:[#allocation2 + $0x30] sm:$0xff]
      %v715 = vld [vmem:[#allocation2 + $0x38] sm:$0xff]
      %v716 = vld [vmem:[#allocation2 + $0x40] sm:$0xff]
      %v717 = vld [vmem:[#allocation2 + $0x48] sm:$0xff]
      %v718 = vld [vmem:[#allocation2 + $0x50] sm:$0xff]
      %v719 = vld [vmem:[#allocation2 + $0x58] sm:$0xff]
      %v720 = vld [vmem:[#allocation2 + $0x60] sm:$0xff]
      %v721 = vld [vmem:[#allocation2 + $0x68] sm:$0xff]
      %v722 = vld [vmem:[#allocation2 + $0x70] sm:$0xff]
      %v723 = vld [vmem:[#allocation2 + $0x78] sm:$0xff]
      %v724 = vld [vmem:[#allocation2 + $0x80] sm:$0xff]
      %v725 = vld [vmem:[#allocation2 + $0x88] sm:$0xff]
      %v726 = vld [vmem:[#allocation2 + $0x90] sm:$0xff]
      %v727 = vld [vmem:[#allocation2 + $0x98] sm:$0xff]
      %v728 = vld [vmem:[#allocation2 + $0xa0] sm:$0xff]
      %v729 = vld [vmem:[#allocation2 + $0xa8] sm:$0xff]
      %v730 = vld [vmem:[#allocation2 + $0xb0] sm:$0xff]
      %v731 = vld [vmem:[#allocation2 + $0xb8] sm:$0xff]
      %v732 = vld [vmem:[#allocation2 + $0xc0] sm:$0xff]
      %v733 = vld [vmem:[#allocation2 + $0xc8] sm:$0xff]
      %v734 = vld [vmem:[#allocation2 + $0xd0] sm:$0xff]
      %v735 = vld [vmem:[#allocation2 + $0xd8] sm:$0xff]
      %v736 = vld [vmem:[#allocation2 + $0xe0] sm:$0xff]
      %v737 = vld [vmem:[#allocation2 + $0xe8] sm:$0xff]
      %v738 = vld [vmem:[#allocation2 + $0xf0] sm:$0xff]
      %v739 = vld [vmem:[#allocation2 + $0xf8] sm:$0xff]
      %v740 = vld [vmem:[#allocation2 + $0x100] sm:$0xff]
      %v741 = vld [vmem:[#allocation2 + $0x108] sm:$0xff]
      %v742 = vld [vmem:[#allocation2 + $0x110] sm:$0xff]
      %v743 = vld [vmem:[#allocation2 + $0x118] sm:$0xff]
      %v744 = vld [vmem:[#allocation2 + $0x120] sm:$0xff]
      %v745 = vld [vmem:[#allocation2 + $0x128] sm:$0xff]
      %v746 = vld [vmem:[#allocation2 + $0x130] sm:$0xff]
      %v747 = vld [vmem:[#allocation2 + $0x138] sm:$0xff]
      %v748 = vld [vmem:[#allocation2 + $0x140] sm:$0xff]
      %v749 = vld [vmem:[#allocation2 + $0x148] sm:$0xff]
      %v750 = vld [vmem:[#allocation2 + $0x150] sm:$0xff]
      %v751 = vld [vmem:[#allocation2 + $0x158] sm:$0xff]
      %v752 = vld [vmem:[#allocation2 + $0x160] sm:$0xff]
      %v753 = vld [vmem:[#allocation2 + $0x168] sm:$0xff]
      %v754 = vld [vmem:[#allocation2 + $0x170] sm:$0xff]
      %v755 = vld [vmem:[#allocation2 + $0x178] sm:$0xff]
      %v756 = vld [vmem:[%s1] sm:$0xf]
      %v757 = vld [vmem:[%s1 + $0x4] sm:$0xf]
      %v758 = vld [vmem:[%s1 + $0x8] sm:$0xf]
      %v759 = vld [vmem:[%s1 + $0xc] sm:$0xf]
      %v760 = vld [vmem:[%s1 + $0x10] sm:$0xf]
      %v761 = vld [vmem:[%s1 + $0x14] sm:$0xf]
      %v762 = vld [vmem:[%s1 + $0x18] sm:$0xf]
      %v763 = vld [vmem:[%s1 + $0x1c] sm:$0xf]
      %v764 = vld [vmem:[%s1 + $0x20] sm:$0xf]
      %v765 = vld [vmem:[%s1 + $0x24] sm:$0xf]
      %v766 = vld [vmem:[%s1 + $0x28] sm:$0xf]
      %v767 = vld [vmem:[%s1 + $0x2c] sm:$0xf]
      %v768 = vld [vmem:[%s1 + $0x30] sm:$0xf]
      %v769 = vld [vmem:[%s1 + $0x34] sm:$0xf]
      %v770 = vld [vmem:[%s1 + $0x38] sm:$0xf]
      %v771 = vld [vmem:[%s1 + $0x3c] sm:$0xf]
      %v772 = vld [vmem:[%s1 + $0x40] sm:$0xf]
      %v773 = vld [vmem:[%s1 + $0x44] sm:$0xf]
      %v774 = vld [vmem:[%s1 + $0x48] sm:$0xf]
      %v775 = vld [vmem:[%s1 + $0x4c] sm:$0xf]
      %v776 = vld [vmem:[%s1 + $0x50] sm:$0xf]
      %v777 = vld [vmem:[%s1 + $0x54] sm:$0xf]
      %v778 = vld [vmem:[%s1 + $0x58] sm:$0xf]
      %v779 = vld [vmem:[%s1 + $0x5c] sm:$0xf]
      %v780 = vld [vmem:[%s1 + $0x60] sm:$0xf]
      %v781 = vld [vmem:[%s1 + $0x64] sm:$0xf]
      %v782 = vld [vmem:[%s1 + $0x68] sm:$0xf]
      %v783 = vld [vmem:[%s1 + $0x6c] sm:$0xf]
      %v784 = vld [vmem:[%s1 + $0x70] sm:$0xf]
      %v785 = vld [vmem:[%s1 + $0x74] sm:$0xf]
      %v786 = vld [vmem:[%s1 + $0x78] sm:$0xf]
      %v787 = vld [vmem:[%s1 + $0x7c] sm:$0xf]
      %v788 = vld [vmem:[%s1 + $0x80] sm:$0xf]
      %v789 = vld [vmem:[%s1 + $0x84] sm:$0xf]
      %v790 = vld [vmem:[%s1 + $0x88] sm:$0xf]
      %v791 = vld [vmem:[%s1 + $0x8c] sm:$0xf]
      %v792 = vld [vmem:[%s1 + $0x90] sm:$0xf]
      %v793 = vld [vmem:[%s1 + $0x94] sm:$0xf]
      %v794 = vld [vmem:[%s1 + $0x98] sm:$0xf]
      %v795 = vld [vmem:[%s1 + $0x9c] sm:$0xf]
      %v796 = vld [vmem:[%s1 + $0xa0] sm:$0xf]
      %v797 = vld [vmem:[%s1 + $0xa4] sm:$0xf]
      %v798 = vld [vmem:[%s1 + $0xa8] sm:$0xf]
      %v799 = vld [vmem:[%s1 + $0xac] sm:$0xf]
      %v800 = vld [vmem:[%s1 + $0xb0] sm:$0xf]
      %v801 = vld [vmem:[%s1 + $0xb4] sm:$0xf]
      %v802 = vld [vmem:[%s1 + $0xb8] sm:$0xf]
      %v803 = vld [vmem:[%s1 + $0xbc] sm:$0xf]
      %v852 = vunpack.c.l.b16 %v756
      %v853 = vunpack.c.l.b16 %v757
      %v854 = vunpack.c.l.b16 %v758
      %v855 = vunpack.c.l.b16 %v759
      %v856 = vunpack.c.l.b16 %v760
      %v857 = vunpack.c.l.b16 %v761
      %v858 = vunpack.c.l.b16 %v762
      %v859 = vunpack.c.l.b16 %v763
      %v860 = vunpack.c.l.b16 %v764
      %v861 = vunpack.c.l.b16 %v765
      %v862 = vunpack.c.l.b16 %v766
      %v863 = vunpack.c.l.b16 %v767
      %v864 = vunpack.c.l.b16 %v768
      %v865 = vunpack.c.l.b16 %v769
      %v866 = vunpack.c.l.b16 %v770
      %v867 = vunpack.c.l.b16 %v771
      %v868 = vunpack.c.l.b16 %v772
      %v869 = vunpack.c.l.b16 %v773
      %v870 = vunpack.c.l.b16 %v774
      %v871 = vunpack.c.l.b16 %v775
      %v872 = vunpack.c.l.b16 %v776
      %v873 = vunpack.c.l.b16 %v777
      %v874 = vunpack.c.l.b16 %v778
      %v875 = vunpack.c.l.b16 %v779
      %v876 = vunpack.c.l.b16 %v780
      %v877 = vunpack.c.l.b16 %v781
      %v878 = vunpack.c.l.b16 %v782
      %v879 = vunpack.c.l.b16 %v783
      %v880 = vunpack.c.l.b16 %v784
      %v881 = vunpack.c.l.b16 %v785
      %v882 = vunpack.c.l.b16 %v786
      %v883 = vunpack.c.l.b16 %v787
      %v884 = vunpack.c.l.b16 %v788
      %v885 = vunpack.c.l.b16 %v789
      %v886 = vunpack.c.l.b16 %v790
      %v887 = vunpack.c.l.b16 %v791
      %v888 = vunpack.c.l.b16 %v792
      %v889 = vunpack.c.l.b16 %v793
      %v890 = vunpack.c.l.b16 %v794
      %v891 = vunpack.c.l.b16 %v795
      %v892 = vunpack.c.l.b16 %v796
      %v893 = vunpack.c.l.b16 %v797
      %v894 = vunpack.c.l.b16 %v798
      %v895 = vunpack.c.l.b16 %v799
      %v896 = vunpack.c.l.b16 %v800
      %v897 = vunpack.c.l.b16 %v801
      %v898 = vunpack.c.l.b16 %v802
      %v899 = vunpack.c.l.b16 %v803
      %v900 = vpack.c.b16 %v853, %v852
      %v901 = vpack.c.b16 %v855, %v854
      %v902 = vpack.c.b16 %v857, %v856
      %v903 = vpack.c.b16 %v859, %v858
      %v904 = vpack.c.b16 %v861, %v860
      %v905 = vpack.c.b16 %v863, %v862
      %v906 = vpack.c.b16 %v865, %v864
      %v907 = vpack.c.b16 %v867, %v866
      %v908 = vpack.c.b16 %v869, %v868
      %v909 = vpack.c.b16 %v871, %v870
      %v910 = vpack.c.b16 %v873, %v872
      %v911 = vpack.c.b16 %v875, %v874
      %v912 = vpack.c.b16 %v877, %v876
      %v913 = vpack.c.b16 %v879, %v878
      %v914 = vpack.c.b16 %v881, %v880
      %v915 = vpack.c.b16 %v883, %v882
      %v916 = vpack.c.b16 %v885, %v884
      %v917 = vpack.c.b16 %v887, %v886
      %v918 = vpack.c.b16 %v889, %v888
      %v919 = vpack.c.b16 %v891, %v890
      %v920 = vpack.c.b16 %v893, %v892
      %v921 = vpack.c.b16 %v895, %v894
      %v922 = vpack.c.b16 %v897, %v896
      %v923 = vpack.c.b16 %v899, %v898
      %948 = vmatprep.subr.bf16.mxu0 0
      %949 = vmatpush1.bf16.msra.mxu0 %v900
      %950 = vmatprep.subr.bf16.mxu0 0
      %951 = vmatpush1.bf16.msra.mxu0 %v901
      %952 = vmatprep.subr.bf16.mxu0 0
      %953 = vmatpush1.bf16.msra.mxu0 %v902
      %954 = vmatprep.subr.bf16.mxu0 0
      %955 = vmatpush1.bf16.msra.mxu0 %v903
      %956 = vmatprep.subr.bf16.mxu0 0
      %957 = vmatpush1.bf16.msra.mxu0 %v904
      %958 = vmatprep.subr.bf16.mxu0 0
      %959 = vmatpush1.bf16.msra.mxu0 %v905
      %960 = vmatprep.subr.bf16.mxu0 0
      %961 = vmatpush1.bf16.msra.mxu0 %v906
      %962 = vmatprep.subr.bf16.mxu0 0
      %963 = vmatpush1.bf16.msra.mxu0 %v907
      %964 = vmatprep.subr.bf16.mxu0 0
      %965 = vmatpush1.bf16.msra.mxu0 %v908
      %966 = vmatprep.subr.bf16.mxu0 0
      %967 = vmatpush1.bf16.msra.mxu0 %v909
      %968 = vmatprep.subr.bf16.mxu0 0
      %969 = vmatpush1.bf16.msra.mxu0 %v910
      %970 = vmatprep.subr.bf16.mxu0 0
      %971 = vmatpush1.bf16.msra.mxu0 %v911
      %972 = vmatprep.subr.bf16.mxu0 0
      %973 = vmatpush1.bf16.msra.mxu0 %v912
      %974 = vmatprep.subr.bf16.mxu0 0
      %975 = vmatpush1.bf16.msra.mxu0 %v913
      %976 = vmatprep.subr.bf16.mxu0 0
      %977 = vmatpush1.bf16.msra.mxu0 %v914
      %978 = vmatprep.subr.bf16.mxu0 0
      %979 = vmatpush1.bf16.msra.mxu0 %v915
      %980 = vmatprep.mubr.bf16.mxu0 %v709
      %981 = vmatmul.mubr.bf16.gmra.mrb[0].mxu0 %v708
      %v982 = vpop.f32.mrb[0].mxu0
      %v983 = vadd.f32 0.0, %v982
      %v984 = vpop.f32.mrb[0].mxu0
      %v985 = vpop.f32.mrb[0].mxu0
      %v986 = vadd.f32 0.0, %v985
      %v987 = vpop.f32.mrb[0].mxu0
      %988 = vmatprep.mubr.bf16.mxu0 %v712
      %989 = vmatmul.mubr.bf16.gmra.mrb[0].mxu0 %v711
      %v990 = vpop.f32.mrb[0].mxu0
      %v991 = vadd.f32 0.0, %v990
      %v992 = vpop.f32.mrb[0].mxu0
      %v993 = vpop.f32.mrb[0].mxu0
      %v994 = vadd.f32 0.0, %v993
      %v995 = vpop.f32.mrb[0].mxu0
      %996 = vmatprep.mubr.bf16.mxu0 %v715
      %997 = vmatmul.mubr.bf16.gmra.mrb[0].mxu0 %v714
      %v998 = vpop.f32.mrb[0].mxu0
      %v999 = vadd.f32 0.0, %v998
      %v1000 = vpop.f32.mrb[0].mxu0
      %v1001 = vpop.f32.mrb[0].mxu0
      %v1002 = vadd.f32 0.0, %v1001
      %v1003 = vpop.f32.mrb[0].mxu0
      %1004 = vmatprep.mubr.bf16.mxu0 %v718
      %1005 = vmatmul.mubr.bf16.gmra.mrb[0].mxu0 %v717
      %v1006 = vpop.f32.mrb[0].mxu0
      %v1007 = vadd.f32 0.0, %v1006
      %v1008 = vpop.f32.mrb[0].mxu0
      %v1009 = vpop.f32.mrb[0].mxu0
      %v1010 = vadd.f32 0.0, %v1009
      %v1011 = vpop.f32.mrb[0].mxu0
      %1012 = vmatprep.mubr.bf16.mxu0 %v721
      %1013 = vmatmul.mubr.bf16.gmra.mrb[0].mxu0 %v720
      %v1014 = vpop.f32.mrb[0].mxu0
      %v1015 = vadd.f32 0.0, %v1014
      %v1016 = vpop.f32.mrb[0].mxu0
      %v1017 = vpop.f32.mrb[0].mxu0
      %v1018 = vadd.f32 0.0, %v1017
      %v1019 = vpop.f32.mrb[0].mxu0
      %1020 = vmatprep.mubr.bf16.mxu0 %v724
      %1021 = vmatmul.mubr.bf16.gmra.mrb[0].mxu0 %v723
      %v1022 = vpop.f32.mrb[0].mxu0
      %v1023 = vadd.f32 0.0, %v1022
      %v1024 = vpop.f32.mrb[0].mxu0
      %v1025 = vpop.f32.mrb[0].mxu0
      %v1026 = vadd.f32 0.0, %v1025
      %v1027 = vpop.f32.mrb[0].mxu0
      %1028 = vmatprep.mubr.bf16.mxu0 %v727
      %1029 = vmatmul.mubr.bf16.gmra.mrb[0].mxu0 %v726
      %v1030 = vpop.f32.mrb[0].mxu0
      %v1031 = vadd.f32 0.0, %v1030
      %v1032 = vpop.f32.mrb[0].mxu0
      %v1033 = vpop.f32.mrb[0].mxu0
      %v1034 = vadd.f32 0.0, %v1033
      %v1035 = vpop.f32.mrb[0].mxu0
      %1036 = vmatprep.mubr.bf16.mxu0 %v730
      %1037 = vmatmul.mubr.bf16.gmra.mrb[0].mxu0 %v729
      %v1038 = vpop.f32.mrb[0].mxu0
      %v1039 = vadd.f32 0.0, %v1038
      %v1040 = vpop.f32.mrb[0].mxu0
      %v1041 = vpop.f32.mrb[0].mxu0
      %v1042 = vadd.f32 0.0, %v1041
      %v1043 = vpop.f32.mrb[0].mxu0
      %1044 = vmatprep.mubr.bf16.mxu0 %v733
      %1045 = vmatmul.mubr.bf16.gmra.mrb[0].mxu0 %v732
      %v1046 = vpop.f32.mrb[0].mxu0
      %v1047 = vadd.f32 0.0, %v1046
      %v1048 = vpop.f32.mrb[0].mxu0
      %v1049 = vpop.f32.mrb[0].mxu0
      %v1050 = vadd.f32 0.0, %v1049
      %v1051 = vpop.f32.mrb[0].mxu0
      %1052 = vmatprep.mubr.bf16.mxu0 %v736
      %1053 = vmatmul.mubr.bf16.gmra.mrb[0].mxu0 %v735
      %v1054 = vpop.f32.mrb[0].mxu0
      %v1055 = vadd.f32 0.0, %v1054
      %v1056 = vpop.f32.mrb[0].mxu0
      %v1057 = vpop.f32.mrb[0].mxu0
      %v1058 = vadd.f32 0.0, %v1057
      %v1059 = vpop.f32.mrb[0].mxu0
      %1060 = vmatprep.mubr.bf16.mxu0 %v739
      %1061 = vmatmul.mubr.bf16.gmra.mrb[0].mxu0 %v738
      %v1062 = vpop.f32.mrb[0].mxu0
      %v1063 = vadd.f32 0.0, %v1062
      %v1064 = vpop.f32.mrb[0].mxu0
      %v1065 = vpop.f32.mrb[0].mxu0
      %v1066 = vadd.f32 0.0, %v1065
      %v1067 = vpop.f32.mrb[0].mxu0
      %1068 = vmatprep.mubr.bf16.mxu0 %v742
      %1069 = vmatmul.mubr.bf16.gmra.mrb[0].mxu0 %v741
      %v1070 = vpop.f32.mrb[0].mxu0
      %v1071 = vadd.f32 0.0, %v1070
      %v1072 = vpop.f32.mrb[0].mxu0
      %v1073 = vpop.f32.mrb[0].mxu0
      %v1074 = vadd.f32 0.0, %v1073
      %v1075 = vpop.f32.mrb[0].mxu0
      %1076 = vmatprep.mubr.bf16.mxu0 %v745
      %1077 = vmatmul.mubr.bf16.gmra.mrb[0].mxu0 %v744
      %v1078 = vpop.f32.mrb[0].mxu0
      %v1079 = vadd.f32 0.0, %v1078
      %v1080 = vpop.f32.mrb[0].mxu0
      %v1081 = vpop.f32.mrb[0].mxu0
      %v1082 = vadd.f32 0.0, %v1081
      %v1083 = vpop.f32.mrb[0].mxu0
      %1084 = vmatprep.mubr.bf16.mxu0 %v748
      %1085 = vmatmul.mubr.bf16.gmra.mrb[0].mxu0 %v747
      %v1086 = vpop.f32.mrb[0].mxu0
      %v1087 = vadd.f32 0.0, %v1086
      %v1088 = vpop.f32.mrb[0].mxu0
      %v1089 = vpop.f32.mrb[0].mxu0
      %v1090 = vadd.f32 0.0, %v1089
      %v1091 = vpop.f32.mrb[0].mxu0
      %1092 = vmatprep.mubr.bf16.mxu0 %v751
      %1093 = vmatmul.mubr.bf16.gmra.mrb[0].mxu0 %v750
      %v1094 = vpop.f32.mrb[0].mxu0
      %v1095 = vadd.f32 0.0, %v1094
      %v1096 = vpop.f32.mrb[0].mxu0
      %v1097 = vpop.f32.mrb[0].mxu0
      %v1098 = vadd.f32 0.0, %v1097
      %v1099 = vpop.f32.mrb[0].mxu0
      %1100 = vmatprep.mubr.bf16.mxu0 %v754
      %1101 = vmatmul.mubr.bf16.gmra.mrb[0].mxu0 %v753
      %v1102 = vpop.f32.mrb[0].mxu0
      %v1103 = vadd.f32 0.0, %v1102
      %v1104 = vpop.f32.mrb[0].mxu0
      %v1105 = vpop.f32.mrb[0].mxu0
      %v1106 = vadd.f32 0.0, %v1105
      %v1107 = vpop.f32.mrb[0].mxu0
      %1108 = vdwg.mxu0
      %1109 = vmatprep.subr.bf16.mxu0 0
      %1110 = vmatpush1.bf16.msra.mxu0 %v916
      %1111 = vmatprep.subr.bf16.mxu0 0
      %1112 = vmatpush1.bf16.msra.mxu0 %v917
      %1113 = vmatprep.subr.bf16.mxu0 0
      %1114 = vmatpush1.bf16.msra.mxu0 %v918
      %1115 = vmatprep.subr.bf16.mxu0 0
      %1116 = vmatpush1.bf16.msra.mxu0 %v919
      %1117 = vmatprep.subr.bf16.mxu0 0
      %1118 = vmatpush1.bf16.msra.mxu0 %v920
      %1119 = vmatprep.subr.bf16.mxu0 0
      %1120 = vmatpush1.bf16.msra.mxu0 %v921
      %1121 = vmatprep.subr.bf16.mxu0 0
      %1122 = vmatpush1.bf16.msra.mxu0 %v922
      %1123 = vmatprep.subr.bf16.mxu0 0
      %1124 = vmatpush1.bf16.msra.mxu0 %v923
      %1125 = vmatprep.subr.bf16.mxu0 0
      %1126 = vmatpush1.bf16.msra.mxu0 0
      %1127 = vmatprep.subr.bf16.mxu0 0
      %1128 = vmatpush1.bf16.msra.mxu0 0
      %1129 = vmatprep.subr.bf16.mxu0 0
      %1130 = vmatpush1.bf16.msra.mxu0 0
      %1131 = vmatprep.subr.bf16.mxu0 0
      %1132 = vmatpush1.bf16.msra.mxu0 0
      %1133 = vmatprep.subr.bf16.mxu0 0
      %1134 = vmatpush1.bf16.msra.mxu0 0
      %1135 = vmatprep.subr.bf16.mxu0 0
      %1136 = vmatpush1.bf16.msra.mxu0 0
      %1137 = vmatprep.subr.bf16.mxu0 0
      %1138 = vmatpush1.bf16.msra.mxu0 0
      %1139 = vmatprep.subr.bf16.mxu0 0
      %1140 = vmatpush1.bf16.msra.mxu0 0
      %1141 = vmatprep.mubr.bf16.mxu0 0
      %1142 = vmatmul.mubr.bf16.gmra.mrb[0].mxu0 %v710
      %v1143 = vpop.f32.mrb[0].mxu0
      %v1144 = vadd.f32 %v983, %v1143
      %v1145 = vpop.f32.mrb[0].mxu0
      %v1146 = vpop.f32.mrb[0].mxu0
      %v1147 = vadd.f32 %v986, %v1146
      %v1148 = vpop.f32.mrb[0].mxu0
      %1149 = vmatprep.mubr.bf16.mxu0 0
      %1150 = vmatmul.mubr.bf16.gmra.mrb[0].mxu0 %v713
      %v1151 = vpop.f32.mrb[0].mxu0
      %v1152 = vadd.f32 %v991, %v1151
      %v1153 = vpop.f32.mrb[0].mxu0
      %v1154 = vpop.f32.mrb[0].mxu0
      %v1155 = vadd.f32 %v994, %v1154
      %v1156 = vpop.f32.mrb[0].mxu0
      %1157 = vmatprep.mubr.bf16.mxu0 0
      %1158 = vmatmul.mubr.bf16.gmra.mrb[0].mxu0 %v716
      %v1159 = vpop.f32.mrb[0].mxu0
      %v1160 = vadd.f32 %v999, %v1159
      %v1161 = vpop.f32.mrb[0].mxu0
      %v1162 = vpop.f32.mrb[0].mxu0
      %v1163 = vadd.f32 %v1002, %v1162
      %v1164 = vpop.f32.mrb[0].mxu0
      %1165 = vmatprep.mubr.bf16.mxu0 0
      %1166 = vmatmul.mubr.bf16.gmra.mrb[0].mxu0 %v719
      %v1167 = vpop.f32.mrb[0].mxu0
      %v1168 = vadd.f32 %v1007, %v1167
      %v1169 = vpop.f32.mrb[0].mxu0
      %v1170 = vpop.f32.mrb[0].mxu0
      %v1171 = vadd.f32 %v1010, %v1170
      %v1172 = vpop.f32.mrb[0].mxu0
      %1173 = vmatprep.mubr.bf16.mxu0 0
      %1174 = vmatmul.mubr.bf16.gmra.mrb[0].mxu0 %v722
      %v1175 = vpop.f32.mrb[0].mxu0
      %v1176 = vadd.f32 %v1015, %v1175
      %v1177 = vpop.f32.mrb[0].mxu0
      %v1178 = vpop.f32.mrb[0].mxu0
      %v1179 = vadd.f32 %v1018, %v1178
      %v1180 = vpop.f32.mrb[0].mxu0
      %1181 = vmatprep.mubr.bf16.mxu0 0
      %1182 = vmatmul.mubr.bf16.gmra.mrb[0].mxu0 %v725
      %v1183 = vpop.f32.mrb[0].mxu0
      %v1184 = vadd.f32 %v1023, %v1183
      %v1185 = vpop.f32.mrb[0].mxu0
      %v1186 = vpop.f32.mrb[0].mxu0
      %v1187 = vadd.f32 %v1026, %v1186
      %v1188 = vpop.f32.mrb[0].mxu0
      %1189 = vmatprep.mubr.bf16.mxu0 0
      %1190 = vmatmul.mubr.bf16.gmra.mrb[0].mxu0 %v728
      %v1191 = vpop.f32.mrb[0].mxu0
      %v1192 = vadd.f32 %v1031, %v1191
      %v1193 = vpop.f32.mrb[0].mxu0
      %v1194 = vpop.f32.mrb[0].mxu0
      %v1195 = vadd.f32 %v1034, %v1194
      %v1196 = vpop.f32.mrb[0].mxu0
      %1197 = vmatprep.mubr.bf16.mxu0 0
      %1198 = vmatmul.mubr.bf16.gmra.mrb[0].mxu0 %v731
      %v1199 = vpop.f32.mrb[0].mxu0
      %v1200 = vadd.f32 %v1039, %v1199
      %v1201 = vpop.f32.mrb[0].mxu0
      %v1202 = vpop.f32.mrb[0].mxu0
      %v1203 = vadd.f32 %v1042, %v1202
      %v1204 = vpop.f32.mrb[0].mxu0
      %1205 = vmatprep.mubr.bf16.mxu0 0
      %1206 = vmatmul.mubr.bf16.gmra.mrb[0].mxu0 %v734
      %v1207 = vpop.f32.mrb[0].mxu0
      %v1208 = vadd.f32 %v1047, %v1207
      %v1209 = vpop.f32.mrb[0].mxu0
      %v1210 = vpop.f32.mrb[0].mxu0
      %v1211 = vadd.f32 %v1050, %v1210
      %v1212 = vpop.f32.mrb[0].mxu0
      %1213 = vmatprep.mubr.bf16.mxu0 0
      %1214 = vmatmul.mubr.bf16.gmra.mrb[0].mxu0 %v737
      %v1215 = vpop.f32.mrb[0].mxu0
      %v1216 = vadd.f32 %v1055, %v1215
      %v1217 = vpop.f32.mrb[0].mxu0
      %v1218 = vpop.f32.mrb[0].mxu0
      %v1219 = vadd.f32 %v1058, %v1218
      %v1220 = vpop.f32.mrb[0].mxu0
      %1221 = vmatprep.mubr.bf16.mxu0 0
      %1222 = vmatmul.mubr.bf16.gmra.mrb[0].mxu0 %v740
      %v1223 = vpop.f32.mrb[0].mxu0
      %v1224 = vadd.f32 %v1063, %v1223
      %v1225 = vpop.f32.mrb[0].mxu0
      %v1226 = vpop.f32.mrb[0].mxu0
      %v1227 = vadd.f32 %v1066, %v1226
      %v1228 = vpop.f32.mrb[0].mxu0
      %1229 = vmatprep.mubr.bf16.mxu0 0
      %1230 = vmatmul.mubr.bf16.gmra.mrb[0].mxu0 %v743
      %v1231 = vpop.f32.mrb[0].mxu0
      %v1232 = vadd.f32 %v1071, %v1231
      %v1233 = vpop.f32.mrb[0].mxu0
      %v1234 = vpop.f32.mrb[0].mxu0
      %v1235 = vadd.f32 %v1074, %v1234
      %v1236 = vpop.f32.mrb[0].mxu0
      %1237 = vmatprep.mubr.bf16.mxu0 0
      %1238 = vmatmul.mubr.bf16.gmra.mrb[0].mxu0 %v746
      %v1239 = vpop.f32.mrb[0].mxu0
      %v1240 = vadd.f32 %v1079, %v1239
      %v1241 = vpop.f32.mrb[0].mxu0
      %v1242 = vpop.f32.mrb[0].mxu0
      %v1243 = vadd.f32 %v1082, %v1242
      %v1244 = vpop.f32.mrb[0].mxu0
      %1245 = vmatprep.mubr.bf16.mxu0 0
      %1246 = vmatmul.mubr.bf16.gmra.mrb[0].mxu0 %v749
      %v1247 = vpop.f32.mrb[0].mxu0
      %v1248 = vadd.f32 %v1087, %v1247
      %v1249 = vpop.f32.mrb[0].mxu0
      %v1250 = vpop.f32.mrb[0].mxu0
      %v1251 = vadd.f32 %v1090, %v1250
      %v1252 = vpop.f32.mrb[0].mxu0
      %1253 = vmatprep.mubr.bf16.mxu0 0
      %1254 = vmatmul.mubr.bf16.gmra.mrb[0].mxu0 %v752
      %v1255 = vpop.f32.mrb[0].mxu0
      %v1256 = vadd.f32 %v1095, %v1255
      %v1257 = vpop.f32.mrb[0].mxu0
      %v1258 = vpop.f32.mrb[0].mxu0
      %v1259 = vadd.f32 %v1098, %v1258
      %v1260 = vpop.f32.mrb[0].mxu0
      %1261 = vmatprep.mubr.bf16.mxu0 0
      %1262 = vmatmul.mubr.bf16.gmra.mrb[0].mxu0 %v755
      %v1263 = vpop.f32.mrb[0].mxu0
      %v1264 = vadd.f32 %v1103, %v1263
      %v1265 = vpop.f32.mrb[0].mxu0
      %v1266 = vpop.f32.mrb[0].mxu0
      %v1267 = vadd.f32 %v1106, %v1266
      %v1268 = vpop.f32.mrb[0].mxu0
      %1269 = vdwg.mxu0
      %1270 = vst [vmem:[#allocation3] sm:$0xff] %v1144
      %1271 = vst [vmem:[#allocation3 + $0x8] sm:$0xff] %v1147
      %1272 = vst [vmem:[#allocation3 + $0x10] sm:$0xff] %v1152
      %1273 = vst [vmem:[#allocation3 + $0x18] sm:$0xff] %v1155
      %1274 = vst [vmem:[#allocation3 + $0x20] sm:$0xff] %v1160
      %1275 = vst [vmem:[#allocation3 + $0x28] sm:$0xff] %v1163
      %1276 = vst [vmem:[#allocation3 + $0x30] sm:$0xff] %v1168
      %1277 = vst [vmem:[#allocation3 + $0x38] sm:$0xff] %v1171
      %1278 = vst [vmem:[#allocation3 + $0x40] sm:$0xff] %v1176
      %1279 = vst [vmem:[#allocation3 + $0x48] sm:$0xff] %v1179
      %1280 = vst [vmem:[#allocation3 + $0x50] sm:$0xff] %v1184
      %1281 = vst [vmem:[#allocation3 + $0x58] sm:$0xff] %v1187
      %1282 = vst [vmem:[#allocation3 + $0x60] sm:$0xff] %v1192
      %1283 = vst [vmem:[#allocation3 + $0x68] sm:$0xff] %v1195
      %1284 = vst [vmem:[#allocation3 + $0x70] sm:$0xff] %v1200
      %1285 = vst [vmem:[#allocation3 + $0x78] sm:$0xff] %v1203
      %1286 = vst [vmem:[#allocation3 + $0x80] sm:$0xff] %v1208
      %1287 = vst [vmem:[#allocation3 + $0x88] sm:$0xff] %v1211
      %1288 = vst [vmem:[#allocation3 + $0x90] sm:$0xff] %v1216
      %1289 = vst [vmem:[#allocation3 + $0x98] sm:$0xff] %v1219
      %1290 = vst [vmem:[#allocation3 + $0xa0] sm:$0xff] %v1224
      %1291 = vst [vmem:[#allocation3 + $0xa8] sm:$0xff] %v1227
      %1292 = vst [vmem:[#allocation3 + $0xb0] sm:$0xff] %v1232
      %1293 = vst [vmem:[#allocation3 + $0xb8] sm:$0xff] %v1235
      %1294 = vst [vmem:[#allocation3 + $0xc0] sm:$0xff] %v1240
      %1295 = vst [vmem:[#allocation3 + $0xc8] sm:$0xff] %v1243
      %1296 = vst [vmem:[#allocation3 + $0xd0] sm:$0xff] %v1248
      %1297 = vst [vmem:[#allocation3 + $0xd8] sm:$0xff] %v1251
      %1298 = vst [vmem:[#allocation3 + $0xe0] sm:$0xff] %v1256
      %1299 = vst [vmem:[#allocation3 + $0xe8] sm:$0xff] %v1259
      %1300 = vst [vmem:[#allocation3 + $0xf0] sm:$0xff] %v1264
      %1301 = vst [vmem:[#allocation3 + $0xf8] sm:$0xff] %v1267
      %v1302 = vld [vmem:[#allocation3] sm:$0xff]
      %v1303 = vld [vmem:[#allocation3 + $0x8] sm:$0xff]
      %v1304 = vld [vmem:[#allocation3 + $0x10] sm:$0xff]
      %v1305 = vld [vmem:[#allocation3 + $0x18] sm:$0xff]
      %v1306 = vld [vmem:[#allocation3 + $0x20] sm:$0xff]
      %v1307 = vld [vmem:[#allocation3 + $0x28] sm:$0xff]
      %v1308 = vld [vmem:[#allocation3 + $0x30] sm:$0xff]
      %v1309 = vld [vmem:[#allocation3 + $0x38] sm:$0xff]
      %v1310 = vld [vmem:[#allocation3 + $0x40] sm:$0xff]
      %v1311 = vld [vmem:[#allocation3 + $0x48] sm:$0xff]
      %v1312 = vld [vmem:[#allocation3 + $0x50] sm:$0xff]
      %v1313 = vld [vmem:[#allocation3 + $0x58] sm:$0xff]
      %v1314 = vld [vmem:[#allocation3 + $0x60] sm:$0xff]
      %v1315 = vld [vmem:[#allocation3 + $0x68] sm:$0xff]
      %v1316 = vld [vmem:[#allocation3 + $0x70] sm:$0xff]
      %v1317 = vld [vmem:[#allocation3 + $0x78] sm:$0xff]
      %v1318 = vld [vmem:[#allocation3 + $0x80] sm:$0xff]
      %v1319 = vld [vmem:[#allocation3 + $0x88] sm:$0xff]
      %v1320 = vld [vmem:[#allocation3 + $0x90] sm:$0xff]
      %v1321 = vld [vmem:[#allocation3 + $0x98] sm:$0xff]
      %v1322 = vld [vmem:[#allocation3 + $0xa0] sm:$0xff]
      %v1323 = vld [vmem:[#allocation3 + $0xa8] sm:$0xff]
      %v1324 = vld [vmem:[#allocation3 + $0xb0] sm:$0xff]
      %v1325 = vld [vmem:[#allocation3 + $0xb8] sm:$0xff]
      %v1326 = vld [vmem:[#allocation3 + $0xc0] sm:$0xff]
      %v1327 = vld [vmem:[#allocation3 + $0xc8] sm:$0xff]
      %v1328 = vld [vmem:[#allocation3 + $0xd0] sm:$0xff]
      %v1329 = vld [vmem:[#allocation3 + $0xd8] sm:$0xff]
      %v1330 = vld [vmem:[#allocation3 + $0xe0] sm:$0xff]
      %v1331 = vld [vmem:[#allocation3 + $0xe8] sm:$0xff]
      %v1332 = vld [vmem:[#allocation3 + $0xf0] sm:$0xff]
      %v1333 = vld [vmem:[#allocation3 + $0xf8] sm:$0xff]
      %v1334 = vld [vmem:[#allocation2 + $0x30] sm:$0xff]
      %v1335 = vld [vmem:[#allocation2 + $0x38] sm:$0xff]
      %v1336 = vld [vmem:[#allocation2 + $0x40] sm:$0xff]
      %v1337 = vld [vmem:[#allocation2 + $0x48] sm:$0xff]
      %v1338 = vld [vmem:[#allocation2 + $0x50] sm:$0xff]
      %v1339 = vld [vmem:[#allocation2 + $0x58] sm:$0xff]
      %v1340 = vld [vmem:[#allocation2 + $0x60] sm:$0xff]
      %v1341 = vld [vmem:[#allocation2 + $0x68] sm:$0xff]
      %v1342 = vld [vmem:[#allocation2 + $0x70] sm:$0xff]
      %v1343 = vld [vmem:[#allocation2 + $0x78] sm:$0xff]
      %v1344 = vld [vmem:[#allocation2 + $0x80] sm:$0xff]
      %v1345 = vld [vmem:[#allocation2 + $0x88] sm:$0xff]
      %v1346 = vld [vmem:[#allocation2 + $0x90] sm:$0xff]
      %v1347 = vld [vmem:[#allocation2 + $0x98] sm:$0xff]
      %v1348 = vld [vmem:[#allocation2 + $0xa0] sm:$0xff]
      %v1349 = vld [vmem:[#allocation2 + $0xa8] sm:$0xff]
      %v1350 = vld [vmem:[#allocation2 + $0xb0] sm:$0xff]
      %v1351 = vld [vmem:[#allocation2 + $0xb8] sm:$0xff]
      %v1352 = vld [vmem:[#allocation2 + $0xc0] sm:$0xff]
      %v1353 = vld [vmem:[#allocation2 + $0xc8] sm:$0xff]
      %v1354 = vld [vmem:[#allocation2 + $0xd0] sm:$0xff]
      %v1355 = vld [vmem:[#allocation2 + $0xd8] sm:$0xff]
      %v1356 = vld [vmem:[#allocation2 + $0xe0] sm:$0xff]
      %v1357 = vld [vmem:[#allocation2 + $0xe8] sm:$0xff]
      %v1358 = vld [vmem:[#allocation2 + $0xf0] sm:$0xff]
      %v1359 = vld [vmem:[#allocation2 + $0xf8] sm:$0xff]
      %v1360 = vld [vmem:[#allocation2 + $0x100] sm:$0xff]
      %v1361 = vld [vmem:[#allocation2 + $0x108] sm:$0xff]
      %v1362 = vld [vmem:[#allocation2 + $0x110] sm:$0xff]
      %v1363 = vld [vmem:[#allocation2 + $0x118] sm:$0xff]
      %v1364 = vld [vmem:[#allocation2 + $0x120] sm:$0xff]
      %v1365 = vld [vmem:[#allocation2 + $0x128] sm:$0xff]
      %v1366 = vld [vmem:[#allocation2 + $0x130] sm:$0xff]
      %v1367 = vld [vmem:[#allocation2 + $0x138] sm:$0xff]
      %v1368 = vld [vmem:[#allocation2 + $0x140] sm:$0xff]
      %v1369 = vld [vmem:[#allocation2 + $0x148] sm:$0xff]
      %v1370 = vld [vmem:[#allocation2 + $0x150] sm:$0xff]
      %v1371 = vld [vmem:[#allocation2 + $0x158] sm:$0xff]
      %v1372 = vld [vmem:[#allocation2 + $0x160] sm:$0xff]
      %v1373 = vld [vmem:[#allocation2 + $0x168] sm:$0xff]
      %v1374 = vld [vmem:[#allocation2 + $0x170] sm:$0xff]
      %v1375 = vld [vmem:[#allocation2 + $0x178] sm:$0xff]
      %v1376 = vld [vmem:[#allocation2 + $0x180] sm:$0xff]
      %v1377 = vld [vmem:[#allocation2 + $0x188] sm:$0xff]
      %v1378 = vld [vmem:[#allocation2 + $0x190] sm:$0xff]
      %v1379 = vld [vmem:[#allocation2 + $0x198] sm:$0xff]
      %v1380 = vld [vmem:[#allocation2 + $0x1a0] sm:$0xff]
      %v1381 = vld [vmem:[#allocation2 + $0x1a8] sm:$0xff]
      %s1382 = scalar_lea.vmem %s1, 192
      %v1383 = vld [vmem:[%s1382] sm:$0xf]
      %v1384 = vld [vmem:[%s1382 + $0x4] sm:$0xf]
      %v1385 = vld [vmem:[%s1382 + $0x8] sm:$0xf]
      %v1386 = vld [vmem:[%s1382 + $0xc] sm:$0xf]
      %v1387 = vld [vmem:[%s1382 + $0x10] sm:$0xf]
      %v1388 = vld [vmem:[%s1382 + $0x14] sm:$0xf]
      %v1389 = vld [vmem:[%s1382 + $0x18] sm:$0xf]
      %v1390 = vld [vmem:[%s1382 + $0x1c] sm:$0xf]
      %v1391 = vld [vmem:[%s1382 + $0x20] sm:$0xf]
      %v1392 = vld [vmem:[%s1382 + $0x24] sm:$0xf]
      %v1393 = vld [vmem:[%s1382 + $0x28] sm:$0xf]
      %v1394 = vld [vmem:[%s1382 + $0x2c] sm:$0xf]
      %v1395 = vld [vmem:[%s1382 + $0x30] sm:$0xf]
      %v1396 = vld [vmem:[%s1382 + $0x34] sm:$0xf]
      %v1397 = vld [vmem:[%s1382 + $0x38] sm:$0xf]
      %v1398 = vld [vmem:[%s1382 + $0x3c] sm:$0xf]
      %v1399 = vld [vmem:[%s1382 + $0x40] sm:$0xf]
      %v1400 = vld [vmem:[%s1382 + $0x44] sm:$0xf]
      %v1401 = vld [vmem:[%s1382 + $0x48] sm:$0xf]
      %v1402 = vld [vmem:[%s1382 + $0x4c] sm:$0xf]
      %v1403 = vld [vmem:[%s1382 + $0x50] sm:$0xf]
      %v1404 = vld [vmem:[%s1382 + $0x54] sm:$0xf]
      %v1405 = vld [vmem:[%s1382 + $0x58] sm:$0xf]
      %v1406 = vld [vmem:[%s1382 + $0x5c] sm:$0xf]
      %v1407 = vld [vmem:[%s1382 + $0x60] sm:$0xf]
      %v1408 = vld [vmem:[%s1382 + $0x64] sm:$0xf]
      %v1409 = vld [vmem:[%s1382 + $0x68] sm:$0xf]
      %v1410 = vld [vmem:[%s1382 + $0x6c] sm:$0xf]
      %v1411 = vld [vmem:[%s1382 + $0x70] sm:$0xf]
      %v1412 = vld [vmem:[%s1382 + $0x74] sm:$0xf]
      %v1413 = vld [vmem:[%s1382 + $0x78] sm:$0xf]
      %v1414 = vld [vmem:[%s1382 + $0x7c] sm:$0xf]
      %v1415 = vld [vmem:[%s1382 + $0x80] sm:$0xf]
      %v1416 = vld [vmem:[%s1382 + $0x84] sm:$0xf]
      %v1417 = vld [vmem:[%s1382 + $0x88] sm:$0xf]
      %v1418 = vld [vmem:[%s1382 + $0x8c] sm:$0xf]
      %v1419 = vld [vmem:[%s1382 + $0x90] sm:$0xf]
      %v1420 = vld [vmem:[%s1382 + $0x94] sm:$0xf]
      %v1421 = vld [vmem:[%s1382 + $0x98] sm:$0xf]
      %v1422 = vld [vmem:[%s1382 + $0x9c] sm:$0xf]
      %v1423 = vld [vmem:[%s1382 + $0xa0] sm:$0xf]
      %v1424 = vld [vmem:[%s1382 + $0xa4] sm:$0xf]
      %v1425 = vld [vmem:[%s1382 + $0xa8] sm:$0xf]
      %v1426 = vld [vmem:[%s1382 + $0xac] sm:$0xf]
      %v1427 = vld [vmem:[%s1382 + $0xb0] sm:$0xf]
      %v1428 = vld [vmem:[%s1382 + $0xb4] sm:$0xf]
      %v1429 = vld [vmem:[%s1382 + $0xb8] sm:$0xf]
      %v1430 = vld [vmem:[%s1382 + $0xbc] sm:$0xf]
      %v1479 = vunpack.c.l.b16 %v1383
      %v1480 = vunpack.c.l.b16 %v1384
      %v1481 = vunpack.c.l.b16 %v1385
      %v1482 = vunpack.c.l.b16 %v1386
      %v1483 = vunpack.c.l.b16 %v1387
      %v1484 = vunpack.c.l.b16 %v1388
      %v1485 = vunpack.c.l.b16 %v1389
      %v1486 = vunpack.c.l.b16 %v1390
      %v1487 = vunpack.c.l.b16 %v1391
      %v1488 = vunpack.c.l.b16 %v1392
      %v1489 = vunpack.c.l.b16 %v1393
      %v1490 = vunpack.c.l.b16 %v1394
      %v1491 = vunpack.c.l.b16 %v1395
      %v1492 = vunpack.c.l.b16 %v1396
      %v1493 = vunpack.c.l.b16 %v1397
      %v1494 = vunpack.c.l.b16 %v1398
      %v1495 = vunpack.c.l.b16 %v1399
      %v1496 = vunpack.c.l.b16 %v1400
      %v1497 = vunpack.c.l.b16 %v1401
      %v1498 = vunpack.c.l.b16 %v1402
      %v1499 = vunpack.c.l.b16 %v1403
      %v1500 = vunpack.c.l.b16 %v1404
      %v1501 = vunpack.c.l.b16 %v1405
      %v1502 = vunpack.c.l.b16 %v1406
      %v1503 = vunpack.c.l.b16 %v1407
      %v1504 = vunpack.c.l.b16 %v1408
      %v1505 = vunpack.c.l.b16 %v1409
      %v1506 = vunpack.c.l.b16 %v1410
      %v1507 = vunpack.c.l.b16 %v1411
      %v1508 = vunpack.c.l.b16 %v1412
      %v1509 = vunpack.c.l.b16 %v1413
      %v1510 = vunpack.c.l.b16 %v1414
      %v1511 = vunpack.c.l.b16 %v1415
      %v1512 = vunpack.c.l.b16 %v1416
      %v1513 = vunpack.c.l.b16 %v1417
      %v1514 = vunpack.c.l.b16 %v1418
      %v1515 = vunpack.c.l.b16 %v1419
      %v1516 = vunpack.c.l.b16 %v1420
      %v1517 = vunpack.c.l.b16 %v1421
      %v1518 = vunpack.c.l.b16 %v1422
      %v1519 = vunpack.c.l.b16 %v1423
      %v1520 = vunpack.c.l.b16 %v1424
      %v1521 = vunpack.c.l.b16 %v1425
      %v1522 = vunpack.c.l.b16 %v1426
      %v1523 = vunpack.c.l.b16 %v1427
      %v1524 = vunpack.c.l.b16 %v1428
      %v1525 = vunpack.c.l.b16 %v1429
      %v1526 = vunpack.c.l.b16 %v1430
      %v1527 = vpack.c.b16 %v1480, %v1479
      %v1528 = vpack.c.b16 %v1482, %v1481
      %v1529 = vpack.c.b16 %v1484, %v1483
      %v1530 = vpack.c.b16 %v1486, %v1485
      %v1531 = vpack.c.b16 %v1488, %v1487
      %v1532 = vpack.c.b16 %v1490, %v1489
      %v1533 = vpack.c.b16 %v1492, %v1491
      %v1534 = vpack.c.b16 %v1494, %v1493
      %v1535 = vpack.c.b16 %v1496, %v1495
      %v1536 = vpack.c.b16 %v1498, %v1497
      %v1537 = vpack.c.b16 %v1500, %v1499
      %v1538 = vpack.c.b16 %v1502, %v1501
      %v1539 = vpack.c.b16 %v1504, %v1503
      %v1540 = vpack.c.b16 %v1506, %v1505
      %v1541 = vpack.c.b16 %v1508, %v1507
      %v1542 = vpack.c.b16 %v1510, %v1509
      %v1543 = vpack.c.b16 %v1512, %v1511
      %v1544 = vpack.c.b16 %v1514, %v1513
      %v1545 = vpack.c.b16 %v1516, %v1515
      %v1546 = vpack.c.b16 %v1518, %v1517
      %v1547 = vpack.c.b16 %v1520, %v1519
      %v1548 = vpack.c.b16 %v1522, %v1521
      %v1549 = vpack.c.b16 %v1524, %v1523
      %v1550 = vpack.c.b16 %v1526, %v1525
      %1575 = vmatprep.subr.bf16.mxu0 0
      %1576 = vmatpush1.bf16.msra.mxu0 %v1527
      %1577 = vmatprep.subr.bf16.mxu0 0
      %1578 = vmatpush1.bf16.msra.mxu0 %v1528
      %1579 = vmatprep.subr.bf16.mxu0 0
      %1580 = vmatpush1.bf16.msra.mxu0 %v1529
      %1581 = vmatprep.subr.bf16.mxu0 0
      %1582 = vmatpush1.bf16.msra.mxu0 %v1530
      %1583 = vmatprep.subr.bf16.mxu0 0
      %1584 = vmatpush1.bf16.msra.mxu0 %v1531
      %1585 = vmatprep.subr.bf16.mxu0 0
      %1586 = vmatpush1.bf16.msra.mxu0 %v1532
      %1587 = vmatprep.subr.bf16.mxu0 0
      %1588 = vmatpush1.bf16.msra.mxu0 %v1533
      %1589 = vmatprep.subr.bf16.mxu0 0
      %1590 = vmatpush1.bf16.msra.mxu0 %v1534
      %1591 = vmatprep.subr.bf16.mxu0 0
      %1592 = vmatpush1.bf16.msra.mxu0 %v1535
      %1593 = vmatprep.subr.bf16.mxu0 0
      %1594 = vmatpush1.bf16.msra.mxu0 %v1536
      %1595 = vmatprep.subr.bf16.mxu0 0
      %1596 = vmatpush1.bf16.msra.mxu0 %v1537
      %1597 = vmatprep.subr.bf16.mxu0 0
      %1598 = vmatpush1.bf16.msra.mxu0 %v1538
      %1599 = vmatprep.subr.bf16.mxu0 0
      %1600 = vmatpush1.bf16.msra.mxu0 %v1539
      %1601 = vmatprep.subr.bf16.mxu0 0
      %1602 = vmatpush1.bf16.msra.mxu0 %v1540
      %1603 = vmatprep.subr.bf16.mxu0 0
      %1604 = vmatpush1.bf16.msra.mxu0 %v1541
      %1605 = vmatprep.subr.bf16.mxu0 0
      %1606 = vmatpush1.bf16.msra.mxu0 %v1542
      %1607 = vmatprep.mubr.bf16.mxu0 %v1335
      %1608 = vmatmul.mubr.bf16.gmra.mrb[0].mxu0 %v1334
      %v1609 = vpop.f32.mrb[0].mxu0
      %v1610 = vadd.f32 0.0, %v1609
      %v1611 = vpop.f32.mrb[0].mxu0
      %v1612 = vpop.f32.mrb[0].mxu0
      %v1613 = vadd.f32 0.0, %v1612
      %v1614 = vpop.f32.mrb[0].mxu0
      %1615 = vmatprep.mubr.bf16.mxu0 %v1338
      %1616 = vmatmul.mubr.bf16.gmra.mrb[0].mxu0 %v1337
      %v1617 = vpop.f32.mrb[0].mxu0
      %v1618 = vadd.f32 0.0, %v1617
      %v1619 = vpop.f32.mrb[0].mxu0
      %v1620 = vpop.f32.mrb[0].mxu0
      %v1621 = vadd.f32 0.0, %v1620
      %v1622 = vpop.f32.mrb[0].mxu0
      %1623 = vmatprep.mubr.bf16.mxu0 %v1341
      %1624 = vmatmul.mubr.bf16.gmra.mrb[0].mxu0 %v1340
      %v1625 = vpop.f32.mrb[0].mxu0
      %v1626 = vadd.f32 0.0, %v1625
      %v1627 = vpop.f32.mrb[0].mxu0
      %v1628 = vpop.f32.mrb[0].mxu0
      %v1629 = vadd.f32 0.0, %v1628
      %v1630 = vpop.f32.mrb[0].mxu0
      %1631 = vmatprep.mubr.bf16.mxu0 %v1344
      %1632 = vmatmul.mubr.bf16.gmra.mrb[0].mxu0 %v1343
      %v1633 = vpop.f32.mrb[0].mxu0
      %v1634 = vadd.f32 0.0, %v1633
      %v1635 = vpop.f32.mrb[0].mxu0
      %v1636 = vpop.f32.mrb[0].mxu0
      %v1637 = vadd.f32 0.0, %v1636
      %v1638 = vpop.f32.mrb[0].mxu0
      %1639 = vmatprep.mubr.bf16.mxu0 %v1347
      %1640 = vmatmul.mubr.bf16.gmra.mrb[0].mxu0 %v1346
      %v1641 = vpop.f32.mrb[0].mxu0
      %v1642 = vadd.f32 0.0, %v1641
      %v1643 = vpop.f32.mrb[0].mxu0
      %v1644 = vpop.f32.mrb[0].mxu0
      %v1645 = vadd.f32 0.0, %v1644
      %v1646 = vpop.f32.mrb[0].mxu0
      %1647 = vmatprep.mubr.bf16.mxu0 %v1350
      %1648 = vmatmul.mubr.bf16.gmra.mrb[0].mxu0 %v1349
      %v1649 = vpop.f32.mrb[0].mxu0
      %v1650 = vadd.f32 0.0, %v1649
      %v1651 = vpop.f32.mrb[0].mxu0
      %v1652 = vpop.f32.mrb[0].mxu0
      %v1653 = vadd.f32 0.0, %v1652
      %v1654 = vpop.f32.mrb[0].mxu0
      %1655 = vmatprep.mubr.bf16.mxu0 %v1353
      %1656 = vmatmul.mubr.bf16.gmra.mrb[0].mxu0 %v1352
      %v1657 = vpop.f32.mrb[0].mxu0
      %v1658 = vadd.f32 0.0, %v1657
      %v1659 = vpop.f32.mrb[0].mxu0
      %v1660 = vpop.f32.mrb[0].mxu0
      %v1661 = vadd.f32 0.0, %v1660
      %v1662 = vpop.f32.mrb[0].mxu0
      %1663 = vmatprep.mubr.bf16.mxu0 %v1356
      %1664 = vmatmul.mubr.bf16.gmra.mrb[0].mxu0 %v1355
      %v1665 = vpop.f32.mrb[0].mxu0
      %v1666 = vadd.f32 0.0, %v1665
      %v1667 = vpop.f32.mrb[0].mxu0
      %v1668 = vpop.f32.mrb[0].mxu0
      %v1669 = vadd.f32 0.0, %v1668
      %v1670 = vpop.f32.mrb[0].mxu0
      %1671 = vmatprep.mubr.bf16.mxu0 %v1359
      %1672 = vmatmul.mubr.bf16.gmra.mrb[0].mxu0 %v1358
      %v1673 = vpop.f32.mrb[0].mxu0
      %v1674 = vadd.f32 0.0, %v1673
      %v1675 = vpop.f32.mrb[0].mxu0
      %v1676 = vpop.f32.mrb[0].mxu0
      %v1677 = vadd.f32 0.0, %v1676
      %v1678 = vpop.f32.mrb[0].mxu0
      %1679 = vmatprep.mubr.bf16.mxu0 %v1362
      %1680 = vmatmul.mubr.bf16.gmra.mrb[0].mxu0 %v1361
      %v1681 = vpop.f32.mrb[0].mxu0
      %v1682 = vadd.f32 0.0, %v1681
      %v1683 = vpop.f32.mrb[0].mxu0
      %v1684 = vpop.f32.mrb[0].mxu0
      %v1685 = vadd.f32 0.0, %v1684
      %v1686 = vpop.f32.mrb[0].mxu0
      %1687 = vmatprep.mubr.bf16.mxu0 %v1365
      %1688 = vmatmul.mubr.bf16.gmra.mrb[0].mxu0 %v1364
      %v1689 = vpop.f32.mrb[0].mxu0
      %v1690 = vadd.f32 0.0, %v1689
      %v1691 = vpop.f32.mrb[0].mxu0
      %v1692 = vpop.f32.mrb[0].mxu0
      %v1693 = vadd.f32 0.0, %v1692
      %v1694 = vpop.f32.mrb[0].mxu0
      %1695 = vmatprep.mubr.bf16.mxu0 %v1368
      %1696 = vmatmul.mubr.bf16.gmra.mrb[0].mxu0 %v1367
      %v1697 = vpop.f32.mrb[0].mxu0
      %v1698 = vadd.f32 0.0, %v1697
      %v1699 = vpop.f32.mrb[0].mxu0
      %v1700 = vpop.f32.mrb[0].mxu0
      %v1701 = vadd.f32 0.0, %v1700
      %v1702 = vpop.f32.mrb[0].mxu0
      %1703 = vmatprep.mubr.bf16.mxu0 %v1371
      %1704 = vmatmul.mubr.bf16.gmra.mrb[0].mxu0 %v1370
      %v1705 = vpop.f32.mrb[0].mxu0
      %v1706 = vadd.f32 0.0, %v1705
      %v1707 = vpop.f32.mrb[0].mxu0
      %v1708 = vpop.f32.mrb[0].mxu0
      %v1709 = vadd.f32 0.0, %v1708
      %v1710 = vpop.f32.mrb[0].mxu0
      %1711 = vmatprep.mubr.bf16.mxu0 %v1374
      %1712 = vmatmul.mubr.bf16.gmra.mrb[0].mxu0 %v1373
      %v1713 = vpop.f32.mrb[0].mxu0
      %v1714 = vadd.f32 0.0, %v1713
      %v1715 = vpop.f32.mrb[0].mxu0
      %v1716 = vpop.f32.mrb[0].mxu0
      %v1717 = vadd.f32 0.0, %v1716
      %v1718 = vpop.f32.mrb[0].mxu0
      %1719 = vmatprep.mubr.bf16.mxu0 %v1377
      %1720 = vmatmul.mubr.bf16.gmra.mrb[0].mxu0 %v1376
      %v1721 = vpop.f32.mrb[0].mxu0
      %v1722 = vadd.f32 0.0, %v1721
      %v1723 = vpop.f32.mrb[0].mxu0
      %v1724 = vpop.f32.mrb[0].mxu0
      %v1725 = vadd.f32 0.0, %v1724
      %v1726 = vpop.f32.mrb[0].mxu0
      %1727 = vmatprep.mubr.bf16.mxu0 %v1380
      %1728 = vmatmul.mubr.bf16.gmra.mrb[0].mxu0 %v1379
      %v1729 = vpop.f32.mrb[0].mxu0
      %v1730 = vadd.f32 0.0, %v1729
      %v1731 = vpop.f32.mrb[0].mxu0
      %v1732 = vpop.f32.mrb[0].mxu0
      %v1733 = vadd.f32 0.0, %v1732
      %v1734 = vpop.f32.mrb[0].mxu0
      %1735 = vdwg.mxu0
      %1736 = vmatprep.subr.bf16.mxu0 0
      %1737 = vmatpush1.bf16.msra.mxu0 %v1543
      %1738 = vmatprep.subr.bf16.mxu0 0
      %1739 = vmatpush1.bf16.msra.mxu0 %v1544
      %1740 = vmatprep.subr.bf16.mxu0 0
      %1741 = vmatpush1.bf16.msra.mxu0 %v1545
      %1742 = vmatprep.subr.bf16.mxu0 0
      %1743 = vmatpush1.bf16.msra.mxu0 %v1546
      %1744 = vmatprep.subr.bf16.mxu0 0
      %1745 = vmatpush1.bf16.msra.mxu0 %v1547
      %1746 = vmatprep.subr.bf16.mxu0 0
      %1747 = vmatpush1.bf16.msra.mxu0 %v1548
      %1748 = vmatprep.subr.bf16.mxu0 0
      %1749 = vmatpush1.bf16.msra.mxu0 %v1549
      %1750 = vmatprep.subr.bf16.mxu0 0
      %1751 = vmatpush1.bf16.msra.mxu0 %v1550
      %1752 = vmatprep.subr.bf16.mxu0 0
      %1753 = vmatpush1.bf16.msra.mxu0 0
      %1754 = vmatprep.subr.bf16.mxu0 0
      %1755 = vmatpush1.bf16.msra.mxu0 0
      %1756 = vmatprep.subr.bf16.mxu0 0
      %1757 = vmatpush1.bf16.msra.mxu0 0
      %1758 = vmatprep.subr.bf16.mxu0 0
      %1759 = vmatpush1.bf16.msra.mxu0 0
      %1760 = vmatprep.subr.bf16.mxu0 0
      %1761 = vmatpush1.bf16.msra.mxu0 0
      %1762 = vmatprep.subr.bf16.mxu0 0
      %1763 = vmatpush1.bf16.msra.mxu0 0
      %1764 = vmatprep.subr.bf16.mxu0 0
      %1765 = vmatpush1.bf16.msra.mxu0 0
      %1766 = vmatprep.subr.bf16.mxu0 0
      %1767 = vmatpush1.bf16.msra.mxu0 0
      %1768 = vmatprep.mubr.bf16.mxu0 0
      %1769 = vmatmul.mubr.bf16.gmra.mrb[0].mxu0 %v1336
      %v1770 = vpop.f32.mrb[0].mxu0
      %v1771 = vadd.f32 %v1610, %v1770
      %v1772 = vpop.f32.mrb[0].mxu0
      %v1773 = vpop.f32.mrb[0].mxu0
      %v1774 = vadd.f32 %v1613, %v1773
      %v1775 = vpop.f32.mrb[0].mxu0
      %1776 = vmatprep.mubr.bf16.mxu0 0
      %1777 = vmatmul.mubr.bf16.gmra.mrb[0].mxu0 %v1339
      %v1778 = vpop.f32.mrb[0].mxu0
      %v1779 = vadd.f32 %v1618, %v1778
      %v1780 = vpop.f32.mrb[0].mxu0
      %v1781 = vpop.f32.mrb[0].mxu0
      %v1782 = vadd.f32 %v1621, %v1781
      %v1783 = vpop.f32.mrb[0].mxu0
      %1784 = vmatprep.mubr.bf16.mxu0 0
      %1785 = vmatmul.mubr.bf16.gmra.mrb[0].mxu0 %v1342
      %v1786 = vpop.f32.mrb[0].mxu0
      %v1787 = vadd.f32 %v1626, %v1786
      %v1788 = vpop.f32.mrb[0].mxu0
      %v1789 = vpop.f32.mrb[0].mxu0
      %v1790 = vadd.f32 %v1629, %v1789
      %v1791 = vpop.f32.mrb[0].mxu0
      %1792 = vmatprep.mubr.bf16.mxu0 0
      %1793 = vmatmul.mubr.bf16.gmra.mrb[0].mxu0 %v1345
      %v1794 = vpop.f32.mrb[0].mxu0
      %v1795 = vadd.f32 %v1634, %v1794
      %v1796 = vpop.f32.mrb[0].mxu0
      %v1797 = vpop.f32.mrb[0].mxu0
      %v1798 = vadd.f32 %v1637, %v1797
      %v1799 = vpop.f32.mrb[0].mxu0
      %1800 = vmatprep.mubr.bf16.mxu0 0
      %1801 = vmatmul.mubr.bf16.gmra.mrb[0].mxu0 %v1348
      %v1802 = vpop.f32.mrb[0].mxu0
      %v1803 = vadd.f32 %v1642, %v1802
      %v1804 = vpop.f32.mrb[0].mxu0
      %v1805 = vpop.f32.mrb[0].mxu0
      %v1806 = vadd.f32 %v1645, %v1805
      %v1807 = vpop.f32.mrb[0].mxu0
      %1808 = vmatprep.mubr.bf16.mxu0 0
      %1809 = vmatmul.mubr.bf16.gmra.mrb[0].mxu0 %v1351
      %v1810 = vpop.f32.mrb[0].mxu0
      %v1811 = vadd.f32 %v1650, %v1810
      %v1812 = vpop.f32.mrb[0].mxu0
      %v1813 = vpop.f32.mrb[0].mxu0
      %v1814 = vadd.f32 %v1653, %v1813
      %v1815 = vpop.f32.mrb[0].mxu0
      %1816 = vmatprep.mubr.bf16.mxu0 0
      %1817 = vmatmul.mubr.bf16.gmra.mrb[0].mxu0 %v1354
      %v1818 = vpop.f32.mrb[0].mxu0
      %v1819 = vadd.f32 %v1658, %v1818
      %v1820 = vpop.f32.mrb[0].mxu0
      %v1821 = vpop.f32.mrb[0].mxu0
      %v1822 = vadd.f32 %v1661, %v1821
      %v1823 = vpop.f32.mrb[0].mxu0
      %1824 = vmatprep.mubr.bf16.mxu0 0
      %1825 = vmatmul.mubr.bf16.gmra.mrb[0].mxu0 %v1357
      %v1826 = vpop.f32.mrb[0].mxu0
      %v1827 = vadd.f32 %v1666, %v1826
      %v1828 = vpop.f32.mrb[0].mxu0
      %v1829 = vpop.f32.mrb[0].mxu0
      %v1830 = vadd.f32 %v1669, %v1829
      %v1831 = vpop.f32.mrb[0].mxu0
      %1832 = vmatprep.mubr.bf16.mxu0 0
      %1833 = vmatmul.mubr.bf16.gmra.mrb[0].mxu0 %v1360
      %v1834 = vpop.f32.mrb[0].mxu0
      %v1835 = vadd.f32 %v1674, %v1834
      %v1836 = vpop.f32.mrb[0].mxu0
      %v1837 = vpop.f32.mrb[0].mxu0
      %v1838 = vadd.f32 %v1677, %v1837
      %v1839 = vpop.f32.mrb[0].mxu0
      %1840 = vmatprep.mubr.bf16.mxu0 0
      %1841 = vmatmul.mubr.bf16.gmra.mrb[0].mxu0 %v1363
      %v1842 = vpop.f32.mrb[0].mxu0
      %v1843 = vadd.f32 %v1682, %v1842
      %v1844 = vpop.f32.mrb[0].mxu0
      %v1845 = vpop.f32.mrb[0].mxu0
      %v1846 = vadd.f32 %v1685, %v1845
      %v1847 = vpop.f32.mrb[0].mxu0
      %1848 = vmatprep.mubr.bf16.mxu0 0
      %1849 = vmatmul.mubr.bf16.gmra.mrb[0].mxu0 %v1366
      %v1850 = vpop.f32.mrb[0].mxu0
      %v1851 = vadd.f32 %v1690, %v1850
      %v1852 = vpop.f32.mrb[0].mxu0
      %v1853 = vpop.f32.mrb[0].mxu0
      %v1854 = vadd.f32 %v1693, %v1853
      %v1855 = vpop.f32.mrb[0].mxu0
      %1856 = vmatprep.mubr.bf16.mxu0 0
      %1857 = vmatmul.mubr.bf16.gmra.mrb[0].mxu0 %v1369
      %v1858 = vpop.f32.mrb[0].mxu0
      %v1859 = vadd.f32 %v1698, %v1858
      %v1860 = vpop.f32.mrb[0].mxu0
      %v1861 = vpop.f32.mrb[0].mxu0
      %v1862 = vadd.f32 %v1701, %v1861
      %v1863 = vpop.f32.mrb[0].mxu0
      %1864 = vmatprep.mubr.bf16.mxu0 0
      %1865 = vmatmul.mubr.bf16.gmra.mrb[0].mxu0 %v1372
      %v1866 = vpop.f32.mrb[0].mxu0
      %v1867 = vadd.f32 %v1706, %v1866
      %v1868 = vpop.f32.mrb[0].mxu0
      %v1869 = vpop.f32.mrb[0].mxu0
      %v1870 = vadd.f32 %v1709, %v1869
      %v1871 = vpop.f32.mrb[0].mxu0
      %1872 = vmatprep.mubr.bf16.mxu0 0
      %1873 = vmatmul.mubr.bf16.gmra.mrb[0].mxu0 %v1375
      %v1874 = vpop.f32.mrb[0].mxu0
      %v1875 = vadd.f32 %v1714, %v1874
      %v1876 = vpop.f32.mrb[0].mxu0
      %v1877 = vpop.f32.mrb[0].mxu0
      %v1878 = vadd.f32 %v1717, %v1877
      %v1879 = vpop.f32.mrb[0].mxu0
      %1880 = vmatprep.mubr.bf16.mxu0 0
      %1881 = vmatmul.mubr.bf16.gmra.mrb[0].mxu0 %v1378
      %v1882 = vpop.f32.mrb[0].mxu0
      %v1883 = vadd.f32 %v1722, %v1882
      %v1884 = vpop.f32.mrb[0].mxu0
      %v1885 = vpop.f32.mrb[0].mxu0
      %v1886 = vadd.f32 %v1725, %v1885
      %v1887 = vpop.f32.mrb[0].mxu0
      %1888 = vmatprep.mubr.bf16.mxu0 0
      %1889 = vmatmul.mubr.bf16.gmra.mrb[0].mxu0 %v1381
      %v1890 = vpop.f32.mrb[0].mxu0
      %v1891 = vadd.f32 %v1730, %v1890
      %v1892 = vpop.f32.mrb[0].mxu0
      %v1893 = vpop.f32.mrb[0].mxu0
      %v1894 = vadd.f32 %v1733, %v1893
      %v1895 = vpop.f32.mrb[0].mxu0
      %1896 = vdwg.mxu0
      %v1897 = vadd.f32 %v1302, %v1771
      %v1898 = vadd.f32 %v1303, %v1774
      %v1899 = vadd.f32 %v1304, %v1779
      %v1900 = vadd.f32 %v1305, %v1782
      %v1901 = vadd.f32 %v1306, %v1787
      %v1902 = vadd.f32 %v1307, %v1790
      %v1903 = vadd.f32 %v1308, %v1795
      %v1904 = vadd.f32 %v1309, %v1798
      %v1905 = vadd.f32 %v1310, %v1803
      %v1906 = vadd.f32 %v1311, %v1806
      %v1907 = vadd.f32 %v1312, %v1811
      %v1908 = vadd.f32 %v1313, %v1814
      %v1909 = vadd.f32 %v1314, %v1819
      %v1910 = vadd.f32 %v1315, %v1822
      %v1911 = vadd.f32 %v1316, %v1827
      %v1912 = vadd.f32 %v1317, %v1830
      %v1913 = vadd.f32 %v1318, %v1835
      %v1914 = vadd.f32 %v1319, %v1838
      %v1915 = vadd.f32 %v1320, %v1843
      %v1916 = vadd.f32 %v1321, %v1846
      %v1917 = vadd.f32 %v1322, %v1851
      %v1918 = vadd.f32 %v1323, %v1854
      %v1919 = vadd.f32 %v1324, %v1859
      %v1920 = vadd.f32 %v1325, %v1862
      %v1921 = vadd.f32 %v1326, %v1867
      %v1922 = vadd.f32 %v1327, %v1870
      %v1923 = vadd.f32 %v1328, %v1875
      %v1924 = vadd.f32 %v1329, %v1878
      %v1925 = vadd.f32 %v1330, %v1883
      %v1926 = vadd.f32 %v1331, %v1886
      %v1927 = vadd.f32 %v1332, %v1891
      %v1928 = vadd.f32 %v1333, %v1894
      %1929 = vst [vmem:[#allocation3] sm:$0xff] %v1897
      %1930 = vst [vmem:[#allocation3 + $0x8] sm:$0xff] %v1898
      %1931 = vst [vmem:[#allocation3 + $0x10] sm:$0xff] %v1899
      %1932 = vst [vmem:[#allocation3 + $0x18] sm:$0xff] %v1900
      %1933 = vst [vmem:[#allocation3 + $0x20] sm:$0xff] %v1901
      %1934 = vst [vmem:[#allocation3 + $0x28] sm:$0xff] %v1902
      %1935 = vst [vmem:[#allocation3 + $0x30] sm:$0xff] %v1903
      %1936 = vst [vmem:[#allocation3 + $0x38] sm:$0xff] %v1904
      %1937 = vst [vmem:[#allocation3 + $0x40] sm:$0xff] %v1905
      %1938 = vst [vmem:[#allocation3 + $0x48] sm:$0xff] %v1906
      %1939 = vst [vmem:[#allocation3 + $0x50] sm:$0xff] %v1907
      %1940 = vst [vmem:[#allocation3 + $0x58] sm:$0xff] %v1908
      %1941 = vst [vmem:[#allocation3 + $0x60] sm:$0xff] %v1909
      %1942 = vst [vmem:[#allocation3 + $0x68] sm:$0xff] %v1910
      %1943 = vst [vmem:[#allocation3 + $0x70] sm:$0xff] %v1911
      %1944 = vst [vmem:[#allocation3 + $0x78] sm:$0xff] %v1912
      %1945 = vst [vmem:[#allocation3 + $0x80] sm:$0xff] %v1913
      %1946 = vst [vmem:[#allocation3 + $0x88] sm:$0xff] %v1914
      %1947 = vst [vmem:[#allocation3 + $0x90] sm:$0xff] %v1915
      %1948 = vst [vmem:[#allocation3 + $0x98] sm:$0xff] %v1916
      %1949 = vst [vmem:[#allocation3 + $0xa0] sm:$0xff] %v1917
      %1950 = vst [vmem:[#allocation3 + $0xa8] sm:$0xff] %v1918
      %1951 = vst [vmem:[#allocation3 + $0xb0] sm:$0xff] %v1919
      %1952 = vst [vmem:[#allocation3 + $0xb8] sm:$0xff] %v1920
      %1953 = vst [vmem:[#allocation3 + $0xc0] sm:$0xff] %v1921
      %1954 = vst [vmem:[#allocation3 + $0xc8] sm:$0xff] %v1922
      %1955 = vst [vmem:[#allocation3 + $0xd0] sm:$0xff] %v1923
      %1956 = vst [vmem:[#allocation3 + $0xd8] sm:$0xff] %v1924
      %1957 = vst [vmem:[#allocation3 + $0xe0] sm:$0xff] %v1925
      %1958 = vst [vmem:[#allocation3 + $0xe8] sm:$0xff] %v1926
      %1959 = vst [vmem:[#allocation3 + $0xf0] sm:$0xff] %v1927
      %1960 = vst [vmem:[#allocation3 + $0xf8] sm:$0xff] %v1928
      %v1961 = vld [vmem:[#allocation3] sm:$0xff]
      %v1962 = vld [vmem:[#allocation3 + $0x8] sm:$0xff]
      %v1963 = vld [vmem:[#allocation3 + $0x10] sm:$0xff]
      %v1964 = vld [vmem:[#allocation3 + $0x18] sm:$0xff]
      %v1965 = vld [vmem:[#allocation3 + $0x20] sm:$0xff]
      %v1966 = vld [vmem:[#allocation3 + $0x28] sm:$0xff]
      %v1967 = vld [vmem:[#allocation3 + $0x30] sm:$0xff]
      %v1968 = vld [vmem:[#allocation3 + $0x38] sm:$0xff]
      %v1969 = vld [vmem:[#allocation3 + $0x40] sm:$0xff]
      %v1970 = vld [vmem:[#allocation3 + $0x48] sm:$0xff]
      %v1971 = vld [vmem:[#allocation3 + $0x50] sm:$0xff]
      %v1972 = vld [vmem:[#allocation3 + $0x58] sm:$0xff]
      %v1973 = vld [vmem:[#allocation3 + $0x60] sm:$0xff]
      %v1974 = vld [vmem:[#allocation3 + $0x68] sm:$0xff]
      %v1975 = vld [vmem:[#allocation3 + $0x70] sm:$0xff]
      %v1976 = vld [vmem:[#allocation3 + $0x78] sm:$0xff]
      %v1977 = vld [vmem:[#allocation3 + $0x80] sm:$0xff]
      %v1978 = vld [vmem:[#allocation3 + $0x88] sm:$0xff]
      %v1979 = vld [vmem:[#allocation3 + $0x90] sm:$0xff]
      %v1980 = vld [vmem:[#allocation3 + $0x98] sm:$0xff]
      %v1981 = vld [vmem:[#allocation3 + $0xa0] sm:$0xff]
      %v1982 = vld [vmem:[#allocation3 + $0xa8] sm:$0xff]
      %v1983 = vld [vmem:[#allocation3 + $0xb0] sm:$0xff]
      %v1984 = vld [vmem:[#allocation3 + $0xb8] sm:$0xff]
      %v1985 = vld [vmem:[#allocation3 + $0xc0] sm:$0xff]
      %v1986 = vld [vmem:[#allocation3 + $0xc8] sm:$0xff]
      %v1987 = vld [vmem:[#allocation3 + $0xd0] sm:$0xff]
      %v1988 = vld [vmem:[#allocation3 + $0xd8] sm:$0xff]
      %v1989 = vld [vmem:[#allocation3 + $0xe0] sm:$0xff]
      %v1990 = vld [vmem:[#allocation3 + $0xe8] sm:$0xff]
      %v1991 = vld [vmem:[#allocation3 + $0xf0] sm:$0xff]
      %v1992 = vld [vmem:[#allocation3 + $0xf8] sm:$0xff]
      %v1993 = vld [vmem:[#allocation2 + $0x60] sm:$0xff]
      %v1994 = vld [vmem:[#allocation2 + $0x68] sm:$0xff]
      %v1995 = vld [vmem:[#allocation2 + $0x70] sm:$0xff]
      %v1996 = vld [vmem:[#allocation2 + $0x78] sm:$0xff]
      %v1997 = vld [vmem:[#allocation2 + $0x80] sm:$0xff]
      %v1998 = vld [vmem:[#allocation2 + $0x88] sm:$0xff]
      %v1999 = vld [vmem:[#allocation2 + $0x90] sm:$0xff]
      %v2000 = vld [vmem:[#allocation2 + $0x98] sm:$0xff]
      %v2001 = vld [vmem:[#allocation2 + $0xa0] sm:$0xff]
      %v2002 = vld [vmem:[#allocation2 + $0xa8] sm:$0xff]
      %v2003 = vld [vmem:[#allocation2 + $0xb0] sm:$0xff]
      %v2004 = vld [vmem:[#allocation2 + $0xb8] sm:$0xff]
      %v2005 = vld [vmem:[#allocation2 + $0xc0] sm:$0xff]
      %v2006 = vld [vmem:[#allocation2 + $0xc8] sm:$0xff]
      %v2007 = vld [vmem:[#allocation2 + $0xd0] sm:$0xff]
      %v2008 = vld [vmem:[#allocation2 + $0xd8] sm:$0xff]
      %v2009 = vld [vmem:[#allocation2 + $0xe0] sm:$0xff]
      %v2010 = vld [vmem:[#allocation2 + $0xe8] sm:$0xff]
      %v2011 = vld [vmem:[#allocation2 + $0xf0] sm:$0xff]
      %v2012 = vld [vmem:[#allocation2 + $0xf8] sm:$0xff]
      %v2013 = vld [vmem:[#allocation2 + $0x100] sm:$0xff]
      %v2014 = vld [vmem:[#allocation2 + $0x108] sm:$0xff]
      %v2015 = vld [vmem:[#allocation2 + $0x110] sm:$0xff]
      %v2016 = vld [vmem:[#allocation2 + $0x118] sm:$0xff]
      %v2017 = vld [vmem:[#allocation2 + $0x120] sm:$0xff]
      %v2018 = vld [vmem:[#allocation2 + $0x128] sm:$0xff]
      %v2019 = vld [vmem:[#allocation2 + $0x130] sm:$0xff]
      %v2020 = vld [vmem:[#allocation2 + $0x138] sm:$0xff]
      %v2021 = vld [vmem:[#allocation2 + $0x140] sm:$0xff]
      %v2022 = vld [vmem:[#allocation2 + $0x148] sm:$0xff]
      %v2023 = vld [vmem:[#allocation2 + $0x150] sm:$0xff]
      %v2024 = vld [vmem:[#allocation2 + $0x158] sm:$0xff]
      %v2025 = vld [vmem:[#allocation2 + $0x160] sm:$0xff]
      %v2026 = vld [vmem:[#allocation2 + $0x168] sm:$0xff]
      %v2027 = vld [vmem:[#allocation2 + $0x170] sm:$0xff]
      %v2028 = vld [vmem:[#allocation2 + $0x178] sm:$0xff]
      %v2029 = vld [vmem:[#allocation2 + $0x180] sm:$0xff]
      %v2030 = vld [vmem:[#allocation2 + $0x188] sm:$0xff]
      %v2031 = vld [vmem:[#allocation2 + $0x190] sm:$0xff]
      %v2032 = vld [vmem:[#allocation2 + $0x198] sm:$0xff]
      %v2033 = vld [vmem:[#allocation2 + $0x1a0] sm:$0xff]
      %v2034 = vld [vmem:[#allocation2 + $0x1a8] sm:$0xff]
      %v2035 = vld [vmem:[#allocation2 + $0x1b0] sm:$0xff]
      %v2036 = vld [vmem:[#allocation2 + $0x1b8] sm:$0xff]
      %v2037 = vld [vmem:[#allocation2 + $0x1c0] sm:$0xff]
      %v2038 = vld [vmem:[#allocation2 + $0x1c8] sm:$0xff]
      %v2039 = vld [vmem:[#allocation2 + $0x1d0] sm:$0xff]
      %v2040 = vld [vmem:[#allocation2 + $0x1d8] sm:$0xff]
      %s2041 = scalar_lea.vmem %s1, 384
      %v2042 = vld [vmem:[%s2041] sm:$0xf]
      %v2043 = vld [vmem:[%s2041 + $0x4] sm:$0xf]
      %v2044 = vld [vmem:[%s2041 + $0x8] sm:$0xf]
      %v2045 = vld [vmem:[%s2041 + $0xc] sm:$0xf]
      %v2046 = vld [vmem:[%s2041 + $0x10] sm:$0xf]
      %v2047 = vld [vmem:[%s2041 + $0x14] sm:$0xf]
      %v2048 = vld [vmem:[%s2041 + $0x18] sm:$0xf]
      %v2049 = vld [vmem:[%s2041 + $0x1c] sm:$0xf]
      %v2050 = vld [vmem:[%s2041 + $0x20] sm:$0xf]
      %v2051 = vld [vmem:[%s2041 + $0x24] sm:$0xf]
      %v2052 = vld [vmem:[%s2041 + $0x28] sm:$0xf]
      %v2053 = vld [vmem:[%s2041 + $0x2c] sm:$0xf]
      %v2054 = vld [vmem:[%s2041 + $0x30] sm:$0xf]
      %v2055 = vld [vmem:[%s2041 + $0x34] sm:$0xf]
      %v2056 = vld [vmem:[%s2041 + $0x38] sm:$0xf]
      %v2057 = vld [vmem:[%s2041 + $0x3c] sm:$0xf]
      %v2058 = vld [vmem:[%s2041 + $0x40] sm:$0xf]
      %v2059 = vld [vmem:[%s2041 + $0x44] sm:$0xf]
      %v2060 = vld [vmem:[%s2041 + $0x48] sm:$0xf]
      %v2061 = vld [vmem:[%s2041 + $0x4c] sm:$0xf]
      %v2062 = vld [vmem:[%s2041 + $0x50] sm:$0xf]
      %v2063 = vld [vmem:[%s2041 + $0x54] sm:$0xf]
      %v2064 = vld [vmem:[%s2041 + $0x58] sm:$0xf]
      %v2065 = vld [vmem:[%s2041 + $0x5c] sm:$0xf]
      %v2066 = vld [vmem:[%s2041 + $0x60] sm:$0xf]
      %v2067 = vld [vmem:[%s2041 + $0x64] sm:$0xf]
      %v2068 = vld [vmem:[%s2041 + $0x68] sm:$0xf]
      %v2069 = vld [vmem:[%s2041 + $0x6c] sm:$0xf]
      %v2070 = vld [vmem:[%s2041 + $0x70] sm:$0xf]
      %v2071 = vld [vmem:[%s2041 + $0x74] sm:$0xf]
      %v2072 = vld [vmem:[%s2041 + $0x78] sm:$0xf]
      %v2073 = vld [vmem:[%s2041 + $0x7c] sm:$0xf]
      %v2074 = vld [vmem:[%s2041 + $0x80] sm:$0xf]
      %v2075 = vld [vmem:[%s2041 + $0x84] sm:$0xf]
      %v2076 = vld [vmem:[%s2041 + $0x88] sm:$0xf]
      %v2077 = vld [vmem:[%s2041 + $0x8c] sm:$0xf]
      %v2078 = vld [vmem:[%s2041 + $0x90] sm:$0xf]
      %v2079 = vld [vmem:[%s2041 + $0x94] sm:$0xf]
      %v2080 = vld [vmem:[%s2041 + $0x98] sm:$0xf]
      %v2081 = vld [vmem:[%s2041 + $0x9c] sm:$0xf]
      %v2082 = vld [vmem:[%s2041 + $0xa0] sm:$0xf]
      %v2083 = vld [vmem:[%s2041 + $0xa4] sm:$0xf]
      %v2084 = vld [vmem:[%s2041 + $0xa8] sm:$0xf]
      %v2085 = vld [vmem:[%s2041 + $0xac] sm:$0xf]
      %v2086 = vld [vmem:[%s2041 + $0xb0] sm:$0xf]
      %v2087 = vld [vmem:[%s2041 + $0xb4] sm:$0xf]
      %v2088 = vld [vmem:[%s2041 + $0xb8] sm:$0xf]
      %v2089 = vld [vmem:[%s2041 + $0xbc] sm:$0xf]
      %v2138 = vunpack.c.l.b16 %v2042
      %v2139 = vunpack.c.l.b16 %v2043
      %v2140 = vunpack.c.l.b16 %v2044
      %v2141 = vunpack.c.l.b16 %v2045
      %v2142 = vunpack.c.l.b16 %v2046
      %v2143 = vunpack.c.l.b16 %v2047
      %v2144 = vunpack.c.l.b16 %v2048
      %v2145 = vunpack.c.l.b16 %v2049
      %v2146 = vunpack.c.l.b16 %v2050
      %v2147 = vunpack.c.l.b16 %v2051
      %v2148 = vunpack.c.l.b16 %v2052
      %v2149 = vunpack.c.l.b16 %v2053
      %v2150 = vunpack.c.l.b16 %v2054
      %v2151 = vunpack.c.l.b16 %v2055
      %v2152 = vunpack.c.l.b16 %v2056
      %v2153 = vunpack.c.l.b16 %v2057
      %v2154 = vunpack.c.l.b16 %v2058
      %v2155 = vunpack.c.l.b16 %v2059
      %v2156 = vunpack.c.l.b16 %v2060
      %v2157 = vunpack.c.l.b16 %v2061
      %v2158 = vunpack.c.l.b16 %v2062
      %v2159 = vunpack.c.l.b16 %v2063
      %v2160 = vunpack.c.l.b16 %v2064
      %v2161 = vunpack.c.l.b16 %v2065
      %v2162 = vunpack.c.l.b16 %v2066
      %v2163 = vunpack.c.l.b16 %v2067
      %v2164 = vunpack.c.l.b16 %v2068
      %v2165 = vunpack.c.l.b16 %v2069
      %v2166 = vunpack.c.l.b16 %v2070
      %v2167 = vunpack.c.l.b16 %v2071
      %v2168 = vunpack.c.l.b16 %v2072
      %v2169 = vunpack.c.l.b16 %v2073
      %v2170 = vunpack.c.l.b16 %v2074
      %v2171 = vunpack.c.l.b16 %v2075
      %v2172 = vunpack.c.l.b16 %v2076
      %v2173 = vunpack.c.l.b16 %v2077
      %v2174 = vunpack.c.l.b16 %v2078
      %v2175 = vunpack.c.l.b16 %v2079
      %v2176 = vunpack.c.l.b16 %v2080
      %v2177 = vunpack.c.l.b16 %v2081
      %v2178 = vunpack.c.l.b16 %v2082
      %v2179 = vunpack.c.l.b16 %v2083
      %v2180 = vunpack.c.l.b16 %v2084
      %v2181 = vunpack.c.l.b16 %v2085
      %v2182 = vunpack.c.l.b16 %v2086
      %v2183 = vunpack.c.l.b16 %v2087
      %v2184 = vunpack.c.l.b16 %v2088
      %v2185 = vunpack.c.l.b16 %v2089
      %v2186 = vpack.c.b16 %v2139, %v2138
      %v2187 = vpack.c.b16 %v2141, %v2140
      %v2188 = vpack.c.b16 %v2143, %v2142
      %v2189 = vpack.c.b16 %v2145, %v2144
      %v2190 = vpack.c.b16 %v2147, %v2146
      %v2191 = vpack.c.b16 %v2149, %v2148
      %v2192 = vpack.c.b16 %v2151, %v2150
      %v2193 = vpack.c.b16 %v2153, %v2152
      %v2194 = vpack.c.b16 %v2155, %v2154
      %v2195 = vpack.c.b16 %v2157, %v2156
      %v2196 = vpack.c.b16 %v2159, %v2158
      %v2197 = vpack.c.b16 %v2161, %v2160
      %v2198 = vpack.c.b16 %v2163, %v2162
      %v2199 = vpack.c.b16 %v2165, %v2164
      %v2200 = vpack.c.b16 %v2167, %v2166
      %v2201 = vpack.c.b16 %v2169, %v2168
      %v2202 = vpack.c.b16 %v2171, %v2170
      %v2203 = vpack.c.b16 %v2173, %v2172
      %v2204 = vpack.c.b16 %v2175, %v2174
      %v2205 = vpack.c.b16 %v2177, %v2176
      %v2206 = vpack.c.b16 %v2179, %v2178
      %v2207 = vpack.c.b16 %v2181, %v2180
      %v2208 = vpack.c.b16 %v2183, %v2182
      %v2209 = vpack.c.b16 %v2185, %v2184
      %2234 = vmatprep.subr.bf16.mxu0 0
      %2235 = vmatpush1.bf16.msra.mxu0 %v2186
      %2236 = vmatprep.subr.bf16.mxu0 0
      %2237 = vmatpush1.bf16.msra.mxu0 %v2187
      %2238 = vmatprep.subr.bf16.mxu0 0
      %2239 = vmatpush1.bf16.msra.mxu0 %v2188
      %2240 = vmatprep.subr.bf16.mxu0 0
      %2241 = vmatpush1.bf16.msra.mxu0 %v2189
      %2242 = vmatprep.subr.bf16.mxu0 0
      %2243 = vmatpush1.bf16.msra.mxu0 %v2190
      %2244 = vmatprep.subr.bf16.mxu0 0
      %2245 = vmatpush1.bf16.msra.mxu0 %v2191
      %2246 = vmatprep.subr.bf16.mxu0 0
      %2247 = vmatpush1.bf16.msra.mxu0 %v2192
      %2248 = vmatprep.subr.bf16.mxu0 0
      %2249 = vmatpush1.bf16.msra.mxu0 %v2193
      %2250 = vmatprep.subr.bf16.mxu0 0
      %2251 = vmatpush1.bf16.msra.mxu0 %v2194
      %2252 = vmatprep.subr.bf16.mxu0 0
      %2253 = vmatpush1.bf16.msra.mxu0 %v2195
      %2254 = vmatprep.subr.bf16.mxu0 0
      %2255 = vmatpush1.bf16.msra.mxu0 %v2196
      %2256 = vmatprep.subr.bf16.mxu0 0
      %2257 = vmatpush1.bf16.msra.mxu0 %v2197
      %2258 = vmatprep.subr.bf16.mxu0 0
      %2259 = vmatpush1.bf16.msra.mxu0 %v2198
      %2260 = vmatprep.subr.bf16.mxu0 0
      %2261 = vmatpush1.bf16.msra.mxu0 %v2199
      %2262 = vmatprep.subr.bf16.mxu0 0
      %2263 = vmatpush1.bf16.msra.mxu0 %v2200
      %2264 = vmatprep.subr.bf16.mxu0 0
      %2265 = vmatpush1.bf16.msra.mxu0 %v2201
      %2266 = vmatprep.mubr.bf16.mxu0 %v1994
      %2267 = vmatmul.mubr.bf16.gmra.mrb[0].mxu0 %v1993
      %v2268 = vpop.f32.mrb[0].mxu0
      %v2269 = vadd.f32 0.0, %v2268
      %v2270 = vpop.f32.mrb[0].mxu0
      %v2271 = vpop.f32.mrb[0].mxu0
      %v2272 = vadd.f32 0.0, %v2271
      %v2273 = vpop.f32.mrb[0].mxu0
      %2274 = vmatprep.mubr.bf16.mxu0 %v1997
      %2275 = vmatmul.mubr.bf16.gmra.mrb[0].mxu0 %v1996
      %v2276 = vpop.f32.mrb[0].mxu0
      %v2277 = vadd.f32 0.0, %v2276
      %v2278 = vpop.f32.mrb[0].mxu0
      %v2279 = vpop.f32.mrb[0].mxu0
      %v2280 = vadd.f32 0.0, %v2279
      %v2281 = vpop.f32.mrb[0].mxu0
      %2282 = vmatprep.mubr.bf16.mxu0 %v2000
      %2283 = vmatmul.mubr.bf16.gmra.mrb[0].mxu0 %v1999
      %v2284 = vpop.f32.mrb[0].mxu0
      %v2285 = vadd.f32 0.0, %v2284
      %v2286 = vpop.f32.mrb[0].mxu0
      %v2287 = vpop.f32.mrb[0].mxu0
      %v2288 = vadd.f32 0.0, %v2287
      %v2289 = vpop.f32.mrb[0].mxu0
      %2290 = vmatprep.mubr.bf16.mxu0 %v2003
      %2291 = vmatmul.mubr.bf16.gmra.mrb[0].mxu0 %v2002
      %v2292 = vpop.f32.mrb[0].mxu0
      %v2293 = vadd.f32 0.0, %v2292
      %v2294 = vpop.f32.mrb[0].mxu0
      %v2295 = vpop.f32.mrb[0].mxu0
      %v2296 = vadd.f32 0.0, %v2295
      %v2297 = vpop.f32.mrb[0].mxu0
      %2298 = vmatprep.mubr.bf16.mxu0 %v2006
      %2299 = vmatmul.mubr.bf16.gmra.mrb[0].mxu0 %v2005
      %v2300 = vpop.f32.mrb[0].mxu0
      %v2301 = vadd.f32 0.0, %v2300
      %v2302 = vpop.f32.mrb[0].mxu0
      %v2303 = vpop.f32.mrb[0].mxu0
      %v2304 = vadd.f32 0.0, %v2303
      %v2305 = vpop.f32.mrb[0].mxu0
      %2306 = vmatprep.mubr.bf16.mxu0 %v2009
      %2307 = vmatmul.mubr.bf16.gmra.mrb[0].mxu0 %v2008
      %v2308 = vpop.f32.mrb[0].mxu0
      %v2309 = vadd.f32 0.0, %v2308
      %v2310 = vpop.f32.mrb[0].mxu0
      %v2311 = vpop.f32.mrb[0].mxu0
      %v2312 = vadd.f32 0.0, %v2311
      %v2313 = vpop.f32.mrb[0].mxu0
      %2314 = vmatprep.mubr.bf16.mxu0 %v2012
      %2315 = vmatmul.mubr.bf16.gmra.mrb[0].mxu0 %v2011
      %v2316 = vpop.f32.mrb[0].mxu0
      %v2317 = vadd.f32 0.0, %v2316
      %v2318 = vpop.f32.mrb[0].mxu0
      %v2319 = vpop.f32.mrb[0].mxu0
      %v2320 = vadd.f32 0.0, %v2319
      %v2321 = vpop.f32.mrb[0].mxu0
      %2322 = vmatprep.mubr.bf16.mxu0 %v2015
      %2323 = vmatmul.mubr.bf16.gmra.mrb[0].mxu0 %v2014
      %v2324 = vpop.f32.mrb[0].mxu0
      %v2325 = vadd.f32 0.0, %v2324
      %v2326 = vpop.f32.mrb[0].mxu0
      %v2327 = vpop.f32.mrb[0].mxu0
      %v2328 = vadd.f32 0.0, %v2327
      %v2329 = vpop.f32.mrb[0].mxu0
      %2330 = vmatprep.mubr.bf16.mxu0 %v2018
      %2331 = vmatmul.mubr.bf16.gmra.mrb[0].mxu0 %v2017
      %v2332 = vpop.f32.mrb[0].mxu0
      %v2333 = vadd.f32 0.0, %v2332
      %v2334 = vpop.f32.mrb[0].mxu0
      %v2335 = vpop.f32.mrb[0].mxu0
      %v2336 = vadd.f32 0.0, %v2335
      %v2337 = vpop.f32.mrb[0].mxu0
      %2338 = vmatprep.mubr.bf16.mxu0 %v2021
      %2339 = vmatmul.mubr.bf16.gmra.mrb[0].mxu0 %v2020
      %v2340 = vpop.f32.mrb[0].mxu0
      %v2341 = vadd.f32 0.0, %v2340
      %v2342 = vpop.f32.mrb[0].mxu0
      %v2343 = vpop.f32.mrb[0].mxu0
      %v2344 = vadd.f32 0.0, %v2343
      %v2345 = vpop.f32.mrb[0].mxu0
      %2346 = vmatprep.mubr.bf16.mxu0 %v2024
      %2347 = vmatmul.mubr.bf16.gmra.mrb[0].mxu0 %v2023
      %v2348 = vpop.f32.mrb[0].mxu0
      %v2349 = vadd.f32 0.0, %v2348
      %v2350 = vpop.f32.mrb[0].mxu0
      %v2351 = vpop.f32.mrb[0].mxu0
      %v2352 = vadd.f32 0.0, %v2351
      %v2353 = vpop.f32.mrb[0].mxu0
      %2354 = vmatprep.mubr.bf16.mxu0 %v2027
      %2355 = vmatmul.mubr.bf16.gmra.mrb[0].mxu0 %v2026
      %v2356 = vpop.f32.mrb[0].mxu0
      %v2357 = vadd.f32 0.0, %v2356
      %v2358 = vpop.f32.mrb[0].mxu0
      %v2359 = vpop.f32.mrb[0].mxu0
      %v2360 = vadd.f32 0.0, %v2359
      %v2361 = vpop.f32.mrb[0].mxu0
      %2362 = vmatprep.mubr.bf16.mxu0 %v2030
      %2363 = vmatmul.mubr.bf16.gmra.mrb[0].mxu0 %v2029
      %v2364 = vpop.f32.mrb[0].mxu0
      %v2365 = vadd.f32 0.0, %v2364
      %v2366 = vpop.f32.mrb[0].mxu0
      %v2367 = vpop.f32.mrb[0].mxu0
      %v2368 = vadd.f32 0.0, %v2367
      %v2369 = vpop.f32.mrb[0].mxu0
      %2370 = vmatprep.mubr.bf16.mxu0 %v2033
      %2371 = vmatmul.mubr.bf16.gmra.mrb[0].mxu0 %v2032
      %v2372 = vpop.f32.mrb[0].mxu0
      %v2373 = vadd.f32 0.0, %v2372
      %v2374 = vpop.f32.mrb[0].mxu0
      %v2375 = vpop.f32.mrb[0].mxu0
      %v2376 = vadd.f32 0.0, %v2375
      %v2377 = vpop.f32.mrb[0].mxu0
      %2378 = vmatprep.mubr.bf16.mxu0 %v2036
      %2379 = vmatmul.mubr.bf16.gmra.mrb[0].mxu0 %v2035
      %v2380 = vpop.f32.mrb[0].mxu0
      %v2381 = vadd.f32 0.0, %v2380
      %v2382 = vpop.f32.mrb[0].mxu0
      %v2383 = vpop.f32.mrb[0].mxu0
      %v2384 = vadd.f32 0.0, %v2383
      %v2385 = vpop.f32.mrb[0].mxu0
      %2386 = vmatprep.mubr.bf16.mxu0 %v2039
      %2387 = vmatmul.mubr.bf16.gmra.mrb[0].mxu0 %v2038
      %v2388 = vpop.f32.mrb[0].mxu0
      %v2389 = vadd.f32 0.0, %v2388
      %v2390 = vpop.f32.mrb[0].mxu0
      %v2391 = vpop.f32.mrb[0].mxu0
      %v2392 = vadd.f32 0.0, %v2391
      %v2393 = vpop.f32.mrb[0].mxu0
      %2394 = vdwg.mxu0
      %2395 = vmatprep.subr.bf16.mxu0 0
      %2396 = vmatpush1.bf16.msra.mxu0 %v2202
      %2397 = vmatprep.subr.bf16.mxu0 0
      %2398 = vmatpush1.bf16.msra.mxu0 %v2203
      %2399 = vmatprep.subr.bf16.mxu0 0
      %2400 = vmatpush1.bf16.msra.mxu0 %v2204
      %2401 = vmatprep.subr.bf16.mxu0 0
      %2402 = vmatpush1.bf16.msra.mxu0 %v2205
      %2403 = vmatprep.subr.bf16.mxu0 0
      %2404 = vmatpush1.bf16.msra.mxu0 %v2206
      %2405 = vmatprep.subr.bf16.mxu0 0
      %2406 = vmatpush1.bf16.msra.mxu0 %v2207
      %2407 = vmatprep.subr.bf16.mxu0 0
      %2408 = vmatpush1.bf16.msra.mxu0 %v2208
      %2409 = vmatprep.subr.bf16.mxu0 0
      %2410 = vmatpush1.bf16.msra.mxu0 %v2209
      %2411 = vmatprep.subr.bf16.mxu0 0
      %2412 = vmatpush1.bf16.msra.mxu0 0
      %2413 = vmatprep.subr.bf16.mxu0 0
      %2414 = vmatpush1.bf16.msra.mxu0 0
      %2415 = vmatprep.subr.bf16.mxu0 0
      %2416 = vmatpush1.bf16.msra.mxu0 0
      %2417 = vmatprep.subr.bf16.mxu0 0
      %2418 = vmatpush1.bf16.msra.mxu0 0
      %2419 = vmatprep.subr.bf16.mxu0 0
      %2420 = vmatpush1.bf16.msra.mxu0 0
      %2421 = vmatprep.subr.bf16.mxu0 0
      %2422 = vmatpush1.bf16.msra.mxu0 0
      %2423 = vmatprep.subr.bf16.mxu0 0
      %2424 = vmatpush1.bf16.msra.mxu0 0
      %2425 = vmatprep.subr.bf16.mxu0 0
      %2426 = vmatpush1.bf16.msra.mxu0 0
      %2427 = vmatprep.mubr.bf16.mxu0 0
      %2428 = vmatmul.mubr.bf16.gmra.mrb[0].mxu0 %v1995
      %v2429 = vpop.f32.mrb[0].mxu0
      %v2430 = vadd.f32 %v2269, %v2429
      %v2431 = vpop.f32.mrb[0].mxu0
      %v2432 = vpop.f32.mrb[0].mxu0
      %v2433 = vadd.f32 %v2272, %v2432
      %v2434 = vpop.f32.mrb[0].mxu0
      %2435 = vmatprep.mubr.bf16.mxu0 0
      %2436 = vmatmul.mubr.bf16.gmra.mrb[0].mxu0 %v1998
      %v2437 = vpop.f32.mrb[0].mxu0
      %v2438 = vadd.f32 %v2277, %v2437
      %v2439 = vpop.f32.mrb[0].mxu0
      %v2440 = vpop.f32.mrb[0].mxu0
      %v2441 = vadd.f32 %v2280, %v2440
      %v2442 = vpop.f32.mrb[0].mxu0
      %2443 = vmatprep.mubr.bf16.mxu0 0
      %2444 = vmatmul.mubr.bf16.gmra.mrb[0].mxu0 %v2001
      %v2445 = vpop.f32.mrb[0].mxu0
      %v2446 = vadd.f32 %v2285, %v2445
      %v2447 = vpop.f32.mrb[0].mxu0
      %v2448 = vpop.f32.mrb[0].mxu0
      %v2449 = vadd.f32 %v2288, %v2448
      %v2450 = vpop.f32.mrb[0].mxu0
      %2451 = vmatprep.mubr.bf16.mxu0 0
      %2452 = vmatmul.mubr.bf16.gmra.mrb[0].mxu0 %v2004
      %v2453 = vpop.f32.mrb[0].mxu0
      %v2454 = vadd.f32 %v2293, %v2453
      %v2455 = vpop.f32.mrb[0].mxu0
      %v2456 = vpop.f32.mrb[0].mxu0
      %v2457 = vadd.f32 %v2296, %v2456
      %v2458 = vpop.f32.mrb[0].mxu0
      %2459 = vmatprep.mubr.bf16.mxu0 0
      %2460 = vmatmul.mubr.bf16.gmra.mrb[0].mxu0 %v2007
      %v2461 = vpop.f32.mrb[0].mxu0
      %v2462 = vadd.f32 %v2301, %v2461
      %v2463 = vpop.f32.mrb[0].mxu0
      %v2464 = vpop.f32.mrb[0].mxu0
      %v2465 = vadd.f32 %v2304, %v2464
      %v2466 = vpop.f32.mrb[0].mxu0
      %2467 = vmatprep.mubr.bf16.mxu0 0
      %2468 = vmatmul.mubr.bf16.gmra.mrb[0].mxu0 %v2010
      %v2469 = vpop.f32.mrb[0].mxu0
      %v2470 = vadd.f32 %v2309, %v2469
      %v2471 = vpop.f32.mrb[0].mxu0
      %v2472 = vpop.f32.mrb[0].mxu0
      %v2473 = vadd.f32 %v2312, %v2472
      %v2474 = vpop.f32.mrb[0].mxu0
      %2475 = vmatprep.mubr.bf16.mxu0 0
      %2476 = vmatmul.mubr.bf16.gmra.mrb[0].mxu0 %v2013
      %v2477 = vpop.f32.mrb[0].mxu0
      %v2478 = vadd.f32 %v2317, %v2477
      %v2479 = vpop.f32.mrb[0].mxu0
      %v2480 = vpop.f32.mrb[0].mxu0
      %v2481 = vadd.f32 %v2320, %v2480
      %v2482 = vpop.f32.mrb[0].mxu0
      %2483 = vmatprep.mubr.bf16.mxu0 0
      %2484 = vmatmul.mubr.bf16.gmra.mrb[0].mxu0 %v2016
      %v2485 = vpop.f32.mrb[0].mxu0
      %v2486 = vadd.f32 %v2325, %v2485
      %v2487 = vpop.f32.mrb[0].mxu0
      %v2488 = vpop.f32.mrb[0].mxu0
      %v2489 = vadd.f32 %v2328, %v2488
      %v2490 = vpop.f32.mrb[0].mxu0
      %2491 = vmatprep.mubr.bf16.mxu0 0
      %2492 = vmatmul.mubr.bf16.gmra.mrb[0].mxu0 %v2019
      %v2493 = vpop.f32.mrb[0].mxu0
      %v2494 = vadd.f32 %v2333, %v2493
      %v2495 = vpop.f32.mrb[0].mxu0
      %v2496 = vpop.f32.mrb[0].mxu0
      %v2497 = vadd.f32 %v2336, %v2496
      %v2498 = vpop.f32.mrb[0].mxu0
      %2499 = vmatprep.mubr.bf16.mxu0 0
      %2500 = vmatmul.mubr.bf16.gmra.mrb[0].mxu0 %v2022
      %v2501 = vpop.f32.mrb[0].mxu0
      %v2502 = vadd.f32 %v2341, %v2501
      %v2503 = vpop.f32.mrb[0].mxu0
      %v2504 = vpop.f32.mrb[0].mxu0
      %v2505 = vadd.f32 %v2344, %v2504
      %v2506 = vpop.f32.mrb[0].mxu0
      %2507 = vmatprep.mubr.bf16.mxu0 0
      %2508 = vmatmul.mubr.bf16.gmra.mrb[0].mxu0 %v2025
      %v2509 = vpop.f32.mrb[0].mxu0
      %v2510 = vadd.f32 %v2349, %v2509
      %v2511 = vpop.f32.mrb[0].mxu0
      %v2512 = vpop.f32.mrb[0].mxu0
      %v2513 = vadd.f32 %v2352, %v2512
      %v2514 = vpop.f32.mrb[0].mxu0
      %2515 = vmatprep.mubr.bf16.mxu0 0
      %2516 = vmatmul.mubr.bf16.gmra.mrb[0].mxu0 %v2028
      %v2517 = vpop.f32.mrb[0].mxu0
      %v2518 = vadd.f32 %v2357, %v2517
      %v2519 = vpop.f32.mrb[0].mxu0
      %v2520 = vpop.f32.mrb[0].mxu0
      %v2521 = vadd.f32 %v2360, %v2520
      %v2522 = vpop.f32.mrb[0].mxu0
      %2523 = vmatprep.mubr.bf16.mxu0 0
      %2524 = vmatmul.mubr.bf16.gmra.mrb[0].mxu0 %v2031
      %v2525 = vpop.f32.mrb[0].mxu0
      %v2526 = vadd.f32 %v2365, %v2525
      %v2527 = vpop.f32.mrb[0].mxu0
      %v2528 = vpop.f32.mrb[0].mxu0
      %v2529 = vadd.f32 %v2368, %v2528
      %v2530 = vpop.f32.mrb[0].mxu0
      %2531 = vmatprep.mubr.bf16.mxu0 0
      %2532 = vmatmul.mubr.bf16.gmra.mrb[0].mxu0 %v2034
      %v2533 = vpop.f32.mrb[0].mxu0
      %v2534 = vadd.f32 %v2373, %v2533
      %v2535 = vpop.f32.mrb[0].mxu0
      %v2536 = vpop.f32.mrb[0].mxu0
      %v2537 = vadd.f32 %v2376, %v2536
      %v2538 = vpop.f32.mrb[0].mxu0
      %2539 = vmatprep.mubr.bf16.mxu0 0
      %2540 = vmatmul.mubr.bf16.gmra.mrb[0].mxu0 %v2037
      %v2541 = vpop.f32.mrb[0].mxu0
      %v2542 = vadd.f32 %v2381, %v2541
      %v2543 = vpop.f32.mrb[0].mxu0
      %v2544 = vpop.f32.mrb[0].mxu0
      %v2545 = vadd.f32 %v2384, %v2544
      %v2546 = vpop.f32.mrb[0].mxu0
      %2547 = vmatprep.mubr.bf16.mxu0 0
      %2548 = vmatmul.mubr.bf16.gmra.mrb[0].mxu0 %v2040
      %v2549 = vpop.f32.mrb[0].mxu0
      %v2550 = vadd.f32 %v2389, %v2549
      %v2551 = vpop.f32.mrb[0].mxu0
      %v2552 = vpop.f32.mrb[0].mxu0
      %v2553 = vadd.f32 %v2392, %v2552
      %v2554 = vpop.f32.mrb[0].mxu0
      %2555 = vdwg.mxu0
      %v2556 = vadd.f32 %v1961, %v2430
      %v2557 = vadd.f32 %v1962, %v2433
      %v2558 = vadd.f32 %v1963, %v2438
      %v2559 = vadd.f32 %v1964, %v2441
      %v2560 = vadd.f32 %v1965, %v2446
      %v2561 = vadd.f32 %v1966, %v2449
      %v2562 = vadd.f32 %v1967, %v2454
      %v2563 = vadd.f32 %v1968, %v2457
      %v2564 = vadd.f32 %v1969, %v2462
      %v2565 = vadd.f32 %v1970, %v2465
      %v2566 = vadd.f32 %v1971, %v2470
      %v2567 = vadd.f32 %v1972, %v2473
      %v2568 = vadd.f32 %v1973, %v2478
      %v2569 = vadd.f32 %v1974, %v2481
      %v2570 = vadd.f32 %v1975, %v2486
      %v2571 = vadd.f32 %v1976, %v2489
      %v2572 = vadd.f32 %v1977, %v2494
      %v2573 = vadd.f32 %v1978, %v2497
      %v2574 = vadd.f32 %v1979, %v2502
      %v2575 = vadd.f32 %v1980, %v2505
      %v2576 = vadd.f32 %v1981, %v2510
      %v2577 = vadd.f32 %v1982, %v2513
      %v2578 = vadd.f32 %v1983, %v2518
      %v2579 = vadd.f32 %v1984, %v2521
      %v2580 = vadd.f32 %v1985, %v2526
      %v2581 = vadd.f32 %v1986, %v2529
      %v2582 = vadd.f32 %v1987, %v2534
      %v2583 = vadd.f32 %v1988, %v2537
      %v2584 = vadd.f32 %v1989, %v2542
      %v2585 = vadd.f32 %v1990, %v2545
      %v2586 = vadd.f32 %v1991, %v2550
      %v2587 = vadd.f32 %v1992, %v2553
      %2588 = vst [vmem:[#allocation3] sm:$0xff] %v2556
      %2589 = vst [vmem:[#allocation3 + $0x8] sm:$0xff] %v2557
      %2590 = vst [vmem:[#allocation3 + $0x10] sm:$0xff] %v2558
      %2591 = vst [vmem:[#allocation3 + $0x18] sm:$0xff] %v2559
      %2592 = vst [vmem:[#allocation3 + $0x20] sm:$0xff] %v2560
      %2593 = vst [vmem:[#allocation3 + $0x28] sm:$0xff] %v2561
      %2594 = vst [vmem:[#allocation3 + $0x30] sm:$0xff] %v2562
      %2595 = vst [vmem:[#allocation3 + $0x38] sm:$0xff] %v2563
      %2596 = vst [vmem:[#allocation3 + $0x40] sm:$0xff] %v2564
      %2597 = vst [vmem:[#allocation3 + $0x48] sm:$0xff] %v2565
      %2598 = vst [vmem:[#allocation3 + $0x50] sm:$0xff] %v2566
      %2599 = vst [vmem:[#allocation3 + $0x58] sm:$0xff] %v2567
      %2600 = vst [vmem:[#allocation3 + $0x60] sm:$0xff] %v2568
      %2601 = vst [vmem:[#allocation3 + $0x68] sm:$0xff] %v2569
      %2602 = vst [vmem:[#allocation3 + $0x70] sm:$0xff] %v2570
      %2603 = vst [vmem:[#allocation3 + $0x78] sm:$0xff] %v2571
      %2604 = vst [vmem:[#allocation3 + $0x80] sm:$0xff] %v2572
      %2605 = vst [vmem:[#allocation3 + $0x88] sm:$0xff] %v2573
      %2606 = vst [vmem:[#allocation3 + $0x90] sm:$0xff] %v2574
      %2607 = vst [vmem:[#allocation3 + $0x98] sm:$0xff] %v2575
      %2608 = vst [vmem:[#allocation3 + $0xa0] sm:$0xff] %v2576
      %2609 = vst [vmem:[#allocation3 + $0xa8] sm:$0xff] %v2577
      %2610 = vst [vmem:[#allocation3 + $0xb0] sm:$0xff] %v2578
      %2611 = vst [vmem:[#allocation3 + $0xb8] sm:$0xff] %v2579
      %2612 = vst [vmem:[#allocation3 + $0xc0] sm:$0xff] %v2580
      %2613 = vst [vmem:[#allocation3 + $0xc8] sm:$0xff] %v2581
      %2614 = vst [vmem:[#allocation3 + $0xd0] sm:$0xff] %v2582
      %2615 = vst [vmem:[#allocation3 + $0xd8] sm:$0xff] %v2583
      %2616 = vst [vmem:[#allocation3 + $0xe0] sm:$0xff] %v2584
      %2617 = vst [vmem:[#allocation3 + $0xe8] sm:$0xff] %v2585
      %2618 = vst [vmem:[#allocation3 + $0xf0] sm:$0xff] %v2586
      %2619 = vst [vmem:[#allocation3 + $0xf8] sm:$0xff] %v2587
      %v2620 = vld [vmem:[#allocation3] sm:$0xff]
      %v2621 = vld [vmem:[#allocation3 + $0x8] sm:$0xff]
      %v2622 = vld [vmem:[#allocation3 + $0x10] sm:$0xff]
      %v2623 = vld [vmem:[#allocation3 + $0x18] sm:$0xff]
      %v2624 = vld [vmem:[#allocation3 + $0x20] sm:$0xff]
      %v2625 = vld [vmem:[#allocation3 + $0x28] sm:$0xff]
      %v2626 = vld [vmem:[#allocation3 + $0x30] sm:$0xff]
      %v2627 = vld [vmem:[#allocation3 + $0x38] sm:$0xff]
      %v2628 = vld [vmem:[#allocation3 + $0x40] sm:$0xff]
      %v2629 = vld [vmem:[#allocation3 + $0x48] sm:$0xff]
      %v2630 = vld [vmem:[#allocation3 + $0x50] sm:$0xff]
      %v2631 = vld [vmem:[#allocation3 + $0x58] sm:$0xff]
      %v2632 = vld [vmem:[#allocation3 + $0x60] sm:$0xff]
      %v2633 = vld [vmem:[#allocation3 + $0x68] sm:$0xff]
      %v2634 = vld [vmem:[#allocation3 + $0x70] sm:$0xff]
      %v2635 = vld [vmem:[#allocation3 + $0x78] sm:$0xff]
      %v2636 = vld [vmem:[#allocation3 + $0x80] sm:$0xff]
      %v2637 = vld [vmem:[#allocation3 + $0x88] sm:$0xff]
      %v2638 = vld [vmem:[#allocation3 + $0x90] sm:$0xff]
      %v2639 = vld [vmem:[#allocation3 + $0x98] sm:$0xff]
      %v2640 = vld [vmem:[#allocation3 + $0xa0] sm:$0xff]
      %v2641 = vld [vmem:[#allocation3 + $0xa8] sm:$0xff]
      %v2642 = vld [vmem:[#allocation3 + $0xb0] sm:$0xff]
      %v2643 = vld [vmem:[#allocation3 + $0xb8] sm:$0xff]
      %v2644 = vld [vmem:[#allocation3 + $0xc0] sm:$0xff]
      %v2645 = vld [vmem:[#allocation3 + $0xc8] sm:$0xff]
      %v2646 = vld [vmem:[#allocation3 + $0xd0] sm:$0xff]
      %v2647 = vld [vmem:[#allocation3 + $0xd8] sm:$0xff]
      %v2648 = vld [vmem:[#allocation3 + $0xe0] sm:$0xff]
      %v2649 = vld [vmem:[#allocation3 + $0xe8] sm:$0xff]
      %v2650 = vld [vmem:[#allocation3 + $0xf0] sm:$0xff]
      %v2651 = vld [vmem:[#allocation3 + $0xf8] sm:$0xff]
      %v2652 = vld [vmem:[%s2] sm:$0x1]
      %v2654 = vlaneseq
      %v2655 = vshrl.u32 %v2654, 7
      %v2656 = vsub.s32 0, %v2655
      %v2657 = vrot.slane %v2652, %v2656
      %v2659 = vadd.f32 %v2620, %v2657
      %v2660 = vadd.f32 %v2621, %v2657
      %v2661 = vadd.f32 %v2622, %v2657
      %v2662 = vadd.f32 %v2623, %v2657
      %v2663 = vadd.f32 %v2624, %v2657
      %v2664 = vadd.f32 %v2625, %v2657
      %v2665 = vadd.f32 %v2626, %v2657
      %v2666 = vadd.f32 %v2627, %v2657
      %v2667 = vadd.f32 %v2628, %v2657
      %v2668 = vadd.f32 %v2629, %v2657
      %v2669 = vadd.f32 %v2630, %v2657
      %v2670 = vadd.f32 %v2631, %v2657
      %v2671 = vadd.f32 %v2632, %v2657
      %v2672 = vadd.f32 %v2633, %v2657
      %v2673 = vadd.f32 %v2634, %v2657
      %v2674 = vadd.f32 %v2635, %v2657
      %v2675 = vadd.f32 %v2636, %v2657
      %v2676 = vadd.f32 %v2637, %v2657
      %v2677 = vadd.f32 %v2638, %v2657
      %v2678 = vadd.f32 %v2639, %v2657
      %v2679 = vadd.f32 %v2640, %v2657
      %v2680 = vadd.f32 %v2641, %v2657
      %v2681 = vadd.f32 %v2642, %v2657
      %v2682 = vadd.f32 %v2643, %v2657
      %v2683 = vadd.f32 %v2644, %v2657
      %v2684 = vadd.f32 %v2645, %v2657
      %v2685 = vadd.f32 %v2646, %v2657
      %v2686 = vadd.f32 %v2647, %v2657
      %v2687 = vadd.f32 %v2648, %v2657
      %v2688 = vadd.f32 %v2649, %v2657
      %v2689 = vadd.f32 %v2650, %v2657
      %v2690 = vadd.f32 %v2651, %v2657
      %s2691 = sld [smem:[#allocation4]]
      %vm2692 = vcmp.gt.f32.partialorder %v2659, 0.0
      %vm2693 = vcmp.gt.f32.partialorder %v2660, 0.0
      %vm2694 = vcmp.gt.f32.partialorder %v2661, 0.0
      %vm2695 = vcmp.gt.f32.partialorder %v2662, 0.0
      %vm2696 = vcmp.gt.f32.partialorder %v2663, 0.0
      %vm2697 = vcmp.gt.f32.partialorder %v2664, 0.0
      %vm2698 = vcmp.gt.f32.partialorder %v2665, 0.0
      %vm2699 = vcmp.gt.f32.partialorder %v2666, 0.0
      %vm2700 = vcmp.gt.f32.partialorder %v2667, 0.0
      %vm2701 = vcmp.gt.f32.partialorder %v2668, 0.0
      %vm2702 = vcmp.gt.f32.partialorder %v2669, 0.0
      %vm2703 = vcmp.gt.f32.partialorder %v2670, 0.0
      %vm2704 = vcmp.gt.f32.partialorder %v2671, 0.0
      %vm2705 = vcmp.gt.f32.partialorder %v2672, 0.0
      %vm2706 = vcmp.gt.f32.partialorder %v2673, 0.0
      %vm2707 = vcmp.gt.f32.partialorder %v2674, 0.0
      %vm2708 = vcmp.gt.f32.partialorder %v2675, 0.0
      %vm2709 = vcmp.gt.f32.partialorder %v2676, 0.0
      %vm2710 = vcmp.gt.f32.partialorder %v2677, 0.0
      %vm2711 = vcmp.gt.f32.partialorder %v2678, 0.0
      %vm2712 = vcmp.gt.f32.partialorder %v2679, 0.0
      %vm2713 = vcmp.gt.f32.partialorder %v2680, 0.0
      %vm2714 = vcmp.gt.f32.partialorder %v2681, 0.0
      %vm2715 = vcmp.gt.f32.partialorder %v2682, 0.0
      %vm2716 = vcmp.gt.f32.partialorder %v2683, 0.0
      %vm2717 = vcmp.gt.f32.partialorder %v2684, 0.0
      %vm2718 = vcmp.gt.f32.partialorder %v2685, 0.0
      %vm2719 = vcmp.gt.f32.partialorder %v2686, 0.0
      %vm2720 = vcmp.gt.f32.partialorder %v2687, 0.0
      %vm2721 = vcmp.gt.f32.partialorder %v2688, 0.0
      %vm2722 = vcmp.gt.f32.partialorder %v2689, 0.0
      %vm2723 = vcmp.gt.f32.partialorder %v2690, 0.0
      %v2724 = vstv %s2691
      %v2725 = vmul.f32 %v2724, %v2659
      %v2726 = vmul.f32 %v2724, %v2660
      %v2727 = vmul.f32 %v2724, %v2661
      %v2728 = vmul.f32 %v2724, %v2662
      %v2729 = vmul.f32 %v2724, %v2663
      %v2730 = vmul.f32 %v2724, %v2664
      %v2731 = vmul.f32 %v2724, %v2665
      %v2732 = vmul.f32 %v2724, %v2666
      %v2733 = vmul.f32 %v2724, %v2667
      %v2734 = vmul.f32 %v2724, %v2668
      %v2735 = vmul.f32 %v2724, %v2669
      %v2736 = vmul.f32 %v2724, %v2670
      %v2737 = vmul.f32 %v2724, %v2671
      %v2738 = vmul.f32 %v2724, %v2672
      %v2739 = vmul.f32 %v2724, %v2673
      %v2740 = vmul.f32 %v2724, %v2674
      %v2741 = vmul.f32 %v2724, %v2675
      %v2742 = vmul.f32 %v2724, %v2676
      %v2743 = vmul.f32 %v2724, %v2677
      %v2744 = vmul.f32 %v2724, %v2678
      %v2745 = vmul.f32 %v2724, %v2679
      %v2746 = vmul.f32 %v2724, %v2680
      %v2747 = vmul.f32 %v2724, %v2681
      %v2748 = vmul.f32 %v2724, %v2682
      %v2749 = vmul.f32 %v2724, %v2683
      %v2750 = vmul.f32 %v2724, %v2684
      %v2751 = vmul.f32 %v2724, %v2685
      %v2752 = vmul.f32 %v2724, %v2686
      %v2753 = vmul.f32 %v2724, %v2687
      %v2754 = vmul.f32 %v2724, %v2688
      %v2755 = vmul.f32 %v2724, %v2689
      %v2756 = vmul.f32 %v2724, %v2690
      %v2757 = vsel %vm2692, %v2659, %v2725
      %v2758 = vsel %vm2693, %v2660, %v2726
      %v2759 = vsel %vm2694, %v2661, %v2727
      %v2760 = vsel %vm2695, %v2662, %v2728
      %v2761 = vsel %vm2696, %v2663, %v2729
      %v2762 = vsel %vm2697, %v2664, %v2730
      %v2763 = vsel %vm2698, %v2665, %v2731
      %v2764 = vsel %vm2699, %v2666, %v2732
      %v2765 = vsel %vm2700, %v2667, %v2733
      %v2766 = vsel %vm2701, %v2668, %v2734
      %v2767 = vsel %vm2702, %v2669, %v2735
      %v2768 = vsel %vm2703, %v2670, %v2736
      %v2769 = vsel %vm2704, %v2671, %v2737
      %v2770 = vsel %vm2705, %v2672, %v2738
      %v2771 = vsel %vm2706, %v2673, %v2739
      %v2772 = vsel %vm2707, %v2674, %v2740
      %v2773 = vsel %vm2708, %v2675, %v2741
      %v2774 = vsel %vm2709, %v2676, %v2742
      %v2775 = vsel %vm2710, %v2677, %v2743
      %v2776 = vsel %vm2711, %v2678, %v2744
      %v2777 = vsel %vm2712, %v2679, %v2745
      %v2778 = vsel %vm2713, %v2680, %v2746
      %v2779 = vsel %vm2714, %v2681, %v2747
      %v2780 = vsel %vm2715, %v2682, %v2748
      %v2781 = vsel %vm2716, %v2683, %v2749
      %v2782 = vsel %vm2717, %v2684, %v2750
      %v2783 = vsel %vm2718, %v2685, %v2751
      %v2784 = vsel %vm2719, %v2686, %v2752
      %v2785 = vsel %vm2720, %v2687, %v2753
      %v2786 = vsel %vm2721, %v2688, %v2754
      %v2787 = vsel %vm2722, %v2689, %v2755
      %v2788 = vsel %vm2723, %v2690, %v2756
      %v2789 = vpack.c.bf16 %v2758, %v2757
      %v2790 = vpack.c.bf16 %v2760, %v2759
      %v2791 = vpack.c.bf16 %v2762, %v2761
      %v2792 = vpack.c.bf16 %v2764, %v2763
      %v2793 = vpack.c.bf16 %v2766, %v2765
      %v2794 = vpack.c.bf16 %v2768, %v2767
      %v2795 = vpack.c.bf16 %v2770, %v2769
      %v2796 = vpack.c.bf16 %v2772, %v2771
      %v2797 = vpack.c.bf16 %v2774, %v2773
      %v2798 = vpack.c.bf16 %v2776, %v2775
      %v2799 = vpack.c.bf16 %v2778, %v2777
      %v2800 = vpack.c.bf16 %v2780, %v2779
      %v2801 = vpack.c.bf16 %v2782, %v2781
      %v2802 = vpack.c.bf16 %v2784, %v2783
      %v2803 = vpack.c.bf16 %v2786, %v2785
      %v2804 = vpack.c.bf16 %v2788, %v2787
      %v2821 = vunpack.c.l.b16 %v2789
      %v2822 = vunpack.c.h.b16 %v2789
      %v2823 = vunpack.c.l.b16 %v2790
      %v2824 = vunpack.c.h.b16 %v2790
      %v2825 = vunpack.c.l.b16 %v2791
      %v2826 = vunpack.c.h.b16 %v2791
      %v2827 = vunpack.c.l.b16 %v2792
      %v2828 = vunpack.c.h.b16 %v2792
      %v2829 = vunpack.c.l.b16 %v2793
      %v2830 = vunpack.c.h.b16 %v2793
      %v2831 = vunpack.c.l.b16 %v2794
      %v2832 = vunpack.c.h.b16 %v2794
      %v2833 = vunpack.c.l.b16 %v2795
      %v2834 = vunpack.c.h.b16 %v2795
      %v2835 = vunpack.c.l.b16 %v2796
      %v2836 = vunpack.c.h.b16 %v2796
      %v2837 = vunpack.c.l.b16 %v2797
      %v2838 = vunpack.c.h.b16 %v2797
      %v2839 = vunpack.c.l.b16 %v2798
      %v2840 = vunpack.c.h.b16 %v2798
      %v2841 = vunpack.c.l.b16 %v2799
      %v2842 = vunpack.c.h.b16 %v2799
      %v2843 = vunpack.c.l.b16 %v2800
      %v2844 = vunpack.c.h.b16 %v2800
      %v2845 = vunpack.c.l.b16 %v2801
      %v2846 = vunpack.c.h.b16 %v2801
      %v2847 = vunpack.c.l.b16 %v2802
      %v2848 = vunpack.c.h.b16 %v2802
      %v2849 = vunpack.c.l.b16 %v2803
      %v2850 = vunpack.c.h.b16 %v2803
      %v2851 = vunpack.c.l.b16 %v2804
      %v2852 = vunpack.c.h.b16 %v2804
      %v2853 = vpack.c.b16 %v2821, %v2821
      %v2854 = vpack.c.b16 %v2822, %v2822
      %v2855 = vpack.c.b16 %v2823, %v2823
      %v2856 = vpack.c.b16 %v2824, %v2824
      %v2857 = vpack.c.b16 %v2825, %v2825
      %v2858 = vpack.c.b16 %v2826, %v2826
      %v2859 = vpack.c.b16 %v2827, %v2827
      %v2860 = vpack.c.b16 %v2828, %v2828
      %v2861 = vpack.c.b16 %v2829, %v2829
      %v2862 = vpack.c.b16 %v2830, %v2830
      %v2863 = vpack.c.b16 %v2831, %v2831
      %v2864 = vpack.c.b16 %v2832, %v2832
      %v2865 = vpack.c.b16 %v2833, %v2833
      %v2866 = vpack.c.b16 %v2834, %v2834
      %v2867 = vpack.c.b16 %v2835, %v2835
      %v2868 = vpack.c.b16 %v2836, %v2836
      %v2869 = vpack.c.b16 %v2837, %v2837
      %v2870 = vpack.c.b16 %v2838, %v2838
      %v2871 = vpack.c.b16 %v2839, %v2839
      %v2872 = vpack.c.b16 %v2840, %v2840
      %v2873 = vpack.c.b16 %v2841, %v2841
      %v2874 = vpack.c.b16 %v2842, %v2842
      %v2875 = vpack.c.b16 %v2843, %v2843
      %v2876 = vpack.c.b16 %v2844, %v2844
      %v2877 = vpack.c.b16 %v2845, %v2845
      %v2878 = vpack.c.b16 %v2846, %v2846
      %v2879 = vpack.c.b16 %v2847, %v2847
      %v2880 = vpack.c.b16 %v2848, %v2848
      %v2881 = vpack.c.b16 %v2849, %v2849
      %v2882 = vpack.c.b16 %v2850, %v2850
      %v2883 = vpack.c.b16 %v2851, %v2851
      %v2884 = vpack.c.b16 %v2852, %v2852
      %2917 = vst [vmem:[%s234] sm:$0xf] %v2853
      %2918 = vst [vmem:[%s234 + $0x4] sm:$0xf] %v2854
      %2919 = vst [vmem:[%s234 + $0x8] sm:$0xf] %v2855
      %2920 = vst [vmem:[%s234 + $0xc] sm:$0xf] %v2856
      %2921 = vst [vmem:[%s234 + $0x10] sm:$0xf] %v2857
      %2922 = vst [vmem:[%s234 + $0x14] sm:$0xf] %v2858
      %2923 = vst [vmem:[%s234 + $0x18] sm:$0xf] %v2859
      %2924 = vst [vmem:[%s234 + $0x1c] sm:$0xf] %v2860
      %2925 = vst [vmem:[%s234 + $0x20] sm:$0xf] %v2861
      %2926 = vst [vmem:[%s234 + $0x24] sm:$0xf] %v2862
      %2927 = vst [vmem:[%s234 + $0x28] sm:$0xf] %v2863
      %2928 = vst [vmem:[%s234 + $0x2c] sm:$0xf] %v2864
      %2929 = vst [vmem:[%s234 + $0x30] sm:$0xf] %v2865
      %2930 = vst [vmem:[%s234 + $0x34] sm:$0xf] %v2866
      %2931 = vst [vmem:[%s234 + $0x38] sm:$0xf] %v2867
      %2932 = vst [vmem:[%s234 + $0x3c] sm:$0xf] %v2868
      %2933 = vst [vmem:[%s234 + $0x40] sm:$0xf] %v2869
      %2934 = vst [vmem:[%s234 + $0x44] sm:$0xf] %v2870
      %2935 = vst [vmem:[%s234 + $0x48] sm:$0xf] %v2871
      %2936 = vst [vmem:[%s234 + $0x4c] sm:$0xf] %v2872
      %2937 = vst [vmem:[%s234 + $0x50] sm:$0xf] %v2873
      %2938 = vst [vmem:[%s234 + $0x54] sm:$0xf] %v2874
      %2939 = vst [vmem:[%s234 + $0x58] sm:$0xf] %v2875
      %2940 = vst [vmem:[%s234 + $0x5c] sm:$0xf] %v2876
      %2941 = vst [vmem:[%s234 + $0x60] sm:$0xf] %v2877
      %2942 = vst [vmem:[%s234 + $0x64] sm:$0xf] %v2878
      %2943 = vst [vmem:[%s234 + $0x68] sm:$0xf] %v2879
      %2944 = vst [vmem:[%s234 + $0x6c] sm:$0xf] %v2880
      %2945 = vst [vmem:[%s234 + $0x70] sm:$0xf] %v2881
      %2946 = vst [vmem:[%s234 + $0x74] sm:$0xf] %v2882
      %2947 = vst [vmem:[%s234 + $0x78] sm:$0xf] %v2883
      %2948 = vst [vmem:[%s234 + $0x7c] sm:$0xf] %v2884
      %s2949 = smul.u32 32, %s21
      %p2950 = scmp.lt.s32.totalorder %s20, 1
      %s2951 = scalar_select %p2950, %s20, 1
      %p2952 = scmp.lt.s32.totalorder %s2949, 63
      %s2953 = scalar_select %p2952, %s2949, 63
      %s2954 = smul.addr %s2951, 64
      %s2955 = sadd.s32 %s2953, %s2954
      %s2956 = smul.addr %s2955, 4
      %s2957 = scalar_lea.vmem %s4, %s2956
      // Predicated region
      $region37: #{reconstruction_forward.4} parent=35 // pred_check
        %p2958 = pneg %p139
      $region38: #{reconstruction_forward.4} parent=35 // pred_check_branch
        %2960 = sbr.rel (%p2958) target = $region40
      $region39: #{reconstruction_forward.4} parent=35 // pred_region
        %s2961 = smul.u32 32, %s21
      $region40: #{reconstruction_forward.4} parent=35 // pred_fallthru
        _
    $region36: #{reconstruction_forward.4} parent=5 // pred_fallthru
      _
    %p2962 = scmp.le.s32.totalorder 2, %s11
    // Predicated region
    $region41: #{reconstruction_forward.4} parent=5 // pred_check
      %p2963 = pneg %p2962
    $region42: #{reconstruction_forward.4} parent=5 // pred_check_branch
      %2965 = sbr.rel (%p2963) target = $region44
    $region43: #{reconstruction_forward.4} parent=5 // pred_region
      %s2966 = ssub.s32 %s11, 2
      // Predicated region
      $region45: #{reconstruction_forward.4} parent=43 // pred_check
        %p2967 = pneg %p145
      $region46: #{reconstruction_forward.4} parent=43 // pred_check_branch
        %2969 = sbr.rel (%p2967) target = $region48
      $region47: #{reconstruction_forward.4} parent=43 // pred_region
        %s2970 = smul.u32 32, %s23
        %p2971 = scmp.lt.s32.totalorder %s22, 1
        %s2972 = scalar_select %p2971, %s22, 1
        %p2973 = scmp.lt.s32.totalorder %s2970, 63
        %s2974 = scalar_select %p2973, %s2970, 63
        %s2975 = smul.addr %s2972, 64
        %s2976 = sadd.s32 %s2974, %s2975
        %s2977 = smul.addr %s2976, 4
        %s2978 = scalar_lea.vmem %s4, %s2977
      $region48: #{reconstruction_forward.4} parent=43 // pred_fallthru
        _
    $region44: #{reconstruction_forward.4} parent=5 // pred_fallthru
      _
  $region6: #{reconstruction_forward.4} parent=0 // loop_footer
    %s15 = sadd.s32 1, %s11
  $region7: #{reconstruction_forward.4} parent=0 // loop_footer_branch
    %10 = sbr.rel target = $region3
  $region8: #{reconstruction_forward.4} parent=0 // loop_exit
    _

// kernel: reconstruction_forward.5
$region0: #{reconstruction_forward.5}
  #allocation0 [shape = 'u32[]', space=smem, size = 0x4, offset = 0x4, fixed_abs, tag = 'smem constant byte address 0x4 - core index']
  #allocation1 [shape = 'u32[144,128]{1,0:T(1,128)}', space=vmem, size = 0x12000, scoped, tag = 'internal scratch']
  #allocation2 [shape = 'bf16[288,384]{1,0:T(16,128)(2,1)}', space=vmem, size = 0x36000, scoped, tag = 'scratch operand']
  %s0 = inlined_call_operand.vmem [shape: bf16[2,4,32,496], index: 0, kind: input, shape index: {}]
  %s1 = inlined_call_operand.vmem [shape: bf16[8,288], index: 1, kind: input, shape index: {}]
  %s2 = inlined_call_operand.vmem [shape: f32[8,1], index: 2, kind: input, shape index: {}]
  %s3 = inlined_call_operand.vmem [shape: f32[2,3,1536], index: 3, kind: output, shape index: {}]
  %s4 = sld [smem:[#allocation0]]
  $region45: #{reconstruction_forward.5} parent=0
    _
  %s6 = ssub.s32 1, %s4
  %s7 = scalar_select 0, %s6, %s4
  loop: start=0, step=1, limit=10
  $region2: #{reconstruction_forward.5} parent=0 // loop_pre_header
    _
  $region3: #{reconstruction_forward.5} parent=0 // loop_header
    %s9 = sphi 0, %s13
    %p10 = scmp.ge.s32.totalorder %s9, 10
    %s16 = sphi 0, %s28
    %s17 = sphi 0, %s24
    %s18 = sphi 0, %s16
    %s19 = sphi 0, %s17
    %s20 = sphi 0, %s18
    %s21 = sphi 0, %s19
    %s33 = sphi 0, %s35
    %s36 = sphi 0, %s33
    %s37 = sphi 0, %s36
    %s53 = sphi 0, %s37
    %s57 = sphi 0, %s57
    %s59 = sphi 0, %s57
    %s60 = sphi 0, %s59
    %s74 = sphi 0, %s60
    %s78 = sphi 0, %s78
    %s80 = sphi 0, %s78
    %s81 = sphi 0, %s80
    %s95 = sphi 0, %s81
    %s103 = sphi 0, %s105
    %s106 = sphi 0, %s103
    %s107 = sphi 0, %s106
    %s123 = sphi 0, %s107
  $region4: #{reconstruction_forward.5} parent=0 // loop_header_branch
    %12 = sbr.rel (%p10) target = $region8
  $region5: #{reconstruction_forward.5} parent=0 // loop_body
    %s14 = ssub.s32 %s9, 1
    %s15 = ssub.s32 %s9, 2
    %s22 = sadd.s32 1, %s17
    %p23 = scmp.ge.s32.totalorder %s22, 4
    %s24 = scalar_select %p23, 0, %s22
    %s25 = sadd.s32 1, %s16
    %s26 = scalar_select %p23, %s25, %s16
    %p27 = scmp.ge.s32.totalorder %s26, 2
    %s28 = scalar_select %p27, 0, %s26
    %s29 = ssub.s32 %s16, %s28
    %s30 = ssub.s32 %s17, %s24
    %s31 = sor.u32 %s29, %s30
    %p32 = scmp.eq.s32.totalorder %s31, 0
    %s34 = sadd.s32 %s33, 1
    %s35 = scalar_select %p32, %s33, %s34
    %p38 = pneg %p32
    %p39 = scmp.eq.s32.totalorder %s9, 7
    %p40 = por %p38, %p39
    %p41 = scmp.ne.s32.totalorder %s33, %s36
    %p42 = scmp.eq.s32.totalorder %s9, 0
    %p43 = por %p41, %p42
    %p44 = scmp.ne.s32.totalorder %s33, %s36
    %p45 = scmp.eq.s32.totalorder %s14, 7
    %p46 = por %p44, %p45
    %p47 = scmp.ne.s32.totalorder %s36, %s37
    %p48 = scmp.eq.s32.totalorder %s14, 0
    %p49 = por %p47, %p48
    %p50 = scmp.ne.s32.totalorder %s36, %s37
    %p51 = scmp.eq.s32.totalorder %s15, 7
    %p52 = por %p50, %p51
    %p54 = scmp.ne.s32.totalorder %s37, %s53
    %p55 = scmp.eq.s32.totalorder %s15, 0
    %p56 = por %p54, %p55
    %s58 = sadd.s32 %s57, 1
    %p61 = scmp.eq.s32.totalorder %s9, 7
    %p62 = scmp.ne.s32.totalorder %s57, %s59
    %p63 = scmp.eq.s32.totalorder %s9, 0
    %p64 = por %p62, %p63
    %p65 = scmp.ne.s32.totalorder %s57, %s59
    %p66 = scmp.eq.s32.totalorder %s14, 7
    %p67 = por %p65, %p66
    %p68 = scmp.ne.s32.totalorder %s59, %s60
    %p69 = scmp.eq.s32.totalorder %s14, 0
    %p70 = por %p68, %p69
    %p71 = scmp.ne.s32.totalorder %s59, %s60
    %p72 = scmp.eq.s32.totalorder %s15, 7
    %p73 = por %p71, %p72
    %p75 = scmp.ne.s32.totalorder %s60, %s74
    %p76 = scmp.eq.s32.totalorder %s15, 0
    %p77 = por %p75, %p76
    %s79 = sadd.s32 %s78, 1
    %p82 = scmp.eq.s32.totalorder %s9, 7
    %p83 = scmp.ne.s32.totalorder %s78, %s80
    %p84 = scmp.eq.s32.totalorder %s9, 0
    %p85 = por %p83, %p84
    %p86 = scmp.ne.s32.totalorder %s78, %s80
    %p87 = scmp.eq.s32.totalorder %s14, 7
    %p88 = por %p86, %p87
    %p89 = scmp.ne.s32.totalorder %s80, %s81
    %p90 = scmp.eq.s32.totalorder %s14, 0
    %p91 = por %p89, %p90
    %p92 = scmp.ne.s32.totalorder %s80, %s81
    %p93 = scmp.eq.s32.totalorder %s15, 7
    %p94 = por %p92, %p93
    %p96 = scmp.ne.s32.totalorder %s81, %s95
    %p97 = scmp.eq.s32.totalorder %s15, 0
    %p98 = por %p96, %p97
    %s99 = ssub.s32 %s16, %s28
    %s100 = ssub.s32 %s17, %s24
    %s101 = sor.u32 %s99, %s100
    %p102 = scmp.eq.s32.totalorder %s101, 0
    %s104 = sadd.s32 %s103, 1
    %s105 = scalar_select %p102, %s103, %s104
    %p108 = pneg %p102
    %p109 = scmp.eq.s32.totalorder %s9, 7
    %p110 = por %p108, %p109
    %p111 = scmp.ne.s32.totalorder %s103, %s106
    %p112 = scmp.eq.s32.totalorder %s9, 0
    %p113 = por %p111, %p112
    %p114 = scmp.ne.s32.totalorder %s103, %s106
    %p115 = scmp.eq.s32.totalorder %s14, 7
    %p116 = por %p114, %p115
    %p117 = scmp.ne.s32.totalorder %s106, %s107
    %p118 = scmp.eq.s32.totalorder %s14, 0
    %p119 = por %p117, %p118
    %p120 = scmp.ne.s32.totalorder %s106, %s107
    %p121 = scmp.eq.s32.totalorder %s15, 7
    %p122 = por %p120, %p121
    %p124 = scmp.ne.s32.totalorder %s107, %s123
    %p125 = scmp.eq.s32.totalorder %s15, 0
    %p126 = por %p124, %p125
    %p127 = scmp.le.s32.totalorder 1, %s9
    %p128 = scmp.lt.s32.totalorder %s9, 9
    %p129 = pnand %p127, %p128
    %p130 = pneg %p129
    // Predicated region
    $region9: #{reconstruction_forward.5} parent=5 // pred_check
      _
    $region10: #{reconstruction_forward.5} parent=5 // pred_check_branch
      %132 = sbr.rel (%p129) target = $region12
    $region11: #{reconstruction_forward.5} parent=5 // pred_region
      %s133 = ssub.s32 %s9, 1
      // Predicated region
      $region13: #{reconstruction_forward.5} parent=11 // pred_check
        %p134 = pneg %p70
      $region14: #{reconstruction_forward.5} parent=11 // pred_check_branch
        %136 = sbr.rel (%p134) target = $region16
      $region15: #{reconstruction_forward.5} parent=11 // pred_region
        _
      $region16: #{reconstruction_forward.5} parent=11 // pred_fallthru
        _
      // Predicated region
      $region17: #{reconstruction_forward.5} parent=11 // pred_check
        %p137 = pneg %p91
      $region18: #{reconstruction_forward.5} parent=11 // pred_check_branch
        %139 = sbr.rel (%p137) target = $region20
      $region19: #{reconstruction_forward.5} parent=11 // pred_region
        _
      $region20: #{reconstruction_forward.5} parent=11 // pred_fallthru
        _
    $region12: #{reconstruction_forward.5} parent=5 // pred_fallthru
      _
    %p140 = scmp.lt.s32.totalorder %s9, 8
    // Predicated region
    $region21: #{reconstruction_forward.5} parent=5 // pred_check
      %p141 = pneg %p140
    $region22: #{reconstruction_forward.5} parent=5 // pred_check_branch
      %143 = sbr.rel (%p141) target = $region24
    $region23: #{reconstruction_forward.5} parent=5 // pred_region
      // Predicated region
      $region25: #{reconstruction_forward.5} parent=23 // pred_check
        %p144 = pneg %p43
      $region26: #{reconstruction_forward.5} parent=23 // pred_check_branch
        %146 = sbr.rel (%p144) target = $region28
      $region27: #{reconstruction_forward.5} parent=23 // pred_region
        %p147 = scmp.lt.s32.totalorder %s16, 1
        %s148 = scalar_select %p147, %s16, 1
        %p149 = scmp.lt.s32.totalorder %s17, 3
        %s150 = scalar_select %p149, %s17, 3
        %s151 = smul.addr %s150, 16
        %s152 = smul.addr %s148, 64
        %s153 = sadd.s32 %s151, %s152
        %s154 = smul.addr %s153, 4
        %s155 = scalar_lea.vmem %s0, %s154
      $region28: #{reconstruction_forward.5} parent=23 // pred_fallthru
        _
    $region24: #{reconstruction_forward.5} parent=5 // pred_fallthru
      _
    %p156 = scmp.le.s32.totalorder 1, %s9
    %p157 = scmp.lt.s32.totalorder %s9, 9
    %p158 = pnand %p156, %p157
    %p159 = pneg %p158
    // Predicated region
    $region29: #{reconstruction_forward.5} parent=5 // pred_check
      _
    $region30: #{reconstruction_forward.5} parent=5 // pred_check_branch
      %161 = sbr.rel (%p158) target = $region32
    $region31: #{reconstruction_forward.5} parent=5 // pred_region
      %s162 = ssub.s32 %s9, 1
      %p163 = scmp.lt.s32.totalorder %s18, 1
      %s164 = scalar_select %p163, %s18, 1
      %p165 = scmp.lt.s32.totalorder %s19, 3
      %s166 = scalar_select %p165, %s19, 3
      %s167 = smul.addr %s166, 16
      %s168 = smul.addr %s164, 64
      %s169 = sadd.s32 %s167, %s168
      %s170 = smul.addr %s169, 4
      %s171 = scalar_lea.vmem %s0, %s170
      %p172 = pneg %p49
      %p173 = pneg %p46
      %p174 = pneg %p70
      %p175 = pneg %p67
      %p176 = pneg %p91
      %p177 = pneg %p88
      %p178 = pneg %p119
      %p179 = pneg %p116
      %s180 = smul.u32 3, %s19
      %p181 = scmp.lt.s32.totalorder %s18, 1
      %s182 = scalar_select %p181, %s18, 1
      %p183 = scmp.lt.s32.totalorder %s180, 11
      %s184 = scalar_select %p183, %s180, 11
      %s185 = smul.addr %s182, 12
      %s186 = sadd.s32 %s184, %s185
      %s187 = smul.addr %s186, 4
      %s188 = scalar_lea.vmem %s3, %s187
      %p189 = scmp.lt.s32.totalorder %s18, 1
      %s190 = scalar_select %p189, %s18, 1
      %p191 = scmp.lt.s32.totalorder %s19, 3
      %s192 = scalar_select %p191, %s19, 3
      %s193 = smul.addr %s192, 16
      %s194 = smul.addr %s190, 64
      %s195 = sadd.s32 %s193, %s194
      %s196 = smul.addr %s195, 4
      %s197 = scalar_lea.vmem %s0, %s196
      %s198 = smul.u32 3, %s19
      %p199 = scmp.lt.s32.totalorder %s18, 1
      %s200 = scalar_select %p199, %s18, 1
      %p201 = scmp.lt.s32.totalorder %s198, 11
      %s202 = scalar_select %p201, %s198, 11
      %s203 = smul.addr %s200, 12
      %s204 = sadd.s32 %s202, %s203
      %s205 = smul.addr %s204, 4
      %s206 = scalar_lea.vmem %s3, %s205
      %s207 = smul.u32 3, %s19
      %v209 = vld [vmem:[%s197] sm:$0xff]
      %v210 = vld [vmem:[%s197 + $0x8] sm:$0xff]
      %v211 = vld [vmem:[%s197 + $0x10] sm:$0xff]
      %v212 = vld [vmem:[%s197 + $0x18] sm:$0xff]
      %v213 = vld [vmem:[%s197 + $0x20] sm:$0xff]
      %v214 = vld [vmem:[%s197 + $0x28] sm:$0xff]
      %v215 = vld [vmem:[%s197 + $0x30] sm:$0xff]
      %v216 = vld [vmem:[%s197 + $0x38] sm:$0xff]
      %v225 = vunpack.c.l.b16 %v209
      %v226 = vunpack.c.h.b16 %v209
      %v227 = vunpack.c.l.b16 %v210
      %v228 = vunpack.c.l.b16 %v211
      %v229 = vunpack.c.h.b16 %v211
      %v230 = vunpack.c.l.b16 %v212
      %v231 = vunpack.c.l.b16 %v213
      %v232 = vunpack.c.h.b16 %v213
      %v233 = vunpack.c.l.b16 %v214
      %v234 = vunpack.c.l.b16 %v215
      %v235 = vunpack.c.h.b16 %v215
      %v236 = vunpack.c.l.b16 %v216
      %v237 = vpack.c.b16 %v228, %v225
      %v238 = vpack.c.b16 %v229, %v226
      %v239 = vpack.c.b16 %v230, %v227
      %v240 = vpack.c.b16 %v234, %v231
      %v241 = vpack.c.b16 %v235, %v232
      %v242 = vpack.c.b16 %v236, %v233
      %249 = vst [vmem:[#allocation2] sm:$0xff] %v237
      %250 = vst [vmem:[#allocation2 + $0x8] sm:$0xff] %v238
      %251 = vst [vmem:[#allocation2 + $0x10] sm:$0xff] %v239
      %252 = vst [vmem:[#allocation2 + $0x18] sm:$0xff] %v240
      %253 = vst [vmem:[#allocation2 + $0x20] sm:$0xff] %v241
      %254 = vst [vmem:[#allocation2 + $0x28] sm:$0xff] %v242
      %v255 = vunpack.c.h.b16 %v210
      %v256 = vunpack.c.h.b16 %v212
      %v257 = vunpack.c.h.b16 %v214
      %v258 = vunpack.c.h.b16 %v216
      %v259 = vpack.c.b16 %v256, %v255
      %v260 = vpack.c.b16 %v258, %v257
      %261 = vrot.lane.b32.xlu0 %v237, 127
      %v262 = vpop.permute.xlu0 %261
      %263 = vrot.lane.b32.xlu0 %v238, 127
      %v264 = vpop.permute.xlu0 %263
      %265 = vrot.lane.b32.xlu0 %v239, 127
      %v266 = vpop.permute.xlu0 %265
      %267 = vrot.lane.b32.xlu0 %v259, 127
      %v268 = vpop.permute.xlu0 %267
      %269 = vrot.lane.b32.xlu0 %v240, 127
      %v270 = vpop.permute.xlu0 %269
      %271 = vrot.lane.b32.xlu0 %v241, 127
      %v272 = vpop.permute.xlu0 %271
      %273 = vrot.lane.b32.xlu0 %v242, 127
      %v274 = vpop.permute.xlu0 %273
      %275 = vrot.lane.b32.xlu0 %v260, 127
      %v276 = vpop.permute.xlu0 %275
      %vm277 = vcmask 1039360
      %v278 = vsel %vm277, %v262, %v264
      %v279 = vsel %vm277, %v264, %v266
      %v280 = vsel %vm277, %v266, %v268
      %v281 = vsel %vm277, %v270, %v272
      %v282 = vsel %vm277, %v272, %v274
      %v283 = vsel %vm277, %v274, %v276
      %290 = vst [vmem:[#allocation2 + $0x30] sm:$0xff] %v278
      %291 = vst [vmem:[#allocation2 + $0x38] sm:$0xff] %v279
      %292 = vst [vmem:[#allocation2 + $0x40] sm:$0xff] %v280
      %293 = vst [vmem:[#allocation2 + $0x48] sm:$0xff] %v281
      %294 = vst [vmem:[#allocation2 + $0x50] sm:$0xff] %v282
      %295 = vst [vmem:[#allocation2 + $0x58] sm:$0xff] %v283
      %296 = vrot.lane.b32.xlu0 %v237, 126
      %v297 = vpop.permute.xlu0 %296
      %298 = vrot.lane.b32.xlu0 %v238, 126
      %v299 = vpop.permute.xlu0 %298
      %300 = vrot.lane.b32.xlu0 %v239, 126
      %v301 = vpop.permute.xlu0 %300
      %302 = vrot.lane.b32.xlu0 %v259, 126
      %v303 = vpop.permute.xlu0 %302
      %304 = vrot.lane.b32.xlu0 %v240, 126
      %v305 = vpop.permute.xlu0 %304
      %306 = vrot.lane.b32.xlu0 %v241, 126
      %v307 = vpop.permute.xlu0 %306
      %308 = vrot.lane.b32.xlu0 %v242, 126
      %v309 = vpop.permute.xlu0 %308
      %310 = vrot.lane.b32.xlu0 %v260, 126
      %v311 = vpop.permute.xlu0 %310
      %vm312 = vcmask 1031168
      %v313 = vsel %vm312, %v297, %v299
      %v314 = vsel %vm312, %v299, %v301
      %v315 = vsel %vm312, %v301, %v303
      %v316 = vsel %vm312, %v305, %v307
      %v317 = vsel %vm312, %v307, %v309
      %v318 = vsel %vm312, %v309, %v311
      %325 = vst [vmem:[#allocation2 + $0x60] sm:$0xff] %v313
      %326 = vst [vmem:[#allocation2 + $0x68] sm:$0xff] %v314
      %327 = vst [vmem:[#allocation2 + $0x70] sm:$0xff] %v315
      %328 = vst [vmem:[#allocation2 + $0x78] sm:$0xff] %v316
      %329 = vst [vmem:[#allocation2 + $0x80] sm:$0xff] %v317
      %330 = vst [vmem:[#allocation2 + $0x88] sm:$0xff] %v318
      %331 = vrot.lane.b32.xlu0 %v237, 80
      %v332 = vpop.permute.xlu0 %331
      %333 = vrot.lane.b32.xlu0 %v238, 80
      %v334 = vpop.permute.xlu0 %333
      %335 = vrot.lane.b32.xlu0 %v239, 80
      %v336 = vpop.permute.xlu0 %335
      %337 = vrot.lane.b32.xlu0 %v259, 80
      %v338 = vpop.permute.xlu0 %337
      %339 = vrot.lane.b32.xlu0 %v240, 80
      %v340 = vpop.permute.xlu0 %339
      %341 = vrot.lane.b32.xlu0 %v241, 80
      %v342 = vpop.permute.xlu0 %341
      %343 = vrot.lane.b32.xlu0 %v242, 80
      %v344 = vpop.permute.xlu0 %343
      %345 = vrot.lane.b32.xlu0 %v260, 80
      %v346 = vpop.permute.xlu0 %345
      %vm347 = vcmask 654336
      %v348 = vsel %vm347, %v332, %v334
      %v349 = vsel %vm347, %v334, %v336
      %v350 = vsel %vm347, %v336, %v338
      %v351 = vsel %vm347, %v340, %v342
      %v352 = vsel %vm347, %v342, %v344
      %v353 = vsel %vm347, %v344, %v346
      %360 = vst [vmem:[#allocation2 + $0x90] sm:$0xff] %v348
      %361 = vst [vmem:[#allocation2 + $0x98] sm:$0xff] %v349
      %362 = vst [vmem:[#allocation2 + $0xa0] sm:$0xff] %v350
      %363 = vst [vmem:[#allocation2 + $0xa8] sm:$0xff] %v351
      %364 = vst [vmem:[#allocation2 + $0xb0] sm:$0xff] %v352
      %365 = vst [vmem:[#allocation2 + $0xb8] sm:$0xff] %v353
      %366 = vrot.lane.b32.xlu0 %v237, 79
      %v367 = vpop.permute.xlu0 %366
      %368 = vrot.lane.b32.xlu0 %v238, 79
      %v369 = vpop.permute.xlu0 %368
      %370 = vrot.lane.b32.xlu0 %v239, 79
      %v371 = vpop.permute.xlu0 %370
      %372 = vrot.lane.b32.xlu0 %v259, 79
      %v373 = vpop.permute.xlu0 %372
      %374 = vrot.lane.b32.xlu0 %v240, 79
      %v375 = vpop.permute.xlu0 %374
      %376 = vrot.lane.b32.xlu0 %v241, 79
      %v377 = vpop.permute.xlu0 %376
      %378 = vrot.lane.b32.xlu0 %v242, 79
      %v379 = vpop.permute.xlu0 %378
      %380 = vrot.lane.b32.xlu0 %v260, 79
      %v381 = vpop.permute.xlu0 %380
      %vm382 = vcmask 646144
      %v383 = vsel %vm382, %v367, %v369
      %v384 = vsel %vm382, %v369, %v371
      %v385 = vsel %vm382, %v371, %v373
      %v386 = vsel %vm382, %v375, %v377
      %v387 = vsel %vm382, %v377, %v379
      %v388 = vsel %vm382, %v379, %v381
      %395 = vst [vmem:[#allocation2 + $0xc0] sm:$0xff] %v383
      %396 = vst [vmem:[#allocation2 + $0xc8] sm:$0xff] %v384
      %397 = vst [vmem:[#allocation2 + $0xd0] sm:$0xff] %v385
      %398 = vst [vmem:[#allocation2 + $0xd8] sm:$0xff] %v386
      %399 = vst [vmem:[#allocation2 + $0xe0] sm:$0xff] %v387
      %400 = vst [vmem:[#allocation2 + $0xe8] sm:$0xff] %v388
      %401 = vrot.lane.b32.xlu0 %v237, 78
      %v402 = vpop.permute.xlu0 %401
      %403 = vrot.lane.b32.xlu0 %v238, 78
      %v404 = vpop.permute.xlu0 %403
      %405 = vrot.lane.b32.xlu0 %v239, 78
      %v406 = vpop.permute.xlu0 %405
      %407 = vrot.lane.b32.xlu0 %v259, 78
      %v408 = vpop.permute.xlu0 %407
      %409 = vrot.lane.b32.xlu0 %v240, 78
      %v410 = vpop.permute.xlu0 %409
      %411 = vrot.lane.b32.xlu0 %v241, 78
      %v412 = vpop.permute.xlu0 %411
      %413 = vrot.lane.b32.xlu0 %v242, 78
      %v414 = vpop.permute.xlu0 %413
      %415 = vrot.lane.b32.xlu0 %v260, 78
      %v416 = vpop.permute.xlu0 %415
      %vm417 = vcmask 637952
      %v418 = vsel %vm417, %v402, %v404
      %v419 = vsel %vm417, %v404, %v406
      %v420 = vsel %vm417, %v406, %v408
      %v421 = vsel %vm417, %v410, %v412
      %v422 = vsel %vm417, %v412, %v414
      %v423 = vsel %vm417, %v414, %v416
      %430 = vst [vmem:[#allocation2 + $0xf0] sm:$0xff] %v418
      %431 = vst [vmem:[#allocation2 + $0xf8] sm:$0xff] %v419
      %432 = vst [vmem:[#allocation2 + $0x100] sm:$0xff] %v420
      %433 = vst [vmem:[#allocation2 + $0x108] sm:$0xff] %v421
      %434 = vst [vmem:[#allocation2 + $0x110] sm:$0xff] %v422
      %435 = vst [vmem:[#allocation2 + $0x118] sm:$0xff] %v423
      %436 = vrot.lane.b32.xlu0 %v237, 32
      %v437 = vpop.permute.xlu0 %436
      %438 = vrot.lane.b32.xlu0 %v238, 32
      %v439 = vpop.permute.xlu0 %438
      %440 = vrot.lane.b32.xlu0 %v239, 32
      %v441 = vpop.permute.xlu0 %440
      %442 = vrot.lane.b32.xlu0 %v259, 32
      %v443 = vpop.permute.xlu0 %442
      %444 = vrot.lane.b32.xlu0 %v240, 32
      %v445 = vpop.permute.xlu0 %444
      %446 = vrot.lane.b32.xlu0 %v241, 32
      %v447 = vpop.permute.xlu0 %446
      %448 = vrot.lane.b32.xlu0 %v242, 32
      %v449 = vpop.permute.xlu0 %448
      %450 = vrot.lane.b32.xlu0 %v260, 32
      %v451 = vpop.permute.xlu0 %450
      %vm452 = vcmask 261120
      %v453 = vsel %vm452, %v437, %v439
      %v454 = vsel %vm452, %v439, %v441
      %v455 = vsel %vm452, %v441, %v443
      %v456 = vsel %vm452, %v445, %v447
      %v457 = vsel %vm452, %v447, %v449
      %v458 = vsel %vm452, %v449, %v451
      %465 = vst [vmem:[#allocation2 + $0x120] sm:$0xff] %v453
      %466 = vst [vmem:[#allocation2 + $0x128] sm:$0xff] %v454
      %467 = vst [vmem:[#allocation2 + $0x130] sm:$0xff] %v455
      %468 = vst [vmem:[#allocation2 + $0x138] sm:$0xff] %v456
      %469 = vst [vmem:[#allocation2 + $0x140] sm:$0xff] %v457
      %470 = vst [vmem:[#allocation2 + $0x148] sm:$0xff] %v458
      %471 = vrot.lane.b32.xlu0 %v237, 31
      %v472 = vpop.permute.xlu0 %471
      %473 = vrot.lane.b32.xlu0 %v238, 31
      %v474 = vpop.permute.xlu0 %473
      %475 = vrot.lane.b32.xlu0 %v239, 31
      %v476 = vpop.permute.xlu0 %475
      %477 = vrot.lane.b32.xlu0 %v259, 31
      %v478 = vpop.permute.xlu0 %477
      %479 = vrot.lane.b32.xlu0 %v240, 31
      %v480 = vpop.permute.xlu0 %479
      %481 = vrot.lane.b32.xlu0 %v241, 31
      %v482 = vpop.permute.xlu0 %481
      %483 = vrot.lane.b32.xlu0 %v242, 31
      %v484 = vpop.permute.xlu0 %483
      %485 = vrot.lane.b32.xlu0 %v260, 31
      %v486 = vpop.permute.xlu0 %485
      %vm487 = vcmask 252928
      %v488 = vsel %vm487, %v472, %v474
      %v489 = vsel %vm487, %v474, %v476
      %v490 = vsel %vm487, %v476, %v478
      %v491 = vsel %vm487, %v480, %v482
      %v492 = vsel %vm487, %v482, %v484
      %v493 = vsel %vm487, %v484, %v486
      %500 = vst [vmem:[#allocation2 + $0x150] sm:$0xff] %v488
      %501 = vst [vmem:[#allocation2 + $0x158] sm:$0xff] %v489
      %502 = vst [vmem:[#allocation2 + $0x160] sm:$0xff] %v490
      %503 = vst [vmem:[#allocation2 + $0x168] sm:$0xff] %v491
      %504 = vst [vmem:[#allocation2 + $0x170] sm:$0xff] %v492
      %505 = vst [vmem:[#allocation2 + $0x178] sm:$0xff] %v493
      %506 = vrot.lane.b32.xlu0 %v237, 30
      %v507 = vpop.permute.xlu0 %506
      %508 = vrot.lane.b32.xlu0 %v238, 30
      %v509 = vpop.permute.xlu0 %508
      %510 = vrot.lane.b32.xlu0 %v239, 30
      %v511 = vpop.permute.xlu0 %510
      %512 = vrot.lane.b32.xlu0 %v259, 30
      %v513 = vpop.permute.xlu0 %512
      %514 = vrot.lane.b32.xlu0 %v240, 30
      %v515 = vpop.permute.xlu0 %514
      %516 = vrot.lane.b32.xlu0 %v241, 30
      %v517 = vpop.permute.xlu0 %516
      %518 = vrot.lane.b32.xlu0 %v242, 30
      %v519 = vpop.permute.xlu0 %518
      %520 = vrot.lane.b32.xlu0 %v260, 30
      %v521 = vpop.permute.xlu0 %520
      %vm522 = vcmask 244736
      %v523 = vsel %vm522, %v507, %v509
      %v524 = vsel %vm522, %v509, %v511
      %v525 = vsel %vm522, %v511, %v513
      %v526 = vsel %vm522, %v515, %v517
      %v527 = vsel %vm522, %v517, %v519
      %v528 = vsel %vm522, %v519, %v521
      %535 = vst [vmem:[#allocation2 + $0x180] sm:$0xff] %v523
      %536 = vst [vmem:[#allocation2 + $0x188] sm:$0xff] %v524
      %537 = vst [vmem:[#allocation2 + $0x190] sm:$0xff] %v525
      %538 = vst [vmem:[#allocation2 + $0x198] sm:$0xff] %v526
      %539 = vst [vmem:[#allocation2 + $0x1a0] sm:$0xff] %v527
      %540 = vst [vmem:[#allocation2 + $0x1a8] sm:$0xff] %v528
      %v541 = vld [vmem:[%s1] sm:$0xff]
      %v542 = vld [vmem:[%s1 + $0x8] sm:$0xf]
      %v543 = vld [vmem:[#allocation2] sm:$0xff]
      %v544 = vld [vmem:[#allocation2 + $0x8] sm:$0xff]
      %v545 = vld [vmem:[#allocation2 + $0x10] sm:$0xff]
      %v546 = vld [vmem:[#allocation2 + $0x18] sm:$0xff]
      %v547 = vld [vmem:[#allocation2 + $0x20] sm:$0xff]
      %v548 = vld [vmem:[#allocation2 + $0x28] sm:$0xff]
      %v549 = vld [vmem:[#allocation2 + $0x30] sm:$0xff]
      %v550 = vld [vmem:[#allocation2 + $0x38] sm:$0xff]
      %v551 = vld [vmem:[#allocation2 + $0x40] sm:$0xff]
      %v552 = vld [vmem:[#allocation2 + $0x48] sm:$0xff]
      %v553 = vld [vmem:[#allocation2 + $0x50] sm:$0xff]
      %v554 = vld [vmem:[#allocation2 + $0x58] sm:$0xff]
      %v555 = vld [vmem:[#allocation2 + $0x60] sm:$0xff]
      %v556 = vld [vmem:[#allocation2 + $0x68] sm:$0xff]
      %v557 = vld [vmem:[#allocation2 + $0x70] sm:$0xff]
      %v558 = vld [vmem:[#allocation2 + $0x78] sm:$0xff]
      %v559 = vld [vmem:[#allocation2 + $0x80] sm:$0xff]
      %v560 = vld [vmem:[#allocation2 + $0x88] sm:$0xff]
      %v561 = vld [vmem:[#allocation2 + $0x90] sm:$0xff]
      %v562 = vld [vmem:[#allocation2 + $0x98] sm:$0xff]
      %v563 = vld [vmem:[#allocation2 + $0xa0] sm:$0xff]
      %v564 = vld [vmem:[#allocation2 + $0xa8] sm:$0xff]
      %v565 = vld [vmem:[#allocation2 + $0xb0] sm:$0xff]
      %v566 = vld [vmem:[#allocation2 + $0xb8] sm:$0xff]
      %v567 = vld [vmem:[#allocation2 + $0xc0] sm:$0xff]
      %v568 = vld [vmem:[#allocation2 + $0xc8] sm:$0xff]
      %v569 = vld [vmem:[#allocation2 + $0xd0] sm:$0xff]
      %v570 = vld [vmem:[#allocation2 + $0xd8] sm:$0xff]
      %v571 = vld [vmem:[#allocation2 + $0xe0] sm:$0xff]
      %v572 = vld [vmem:[#allocation2 + $0xe8] sm:$0xff]
      %v573 = vld [vmem:[#allocation2 + $0xf0] sm:$0xff]
      %v574 = vld [vmem:[#allocation2 + $0xf8] sm:$0xff]
      %v575 = vld [vmem:[#allocation2 + $0x100] sm:$0xff]
      %v576 = vld [vmem:[#allocation2 + $0x108] sm:$0xff]
      %v577 = vld [vmem:[#allocation2 + $0x110] sm:$0xff]
      %v578 = vld [vmem:[#allocation2 + $0x118] sm:$0xff]
      %v579 = vld [vmem:[#allocation2 + $0x120] sm:$0xff]
      %v580 = vld [vmem:[#allocation2 + $0x128] sm:$0xff]
      %v581 = vld [vmem:[#allocation2 + $0x130] sm:$0xff]
      %v582 = vld [vmem:[#allocation2 + $0x138] sm:$0xff]
      %v583 = vld [vmem:[#allocation2 + $0x140] sm:$0xff]
      %v584 = vld [vmem:[#allocation2 + $0x148] sm:$0xff]
      %v585 = vld [vmem:[#allocation2 + $0x150] sm:$0xff]
      %v586 = vld [vmem:[#allocation2 + $0x158] sm:$0xff]
      %v587 = vld [vmem:[#allocation2 + $0x160] sm:$0xff]
      %v588 = vld [vmem:[#allocation2 + $0x168] sm:$0xff]
      %v589 = vld [vmem:[#allocation2 + $0x170] sm:$0xff]
      %v590 = vld [vmem:[#allocation2 + $0x178] sm:$0xff]
      %v591 = vld [vmem:[#allocation2 + $0x180] sm:$0xff]
      %v592 = vld [vmem:[#allocation2 + $0x188] sm:$0xff]
      %v593 = vld [vmem:[#allocation2 + $0x190] sm:$0xff]
      %v594 = vld [vmem:[#allocation2 + $0x198] sm:$0xff]
      %v595 = vld [vmem:[#allocation2 + $0x1a0] sm:$0xff]
      %v596 = vld [vmem:[#allocation2 + $0x1a8] sm:$0xff]
      %v597 = vld [vmem:[%s2] sm:$0xff]
      %599 = vset.pattern.permute.xlu0 0
      %600 = vperm.xlu0 %599, %v597
      %v601 = vpop.permute.xlu0 %600
      %v605 = vunpack.c.l.b16 %v541
      %v606 = vunpack.c.h.b16 %v541
      %v607 = vunpack.c.l.b16 %v542
      %v608 = vpack.c.b16 %v605, %v605
      %v609 = vpack.c.b16 %v606, %v606
      %v610 = vpack.c.b16 %v607, %v607
      %vm613 = vcmask 261120
      %v615 = vsel %vm613, %v610, 0
      %617 = vmatprep.subr.bf16.mxu0 %v544
      %618 = vmatpush1.bf16.msra.mxu0 %v543
      %619 = vmatprep.subr.bf16.mxu0 %v547
      %620 = vmatpush1.bf16.msra.mxu0 %v546
      %621 = vmatprep.subr.bf16.mxu0 %v550
      %622 = vmatpush1.bf16.msra.mxu0 %v549
      %623 = vmatprep.subr.bf16.mxu0 %v553
      %624 = vmatpush1.bf16.msra.mxu0 %v552
      %625 = vmatprep.subr.bf16.mxu0 %v556
      %626 = vmatpush1.bf16.msra.mxu0 %v555
      %627 = vmatprep.subr.bf16.mxu0 %v559
      %628 = vmatpush1.bf16.msra.mxu0 %v558
      %629 = vmatprep.subr.bf16.mxu0 %v562
      %630 = vmatpush1.bf16.msra.mxu0 %v561
      %631 = vmatprep.subr.bf16.mxu0 %v565
      %632 = vmatpush1.bf16.msra.mxu0 %v564
      %633 = vmatprep.subr.bf16.mxu0 %v568
      %634 = vmatpush1.bf16.msra.mxu0 %v567
      %635 = vmatprep.subr.bf16.mxu0 %v571
      %636 = vmatpush1.bf16.msra.mxu0 %v570
      %637 = vmatprep.subr.bf16.mxu0 %v574
      %638 = vmatpush1.bf16.msra.mxu0 %v573
      %639 = vmatprep.subr.bf16.mxu0 %v577
      %640 = vmatpush1.bf16.msra.mxu0 %v576
      %641 = vmatprep.subr.bf16.mxu0 %v580
      %642 = vmatpush1.bf16.msra.mxu0 %v579
      %643 = vmatprep.subr.bf16.mxu0 %v583
      %644 = vmatpush1.bf16.msra.mxu0 %v582
      %645 = vmatprep.subr.bf16.mxu0 %v586
      %646 = vmatpush1.bf16.msra.mxu0 %v585
      %647 = vmatprep.subr.bf16.mxu0 %v589
      %648 = vmatpush1.bf16.msra.mxu0 %v588
      %649 = vmatprep.mubr.bf16.mxu0 %v609
      %650 = vmatmul.mubr.bf16.gmra.mrb[0].mxu0 %v608
      %v651 = vpop.f32.mrb[0].mxu0
      %v652 = vadd.f32 %v601, %v651
      %v653 = vpop.f32.mrb[0].mxu0
      %v654 = vadd.f32 %v601, %v653
      %v655 = vpop.f32.mrb[0].mxu0
      %v656 = vpop.f32.mrb[0].mxu0
      %657 = vdwg.mxu0
      %658 = vmatprep.subr.bf16.mxu0 %v592
      %659 = vmatpush1.bf16.msra.mxu0 %v591
      %660 = vmatprep.subr.bf16.mxu0 %v595
      %661 = vmatpush1.bf16.msra.mxu0 %v594
      %662 = vmatprep.subr.bf16.mxu0 0
      %663 = vmatpush1.bf16.msra.mxu0 0
      %664 = vmatprep.subr.bf16.mxu0 0
      %665 = vmatpush1.bf16.msra.mxu0 0
      %666 = vmatprep.subr.bf16.mxu0 0
      %667 = vmatpush1.bf16.msra.mxu0 0
      %668 = vmatprep.subr.bf16.mxu0 0
      %669 = vmatpush1.bf16.msra.mxu0 0
      %670 = vmatprep.subr.bf16.mxu0 0
      %671 = vmatpush1.bf16.msra.mxu0 0
      %672 = vmatprep.subr.bf16.mxu0 0
      %673 = vmatpush1.bf16.msra.mxu0 0
      %674 = vmatprep.subr.bf16.mxu0 0
      %675 = vmatpush1.bf16.msra.mxu0 0
      %676 = vmatprep.subr.bf16.mxu0 0
      %677 = vmatpush1.bf16.msra.mxu0 0
      %678 = vmatprep.subr.bf16.mxu0 0
      %679 = vmatpush1.bf16.msra.mxu0 0
      %680 = vmatprep.subr.bf16.mxu0 0
      %681 = vmatpush1.bf16.msra.mxu0 0
      %682 = vmatprep.subr.bf16.mxu0 0
      %683 = vmatpush1.bf16.msra.mxu0 0
      %684 = vmatprep.subr.bf16.mxu0 0
      %685 = vmatpush1.bf16.msra.mxu0 0
      %686 = vmatprep.subr.bf16.mxu0 0
      %687 = vmatpush1.bf16.msra.mxu0 0
      %688 = vmatprep.subr.bf16.mxu0 0
      %689 = vmatpush1.bf16.msra.mxu0 0
      %690 = vmatprep.mubr.bf16.mxu0 0
      %691 = vmatmul.mubr.bf16.gmra.mrb[0].mxu0 %v615
      %v692 = vpop.f32.mrb[0].mxu0
      %v693 = vadd.f32 %v652, %v692
      %v694 = vpop.f32.mrb[0].mxu0
      %v695 = vadd.f32 %v654, %v694
      %v696 = vpop.f32.mrb[0].mxu0
      %v697 = vpop.f32.mrb[0].mxu0
      %698 = vdwg.mxu0
      %699 = vmatprep.subr.bf16.mxu0 0
      %700 = vmatpush1.bf16.msra.mxu0 %v545
      %701 = vmatprep.subr.bf16.mxu0 0
      %702 = vmatpush1.bf16.msra.mxu0 %v548
      %703 = vmatprep.subr.bf16.mxu0 0
      %704 = vmatpush1.bf16.msra.mxu0 %v551
      %705 = vmatprep.subr.bf16.mxu0 0
      %706 = vmatpush1.bf16.msra.mxu0 %v554
      %707 = vmatprep.subr.bf16.mxu0 0
      %708 = vmatpush1.bf16.msra.mxu0 %v557
      %709 = vmatprep.subr.bf16.mxu0 0
      %710 = vmatpush1.bf16.msra.mxu0 %v560
      %711 = vmatprep.subr.bf16.mxu0 0
      %712 = vmatpush1.bf16.msra.mxu0 %v563
      %713 = vmatprep.subr.bf16.mxu0 0
      %714 = vmatpush1.bf16.msra.mxu0 %v566
      %715 = vmatprep.subr.bf16.mxu0 0
      %716 = vmatpush1.bf16.msra.mxu0 %v569
      %717 = vmatprep.subr.bf16.mxu0 0
      %718 = vmatpush1.bf16.msra.mxu0 %v572
      %719 = vmatprep.subr.bf16.mxu0 0
      %720 = vmatpush1.bf16.msra.mxu0 %v575
      %721 = vmatprep.subr.bf16.mxu0 0
      %722 = vmatpush1.bf16.msra.mxu0 %v578
      %723 = vmatprep.subr.bf16.mxu0 0
      %724 = vmatpush1.bf16.msra.mxu0 %v581
      %725 = vmatprep.subr.bf16.mxu0 0
      %726 = vmatpush1.bf16.msra.mxu0 %v584
      %727 = vmatprep.subr.bf16.mxu0 0
      %728 = vmatpush1.bf16.msra.mxu0 %v587
      %729 = vmatprep.subr.bf16.mxu0 0
      %730 = vmatpush1.bf16.msra.mxu0 %v590
      %731 = vmatprep.mubr.bf16.mxu0 %v609
      %732 = vmatmul.mubr.bf16.gmra.mrb[0].mxu0 %v608
      %v733 = vpop.f32.mrb[0].mxu0
      %v734 = vadd.f32 %v601, %v733
      %v735 = vpop.f32.mrb[0].mxu0
      %v736 = vpop.f32.mrb[0].mxu0
      %v737 = vpop.f32.mrb[0].mxu0
      %738 = vdwg.mxu0
      %739 = vmatprep.subr.bf16.mxu0 0
      %740 = vmatpush1.bf16.msra.mxu0 %v593
      %741 = vmatprep.subr.bf16.mxu0 0
      %742 = vmatpush1.bf16.msra.mxu0 %v596
      %743 = vmatprep.subr.bf16.mxu0 0
      %744 = vmatpush1.bf16.msra.mxu0 0
      %745 = vmatprep.subr.bf16.mxu0 0
      %746 = vmatpush1.bf16.msra.mxu0 0
      %747 = vmatprep.subr.bf16.mxu0 0
      %748 = vmatpush1.bf16.msra.mxu0 0
      %749 = vmatprep.subr.bf16.mxu0 0
      %750 = vmatpush1.bf16.msra.mxu0 0
      %751 = vmatprep.subr.bf16.mxu0 0
      %752 = vmatpush1.bf16.msra.mxu0 0
      %753 = vmatprep.subr.bf16.mxu0 0
      %754 = vmatpush1.bf16.msra.mxu0 0
      %755 = vmatprep.subr.bf16.mxu0 0
      %756 = vmatpush1.bf16.msra.mxu0 0
      %757 = vmatprep.subr.bf16.mxu0 0
      %758 = vmatpush1.bf16.msra.mxu0 0
      %759 = vmatprep.subr.bf16.mxu0 0
      %760 = vmatpush1.bf16.msra.mxu0 0
      %761 = vmatprep.subr.bf16.mxu0 0
      %762 = vmatpush1.bf16.msra.mxu0 0
      %763 = vmatprep.subr.bf16.mxu0 0
      %764 = vmatpush1.bf16.msra.mxu0 0
      %765 = vmatprep.subr.bf16.mxu0 0
      %766 = vmatpush1.bf16.msra.mxu0 0
      %767 = vmatprep.subr.bf16.mxu0 0
      %768 = vmatpush1.bf16.msra.mxu0 0
      %769 = vmatprep.subr.bf16.mxu0 0
      %770 = vmatpush1.bf16.msra.mxu0 0
      %771 = vmatprep.mubr.bf16.mxu0 0
      %772 = vmatmul.mubr.bf16.gmra.mrb[0].mxu0 %v615
      %v773 = vpop.f32.mrb[0].mxu0
      %v774 = vadd.f32 %v734, %v773
      %v775 = vpop.f32.mrb[0].mxu0
      %v776 = vpop.f32.mrb[0].mxu0
      %v777 = vpop.f32.mrb[0].mxu0
      %778 = vdwg.mxu0
      %v779 = vmax.f32 %v693, 0.0
      %v780 = vmax.f32 %v695, 0.0
      %v781 = vmax.f32 %v774, 0.0
      %v784 = vcombine.low %v779, %v780
      %786 = vst [vmem:[%s206] sm:$0x77] %v784
      %787 = vst [vmem:[%s206 + $0x8] sm:$0x7] %v781
      %s788 = smul.u32 3, %s19
      %p789 = scmp.lt.s32.totalorder %s18, 1
      %s790 = scalar_select %p789, %s18, 1
      %p791 = scmp.lt.s32.totalorder %s788, 11
      %s792 = scalar_select %p791, %s788, 11
      %s793 = smul.addr %s790, 12
      %s794 = sadd.s32 %s792, %s793
      %s795 = smul.addr %s794, 4
      %s796 = scalar_lea.vmem %s3, %s795
      // Predicated region
      $region33: #{reconstruction_forward.5} parent=31 // pred_check
        %p797 = pneg %p116
      $region34: #{reconstruction_forward.5} parent=31 // pred_check_branch
        %799 = sbr.rel (%p797) target = $region36
      $region35: #{reconstruction_forward.5} parent=31 // pred_region
        %s800 = smul.u32 3, %s19
      $region36: #{reconstruction_forward.5} parent=31 // pred_fallthru
        _
    $region32: #{reconstruction_forward.5} parent=5 // pred_fallthru
      _
    %p801 = scmp.le.s32.totalorder 2, %s9
    // Predicated region
    $region37: #{reconstruction_forward.5} parent=5 // pred_check
      %p802 = pneg %p801
    $region38: #{reconstruction_forward.5} parent=5 // pred_check_branch
      %804 = sbr.rel (%p802) target = $region40
    $region39: #{reconstruction_forward.5} parent=5 // pred_region
      %s805 = ssub.s32 %s9, 2
      // Predicated region
      $region41: #{reconstruction_forward.5} parent=39 // pred_check
        %p806 = pneg %p122
      $region42: #{reconstruction_forward.5} parent=39 // pred_check_branch
        %808 = sbr.rel (%p806) target = $region44
      $region43: #{reconstruction_forward.5} parent=39 // pred_region
        %s809 = smul.u32 3, %s21
        %p810 = scmp.lt.s32.totalorder %s20, 1
        %s811 = scalar_select %p810, %s20, 1
        %p812 = scmp.lt.s32.totalorder %s809, 11
        %s813 = scalar_select %p812, %s809, 11
        %s814 = smul.addr %s811, 12
        %s815 = sadd.s32 %s813, %s814
        %s816 = smul.addr %s815, 4
        %s817 = scalar_lea.vmem %s3, %s816
      $region44: #{reconstruction_forward.5} parent=39 // pred_fallthru
        _
    $region40: #{reconstruction_forward.5} parent=5 // pred_fallthru
      _
  $region6: #{reconstruction_forward.5} parent=0 // loop_footer
    %s13 = sadd.s32 1, %s9
  $region7: #{reconstruction_forward.5} parent=0 // loop_footer_branch
    %8 = sbr.rel target = $region3
  $region8: #{reconstruction_forward.5} parent=0 // loop_exit
    _

</llo_original>
